<compile_context>
chip_gen: v5e
topology: v5e:2x2
jax: 0.10.0
libtpu: 0.0.40
codegen_flags: <defaults>
</compile_context>

<pallas_src>
import functools

import jax
import jax.numpy as jnp
from jax import lax
from jax.experimental import pallas as pl
from jax.experimental.pallas import tpu as pltpu


MID = 256  # hidden channels of the aux head (fixed by the module)


def _round_up(x, m):
    return ((x + m - 1) // m) * m


def _vmem_capacity_bytes():
    """Physical VMEM of the local TPU generation (fallback: v7x 64 MiB)."""
    try:
        cap = getattr(pltpu.get_tpu_info(), "vmem_capacity_bytes", None)
        if cap:
            return int(cap)
    except Exception:
        pass
    return 64 << 20


def _vmem_need_bytes(H, w_pad, c_in, nc_pad, th):
    """Block-shape-derived VMEM requirement (bytes) for a given row tile."""
    h_pad = _round_up(H, th)
    in_blk = (h_pad + 2) * (w_pad + 2) * c_in * 2           # bf16 padded image / batch
    out_blk = th * w_pad * nc_pad * 2                       # bf16 output tile
    wts = (9 * c_in * MID * 2 + MID * nc_pad * 2            # bf16 weights (1-buffered)
           + nc_pad * 4 + MID * 4)                          # f32 bias + BN shift
    live = th * w_pad * (MID * 4 + nc_pad * 4 + 2 * c_in * 2)  # acc + f32 out + slices
    return 2 * in_blk + 2 * out_blk + wts + live + (2 << 20)


def _choose_row_tile(H, w_pad, c_in, nc_pad, budget):
    """Largest row tile (multiple of 8) with TH*W_pad near 512-1024 that fits VMEM."""
    th = _round_up(max(1, 1024 // w_pad), 8)     # target MXU M ~= 1024
    th = min(th, _round_up(H, 8))
    th = max(th, 8)
    while th > 8 and _vmem_need_bytes(H, w_pad, c_in, nc_pad, th) > budget:
        th -= 8
    return th


def _aux_psp_kernel(x_ref, w3_ref, w1_ref, b1_ref, shift_ref, out_ref):
    """One grid step = one (batch, row-tile) block.

    x_ref    : (1, H_pad+2, W_pad+2, C_in) bf16  whole padded image of this batch
    w3_ref   : (3, 3, C_in, MID)           bf16  3x3 conv weights, BN scale folded in
    w1_ref   : (MID, NC_PAD)               bf16  1x1 conv weights, lane-padded
    b1_ref   : (1, NC_PAD)                 f32   1x1 conv bias, lane-padded
    shift_ref: (1, MID)                    f32   folded BN shift = beta - mean*scale
    out_ref  : (1, TH, W_pad, NC_PAD)      bf16
    """
    TH = out_ref.shape[1]
    Wp = out_ref.shape[2]
    ncp = out_ref.shape[3]
    C = x_ref.shape[3]

    # First padded input row for this row tile (output row t*TH uses rows t*TH..+2).
    row0 = pl.multiple_of(pl.program_id(1) * TH, 8)

    # 3x3 conv as 9 MXU matmuls (K = C_in); dx slices (sublane-offset) go through
    # the XLU and hide under MXU time.  Let the MXU chain accumulate (no zeros init).
    acc = None
    for dy in range(3):
        for dx in range(3):
            patch = x_ref[0, pl.ds(row0 + dy, TH), pl.ds(dx, Wp), :]
            patch = patch.reshape(TH * Wp, C)
            part = jnp.dot(patch, w3_ref[dy, dx],
                           preferred_element_type=jnp.float32)
            acc = part if acc is None else acc + part

    # BatchNorm (scale pre-folded into w3) -> shift-add + ReLU, in f32.
    y = jnp.maximum(acc + shift_ref[...], 0.0)

    # Dropout2d(0.1): identity at inference.

    # Final 1x1 conv (bf16 MXU, f32 accumulate) + bias; lane-dense bf16 store.
    out = jnp.dot(y.astype(w1_ref.dtype), w1_ref[...],
                  preferred_element_type=jnp.float32) + b1_ref[...]
    out_ref[...] = out.reshape(1, TH, Wp, ncp).astype(out_ref.dtype)


@functools.partial(jax.jit, static_argnames=("num_classes",))
def auxiliary_psp_forward_nhwc(x_nhwc, w3_hwio, w1, b1, gamma, beta, mean, var,
                               *, num_classes):
    """NHWC forward: (N, H, W, C_in) -> (N, H, W, num_classes), no transposes."""
    eps = 1e-5
    N, H, W, C_in = x_nhwc.shape

    NC_PAD = _round_up(num_classes, 128)          # lane-dense output width
    W_pad = _round_up(W, 8)                       # sublane-aligned spatial width

    budget = _vmem_capacity_bytes() - (8 << 20)   # leave headroom below physical VMEM
    TH = _choose_row_tile(H, W_pad, C_in, NC_PAD, budget)
    H_pad = _round_up(H, TH)
    n_tiles = H_pad // TH

    # ---- input prep: one fused cast+pad pass (no im2col, no halo copies) -------
    x_pad = jnp.pad(x_nhwc.astype(jnp.bfloat16),
                    ((0, 0), (1, 1 + H_pad - H), (1, 1 + W_pad - W), (0, 0)))

    # ---- parameter prep ---------------------------------------------------------
    inv = (gamma / jnp.sqrt(var + eps)).astype(jnp.float32)
    w3_k = (w3_hwio.astype(jnp.float32) * inv).astype(jnp.bfloat16)   # (3,3,C,MID)
    shift = (beta - mean * inv).reshape(1, MID).astype(jnp.float32)
    w1_pad = jnp.zeros((MID, NC_PAD), jnp.bfloat16).at[:, :num_classes].set(
        w1.astype(jnp.bfloat16))
    b1_pad = jnp.zeros((1, NC_PAD), jnp.float32).at[:, :num_classes].set(
        b1.astype(jnp.float32))

    vmem_bytes = int(min(max(_vmem_need_bytes(H, W_pad, C_in, NC_PAD, TH), 16 << 20),
                         budget))

    flops = 2 * N * H_pad * W_pad * (9 * C_in * MID + MID * NC_PAD)
    bytes_accessed = (x_pad.size * 2 + N * H_pad * W_pad * NC_PAD * 2
                      + w3_k.size * 2 + w1_pad.size * 2
                      + b1_pad.size * 4 + shift.size * 4)

    out_pad = pl.pallas_call(
        _aux_psp_kernel,
        out_shape=jax.ShapeDtypeStruct((N, H_pad, W_pad, NC_PAD), jnp.bfloat16),
        grid_spec=pltpu.PrefetchScalarGridSpec(
            num_scalar_prefetch=0,
            grid=(N, n_tiles),
            in_specs=[
                # whole padded image for batch n; invariant across the row-tile axis,
                # so it is DMA'd once per batch and row tiles read overlapping windows.
                pl.BlockSpec((1, H_pad + 2, W_pad + 2, C_in),
                             lambda n, t: (n, 0, 0, 0)),
                # grid-invariant params: single-buffered to reclaim VMEM.
                pl.BlockSpec((3, 3, C_in, MID), lambda n, t: (0, 0, 0, 0),
                             pipeline_mode=pl.Buffered(1)),
                pl.BlockSpec((MID, NC_PAD), lambda n, t: (0, 0),
                             pipeline_mode=pl.Buffered(1)),
                pl.BlockSpec((1, NC_PAD), lambda n, t: (0, 0),
                             pipeline_mode=pl.Buffered(1)),
                pl.BlockSpec((1, MID), lambda n, t: (0, 0),
                             pipeline_mode=pl.Buffered(1)),
            ],
            out_specs=pl.BlockSpec((1, TH, W_pad, NC_PAD),
                                   lambda n, t: (n, t, 0, 0)),
        ),
        compiler_params=pltpu.CompilerParams(
            dimension_semantics=("parallel", "parallel"),
            vmem_limit_bytes=vmem_bytes,
        ),
        cost_estimate=pl.CostEstimate(
            flops=flops, transcendentals=0, bytes_accessed=bytes_accessed),
    )(x_pad, w3_k, w1_pad, b1_pad, shift)

    # Drop spatial / class padding; promote to f32 at the API boundary.
    return out_pad[:, :H, :W, :num_classes].astype(jnp.float32)


def auxiliary_psp_forward(x_nchw, w3_hwio, w1, b1, gamma, beta, mean, var,
                          *, num_classes):
    """NCHW compatibility wrapper matching the PyTorch module layout."""
    x_nhwc = jnp.transpose(x_nchw, (0, 2, 3, 1))
    out = auxiliary_psp_forward_nhwc(x_nhwc, w3_hwio, w1, b1, gamma, beta, mean,
                                     var, num_classes=num_classes)
    return jnp.transpose(out, (0, 3, 1, 2))


def reference_forward(x_nchw, w3_hwio, w1, b1, gamma, beta, mean, var):
    """Pure-JAX reference emulating the kernel's bf16-input / f32-accumulate path."""
    eps = 1e-5
    q = lambda a: a.astype(jnp.bfloat16).astype(jnp.float32)
    inv = gamma / jnp.sqrt(var + eps)
    shift = beta - mean * inv
    x = jnp.transpose(x_nchw, (0, 2, 3, 1))
    y = lax.conv_general_dilated(
        q(x), q(w3_hwio * inv), window_strides=(1, 1), padding="SAME",
        dimension_numbers=("NHWC", "HWIO", "NHWC"))
    y = jnp.maximum(y + shift, 0.0)
    out = jnp.einsum("nhwc,cd->nhwd", q(y), q(w1)) + b1
    return jnp.transpose(out, (0, 3, 1, 2))


if __name__ == "__main__":
    # Small, module-consistent shapes.
    N, C_in, H, W = 2, 4, 16, 16
    num_classes = 6

    key = jax.random.PRNGKey(0)
    kx, kw3, kw1, kb1, kg, kb, km, kv = jax.random.split(key, 8)

    x = jax.random.normal(kx, (N, C_in, H, W), dtype=jnp.float32)

    # Deterministic synthetic parameters (shapes dictated by the module __init__).
    w3_hwio = 0.1 * jax.random.normal(kw3, (3, 3, C_in, MID), dtype=jnp.float32)
    w1 = 0.1 * jax.random.normal(kw1, (MID, num_classes), dtype=jnp.float32)
    b1 = 0.1 * jax.random.normal(kb1, (num_classes,), dtype=jnp.float32)
    gamma = 1.0 + 0.1 * jax.random.normal(kg, (MID,), dtype=jnp.float32)
    beta = 0.1 * jax.random.normal(kb, (MID,), dtype=jnp.float32)
    mean = 0.1 * jax.random.normal(km, (MID,), dtype=jnp.float32)
    var = jnp.abs(1.0 + 0.1 * jax.random.normal(kv, (MID,), dtype=jnp.float32))

    out = auxiliary_psp_forward(
        x, w3_hwio, w1, b1, gamma, beta, mean, var, num_classes=num_classes)
    out = jax.block_until_ready(out)

    ref = reference_forward(x, w3_hwio, w1, b1, gamma, beta, mean, var)
    ref = jax.block_until_ready(ref)

    assert out.shape == (N, num_classes, H, W), out.shape
    # Kernel stores bf16 output (f32 accumulation); allow ~1 bf16 ulp of slack.
    assert jnp.allclose(out, ref, rtol=1e-2, atol=1e-2), (
        float(jnp.max(jnp.abs(out - ref))))

    print("KERNEL_OK")
</pallas_src>

<mosaic_0001>
module attributes {stable_mosaic.version = 11 : i64} {
  func.func @_aux_psp_kernel(%arg0: i32, %arg1: i32, %arg2: memref<1x18x18x4xbf16, #tpu.memory_space<vmem>>, %arg3: memref<3x3x4x256xbf16, #tpu.memory_space<vmem>>, %arg4: memref<256x128xbf16, #tpu.memory_space<vmem>>, %arg5: memref<1x128xf32, #tpu.memory_space<vmem>>, %arg6: memref<1x256xf32, #tpu.memory_space<vmem>>, %arg7: memref<1x16x16x128xbf16, #tpu.memory_space<vmem>>) attributes {dimension_semantics = [#tpu.dimension_semantics<parallel>, #tpu.dimension_semantics<parallel>], iteration_bounds = array<i64: 2, 1>, scalar_prefetch = 0 : i64, scratch_operands = 0 : i64, tpu.core_type = #tpu.core_type<tc>, window_params = [{transform_indices = @transform_0, window_bounds = array<i64: 1, 18, 18, 4>}, {pipeline_mode = #tpu.pipeline_mode<synchronous>, transform_indices = @transform_1, window_bounds = array<i64: 3, 3, 4, 256>}, {pipeline_mode = #tpu.pipeline_mode<synchronous>, transform_indices = @transform_2, window_bounds = array<i64: 256, 128>}, {pipeline_mode = #tpu.pipeline_mode<synchronous>, transform_indices = @transform_3, window_bounds = array<i64: 1, 128>}, {pipeline_mode = #tpu.pipeline_mode<synchronous>, transform_indices = @transform_4, window_bounds = array<i64: 1, 256>}, {transform_indices = @transform_5, window_bounds = array<i64: 1, 16, 16, 128>}]} {
    %c16_i32 = arith.constant 16 : i32
    %0 = arith.muli %arg1, %c16_i32 : i32
    %1 = tpu.assume_multiple %0, 8 : i32
    %c0_i32 = arith.constant 0 : i32
    %2 = arith.addi %1, %c0_i32 : i32
    %c0 = arith.constant 0 : index
    %3 = arith.index_cast %2 : i32 to index
    %c0_0 = arith.constant 0 : index
    %c0_1 = arith.constant 0 : index
    %4 = vector.load %arg2[%c0, %3, %c0_0, %c0_1] : memref<1x18x18x4xbf16, #tpu.memory_space<vmem>>, vector<1x16x16x4xbf16>
    %5 = vector.shape_cast %4 : vector<1x16x16x4xbf16> to vector<16x16x4xbf16>
    %6 = vector.shape_cast %5 : vector<16x16x4xbf16> to vector<256x4xbf16>
    %c0_2 = arith.constant 0 : index
    %c0_3 = arith.constant 0 : index
    %c0_4 = arith.constant 0 : index
    %c0_5 = arith.constant 0 : index
    %7 = vector.load %arg3[%c0_2, %c0_3, %c0_4, %c0_5] : memref<3x3x4x256xbf16, #tpu.memory_space<vmem>>, vector<1x1x4x256xbf16>
    %8 = vector.shape_cast %7 : vector<1x1x4x256xbf16> to vector<4x256xbf16>
    %cst = arith.constant dense<0.000000e+00> : vector<256x256xf32>
    %9 = tpu.matmul %6, %8, %cst {dimension_numbers = #tpu.dot_dimension_numbers<[1], [0], [0], [1], [0, 0, 1, 1], [], []>} : vector<256x4xbf16>, vector<4x256xbf16>, vector<256x256xf32> -> vector<256x256xf32>
    %c0_i32_6 = arith.constant 0 : i32
    %10 = arith.addi %1, %c0_i32_6 : i32
    %c0_7 = arith.constant 0 : index
    %11 = arith.index_cast %10 : i32 to index
    %c1 = arith.constant 1 : index
    %c0_8 = arith.constant 0 : index
    %12 = vector.load %arg2[%c0_7, %11, %c1, %c0_8] : memref<1x18x18x4xbf16, #tpu.memory_space<vmem>>, vector<1x16x16x4xbf16>
    %13 = vector.shape_cast %12 : vector<1x16x16x4xbf16> to vector<16x16x4xbf16>
    %14 = vector.shape_cast %13 : vector<16x16x4xbf16> to vector<256x4xbf16>
    %c0_9 = arith.constant 0 : index
    %c1_10 = arith.constant 1 : index
    %c0_11 = arith.constant 0 : index
    %c0_12 = arith.constant 0 : index
    %15 = vector.load %arg3[%c0_9, %c1_10, %c0_11, %c0_12] : memref<3x3x4x256xbf16, #tpu.memory_space<vmem>>, vector<1x1x4x256xbf16>
    %16 = vector.shape_cast %15 : vector<1x1x4x256xbf16> to vector<4x256xbf16>
    %cst_13 = arith.constant dense<0.000000e+00> : vector<256x256xf32>
    %17 = tpu.matmul %14, %16, %cst_13 {dimension_numbers = #tpu.dot_dimension_numbers<[1], [0], [0], [1], [0, 0, 1, 1], [], []>} : vector<256x4xbf16>, vector<4x256xbf16>, vector<256x256xf32> -> vector<256x256xf32>
    %18 = arith.addf %9, %17 : vector<256x256xf32>
    %c0_i32_14 = arith.constant 0 : i32
    %19 = arith.addi %1, %c0_i32_14 : i32
    %c0_15 = arith.constant 0 : index
    %20 = arith.index_cast %19 : i32 to index
    %c2 = arith.constant 2 : index
    %c0_16 = arith.constant 0 : index
    %21 = vector.load %arg2[%c0_15, %20, %c2, %c0_16] : memref<1x18x18x4xbf16, #tpu.memory_space<vmem>>, vector<1x16x16x4xbf16>
    %22 = vector.shape_cast %21 : vector<1x16x16x4xbf16> to vector<16x16x4xbf16>
    %23 = vector.shape_cast %22 : vector<16x16x4xbf16> to vector<256x4xbf16>
    %c0_17 = arith.constant 0 : index
    %c2_18 = arith.constant 2 : index
    %c0_19 = arith.constant 0 : index
    %c0_20 = arith.constant 0 : index
    %24 = vector.load %arg3[%c0_17, %c2_18, %c0_19, %c0_20] : memref<3x3x4x256xbf16, #tpu.memory_space<vmem>>, vector<1x1x4x256xbf16>
    %25 = vector.shape_cast %24 : vector<1x1x4x256xbf16> to vector<4x256xbf16>
    %cst_21 = arith.constant dense<0.000000e+00> : vector<256x256xf32>
    %26 = tpu.matmul %23, %25, %cst_21 {dimension_numbers = #tpu.dot_dimension_numbers<[1], [0], [0], [1], [0, 0, 1, 1], [], []>} : vector<256x4xbf16>, vector<4x256xbf16>, vector<256x256xf32> -> vector<256x256xf32>
    %27 = arith.addf %18, %26 : vector<256x256xf32>
    %c1_i32 = arith.constant 1 : i32
    %28 = arith.addi %1, %c1_i32 : i32
    %c0_22 = arith.constant 0 : index
    %29 = arith.index_cast %28 : i32 to index
    %c0_23 = arith.constant 0 : index
    %c0_24 = arith.constant 0 : index
    %30 = vector.load %arg2[%c0_22, %29, %c0_23, %c0_24] : memref<1x18x18x4xbf16, #tpu.memory_space<vmem>>, vector<1x16x16x4xbf16>
    %31 = vector.shape_cast %30 : vector<1x16x16x4xbf16> to vector<16x16x4xbf16>
    %32 = vector.shape_cast %31 : vector<16x16x4xbf16> to vector<256x4xbf16>
    %c1_25 = arith.constant 1 : index
    %c0_26 = arith.constant 0 : index
    %c0_27 = arith.constant 0 : index
    %c0_28 = arith.constant 0 : index
    %33 = vector.load %arg3[%c1_25, %c0_26, %c0_27, %c0_28] : memref<3x3x4x256xbf16, #tpu.memory_space<vmem>>, vector<1x1x4x256xbf16>
    %34 = vector.shape_cast %33 : vector<1x1x4x256xbf16> to vector<4x256xbf16>
    %cst_29 = arith.constant dense<0.000000e+00> : vector<256x256xf32>
    %35 = tpu.matmul %32, %34, %cst_29 {dimension_numbers = #tpu.dot_dimension_numbers<[1], [0], [0], [1], [0, 0, 1, 1], [], []>} : vector<256x4xbf16>, vector<4x256xbf16>, vector<256x256xf32> -> vector<256x256xf32>
    %36 = arith.addf %27, %35 : vector<256x256xf32>
    %c1_i32_30 = arith.constant 1 : i32
    %37 = arith.addi %1, %c1_i32_30 : i32
    %c0_31 = arith.constant 0 : index
    %38 = arith.index_cast %37 : i32 to index
    %c1_32 = arith.constant 1 : index
    %c0_33 = arith.constant 0 : index
    %39 = vector.load %arg2[%c0_31, %38, %c1_32, %c0_33] : memref<1x18x18x4xbf16, #tpu.memory_space<vmem>>, vector<1x16x16x4xbf16>
    %40 = vector.shape_cast %39 : vector<1x16x16x4xbf16> to vector<16x16x4xbf16>
    %41 = vector.shape_cast %40 : vector<16x16x4xbf16> to vector<256x4xbf16>
    %c1_34 = arith.constant 1 : index
    %c1_35 = arith.constant 1 : index
    %c0_36 = arith.constant 0 : index
    %c0_37 = arith.constant 0 : index
    %42 = vector.load %arg3[%c1_34, %c1_35, %c0_36, %c0_37] : memref<3x3x4x256xbf16, #tpu.memory_space<vmem>>, vector<1x1x4x256xbf16>
    %43 = vector.shape_cast %42 : vector<1x1x4x256xbf16> to vector<4x256xbf16>
    %cst_38 = arith.constant dense<0.000000e+00> : vector<256x256xf32>
    %44 = tpu.matmul %41, %43, %cst_38 {dimension_numbers = #tpu.dot_dimension_numbers<[1], [0], [0], [1], [0, 0, 1, 1], [], []>} : vector<256x4xbf16>, vector<4x256xbf16>, vector<256x256xf32> -> vector<256x256xf32>
    %45 = arith.addf %36, %44 : vector<256x256xf32>
    %c1_i32_39 = arith.constant 1 : i32
    %46 = arith.addi %1, %c1_i32_39 : i32
    %c0_40 = arith.constant 0 : index
    %47 = arith.index_cast %46 : i32 to index
    %c2_41 = arith.constant 2 : index
    %c0_42 = arith.constant 0 : index
    %48 = vector.load %arg2[%c0_40, %47, %c2_41, %c0_42] : memref<1x18x18x4xbf16, #tpu.memory_space<vmem>>, vector<1x16x16x4xbf16>
    %49 = vector.shape_cast %48 : vector<1x16x16x4xbf16> to vector<16x16x4xbf16>
    %50 = vector.shape_cast %49 : vector<16x16x4xbf16> to vector<256x4xbf16>
    %c1_43 = arith.constant 1 : index
    %c2_44 = arith.constant 2 : index
    %c0_45 = arith.constant 0 : index
    %c0_46 = arith.constant 0 : index
    %51 = vector.load %arg3[%c1_43, %c2_44, %c0_45, %c0_46] : memref<3x3x4x256xbf16, #tpu.memory_space<vmem>>, vector<1x1x4x256xbf16>
    %52 = vector.shape_cast %51 : vector<1x1x4x256xbf16> to vector<4x256xbf16>
    %cst_47 = arith.constant dense<0.000000e+00> : vector<256x256xf32>
    %53 = tpu.matmul %50, %52, %cst_47 {dimension_numbers = #tpu.dot_dimension_numbers<[1], [0], [0], [1], [0, 0, 1, 1], [], []>} : vector<256x4xbf16>, vector<4x256xbf16>, vector<256x256xf32> -> vector<256x256xf32>
    %54 = arith.addf %45, %53 : vector<256x256xf32>
    %c2_i32 = arith.constant 2 : i32
    %55 = arith.addi %1, %c2_i32 : i32
    %c0_48 = arith.constant 0 : index
    %56 = arith.index_cast %55 : i32 to index
    %c0_49 = arith.constant 0 : index
    %c0_50 = arith.constant 0 : index
    %57 = vector.load %arg2[%c0_48, %56, %c0_49, %c0_50] : memref<1x18x18x4xbf16, #tpu.memory_space<vmem>>, vector<1x16x16x4xbf16>
    %58 = vector.shape_cast %57 : vector<1x16x16x4xbf16> to vector<16x16x4xbf16>
    %59 = vector.shape_cast %58 : vector<16x16x4xbf16> to vector<256x4xbf16>
    %c2_51 = arith.constant 2 : index
    %c0_52 = arith.constant 0 : index
    %c0_53 = arith.constant 0 : index
    %c0_54 = arith.constant 0 : index
    %60 = vector.load %arg3[%c2_51, %c0_52, %c0_53, %c0_54] : memref<3x3x4x256xbf16, #tpu.memory_space<vmem>>, vector<1x1x4x256xbf16>
    %61 = vector.shape_cast %60 : vector<1x1x4x256xbf16> to vector<4x256xbf16>
    %cst_55 = arith.constant dense<0.000000e+00> : vector<256x256xf32>
    %62 = tpu.matmul %59, %61, %cst_55 {dimension_numbers = #tpu.dot_dimension_numbers<[1], [0], [0], [1], [0, 0, 1, 1], [], []>} : vector<256x4xbf16>, vector<4x256xbf16>, vector<256x256xf32> -> vector<256x256xf32>
    %63 = arith.addf %54, %62 : vector<256x256xf32>
    %c2_i32_56 = arith.constant 2 : i32
    %64 = arith.addi %1, %c2_i32_56 : i32
    %c0_57 = arith.constant 0 : index
    %65 = arith.index_cast %64 : i32 to index
    %c1_58 = arith.constant 1 : index
    %c0_59 = arith.constant 0 : index
    %66 = vector.load %arg2[%c0_57, %65, %c1_58, %c0_59] : memref<1x18x18x4xbf16, #tpu.memory_space<vmem>>, vector<1x16x16x4xbf16>
    %67 = vector.shape_cast %66 : vector<1x16x16x4xbf16> to vector<16x16x4xbf16>
    %68 = vector.shape_cast %67 : vector<16x16x4xbf16> to vector<256x4xbf16>
    %c2_60 = arith.constant 2 : index
    %c1_61 = arith.constant 1 : index
    %c0_62 = arith.constant 0 : index
    %c0_63 = arith.constant 0 : index
    %69 = vector.load %arg3[%c2_60, %c1_61, %c0_62, %c0_63] : memref<3x3x4x256xbf16, #tpu.memory_space<vmem>>, vector<1x1x4x256xbf16>
    %70 = vector.shape_cast %69 : vector<1x1x4x256xbf16> to vector<4x256xbf16>
    %cst_64 = arith.constant dense<0.000000e+00> : vector<256x256xf32>
    %71 = tpu.matmul %68, %70, %cst_64 {dimension_numbers = #tpu.dot_dimension_numbers<[1], [0], [0], [1], [0, 0, 1, 1], [], []>} : vector<256x4xbf16>, vector<4x256xbf16>, vector<256x256xf32> -> vector<256x256xf32>
    %72 = arith.addf %63, %71 : vector<256x256xf32>
    %c2_i32_65 = arith.constant 2 : i32
    %73 = arith.addi %1, %c2_i32_65 : i32
    %c0_66 = arith.constant 0 : index
    %74 = arith.index_cast %73 : i32 to index
    %c2_67 = arith.constant 2 : index
    %c0_68 = arith.constant 0 : index
    %75 = vector.load %arg2[%c0_66, %74, %c2_67, %c0_68] : memref<1x18x18x4xbf16, #tpu.memory_space<vmem>>, vector<1x16x16x4xbf16>
    %76 = vector.shape_cast %75 : vector<1x16x16x4xbf16> to vector<16x16x4xbf16>
    %77 = vector.shape_cast %76 : vector<16x16x4xbf16> to vector<256x4xbf16>
    %c2_69 = arith.constant 2 : index
    %c2_70 = arith.constant 2 : index
    %c0_71 = arith.constant 0 : index
    %c0_72 = arith.constant 0 : index
    %78 = vector.load %arg3[%c2_69, %c2_70, %c0_71, %c0_72] : memref<3x3x4x256xbf16, #tpu.memory_space<vmem>>, vector<1x1x4x256xbf16>
    %79 = vector.shape_cast %78 : vector<1x1x4x256xbf16> to vector<4x256xbf16>
    %cst_73 = arith.constant dense<0.000000e+00> : vector<256x256xf32>
    %80 = tpu.matmul %77, %79, %cst_73 {dimension_numbers = #tpu.dot_dimension_numbers<[1], [0], [0], [1], [0, 0, 1, 1], [], []>} : vector<256x4xbf16>, vector<4x256xbf16>, vector<256x256xf32> -> vector<256x256xf32>
    %81 = arith.addf %72, %80 : vector<256x256xf32>
    %c0_74 = arith.constant 0 : index
    %c0_75 = arith.constant 0 : index
    %82 = vector.load %arg6[%c0_74, %c0_75] : memref<1x256xf32, #tpu.memory_space<vmem>>, vector<1x256xf32>
    %83 = vector.broadcast %82 : vector<1x256xf32> to vector<256x256xf32>
    %84 = arith.addf %81, %83 : vector<256x256xf32>
    %cst_76 = arith.constant 0.000000e+00 : f32
    %85 = vector.broadcast %cst_76 : f32 to vector<256x256xf32>
    %86 = arith.maximumf %84, %85 : vector<256x256xf32>
    %87 = arith.truncf %86 : vector<256x256xf32> to vector<256x256xbf16>
    %c0_77 = arith.constant 0 : index
    %c0_78 = arith.constant 0 : index
    %88 = vector.load %arg4[%c0_77, %c0_78] : memref<256x128xbf16, #tpu.memory_space<vmem>>, vector<256x128xbf16>
    %cst_79 = arith.constant dense<0.000000e+00> : vector<256x128xf32>
    %89 = tpu.matmul %87, %88, %cst_79 {dimension_numbers = #tpu.dot_dimension_numbers<[1], [0], [0], [1], [0, 0, 1, 1], [], []>} : vector<256x256xbf16>, vector<256x128xbf16>, vector<256x128xf32> -> vector<256x128xf32>
    %c0_80 = arith.constant 0 : index
    %c0_81 = arith.constant 0 : index
    %90 = vector.load %arg5[%c0_80, %c0_81] : memref<1x128xf32, #tpu.memory_space<vmem>>, vector<1x128xf32>
    %91 = vector.broadcast %90 : vector<1x128xf32> to vector<256x128xf32>
    %92 = arith.addf %89, %91 : vector<256x128xf32>
    %93 = vector.shape_cast %92 : vector<256x128xf32> to vector<1x16x16x128xf32>
    %94 = arith.truncf %93 : vector<1x16x16x128xf32> to vector<1x16x16x128xbf16>
    %c0_82 = arith.constant 0 : index
    %c0_83 = arith.constant 0 : index
    %c0_84 = arith.constant 0 : index
    %c0_85 = arith.constant 0 : index
    %95 = vector.load %arg7[%c0_82, %c0_83, %c0_84, %c0_85] : memref<1x16x16x128xbf16, #tpu.memory_space<vmem>>, vector<1x16x16x128xbf16>
    tpu.vector_store %arg7[%c0_82, %c0_83, %c0_84, %c0_85], %94 {strides = array<i32>} : memref<1x16x16x128xbf16, #tpu.memory_space<vmem>>, vector<1x16x16x128xbf16>,
    return
  }
  func.func @transform_0(%arg0: i32, %arg1: i32) -> (i32, i32, i32, i32) {
    %c0_i32 = arith.constant 0 : i32
    %c0_i32_0 = arith.constant 0 : i32
    %c0_i32_1 = arith.constant 0 : i32
    %c0_i32_2 = arith.constant 0 : i32
    return %arg0, %c0_i32, %c0_i32_0, %c0_i32_1 : i32, i32, i32, i32
  }
  func.func @transform_1(%arg0: i32, %arg1: i32) -> (i32, i32, i32, i32) {
    %c0_i32 = arith.constant 0 : i32
    %c0_i32_0 = arith.constant 0 : i32
    %c0_i32_1 = arith.constant 0 : i32
    %c0_i32_2 = arith.constant 0 : i32
    %c0_i32_3 = arith.constant 0 : i32
    return %c0_i32, %c0_i32_0, %c0_i32_1, %c0_i32_2 : i32, i32, i32, i32
  }
  func.func @transform_2(%arg0: i32, %arg1: i32) -> (i32, i32) {
    %c0_i32 = arith.constant 0 : i32
    %c0_i32_0 = arith.constant 0 : i32
    %c0_i32_1 = arith.constant 0 : i32
    return %c0_i32, %c0_i32_0 : i32, i32
  }
  func.func @transform_3(%arg0: i32, %arg1: i32) -> (i32, i32) {
    %c0_i32 = arith.constant 0 : i32
    %c0_i32_0 = arith.constant 0 : i32
    %c0_i32_1 = arith.constant 0 : i32
    return %c0_i32, %c0_i32_0 : i32, i32
  }
  func.func @transform_4(%arg0: i32, %arg1: i32) -> (i32, i32) {
    %c0_i32 = arith.constant 0 : i32
    %c0_i32_0 = arith.constant 0 : i32
    %c0_i32_1 = arith.constant 0 : i32
    return %c0_i32, %c0_i32_0 : i32, i32
  }
  func.func @transform_5(%arg0: i32, %arg1: i32) -> (i32, i32, i32, i32) {
    %c0_i32 = arith.constant 0 : i32
    %c0_i32_0 = arith.constant 0 : i32
    %c0_i32_1 = arith.constant 0 : i32
    return %arg0, %arg1, %c0_i32, %c0_i32_0 : i32, i32, i32, i32
  }
}

</mosaic_0001>

<llo_original>
// kernel: auxiliary_psp_forward_nhwc.1
$region0: #{auxiliary_psp_forward_nhwc.1}
  #allocation0 [shape = 'u32[]', space=smem, size = 0x4, offset = 0x4, fixed_abs, tag = 'smem constant byte address 0x4 - core index']
  #allocation1 [shape = 'u32[72,128]{1,0:T(1,128)}', space=vmem, size = 0x9000, scoped, tag = 'internal scratch']
  %s0 = inlined_call_operand.vmem [shape: bf16[2,18,18,4], index: 0, kind: input, shape index: {}]
  %s1 = inlined_call_operand.vmem [shape: bf16[3,3,4,256], index: 1, kind: input, shape index: {}]
  %s2 = inlined_call_operand.vmem [shape: bf16[256,128], index: 2, kind: input, shape index: {}]
  %s3 = inlined_call_operand.vmem [shape: f32[1,128], index: 3, kind: input, shape index: {}]
  %s4 = inlined_call_operand.vmem [shape: f32[1,256], index: 4, kind: input, shape index: {}]
  %s5 = inlined_call_operand.vmem [shape: bf16[2,16,16,128], index: 5, kind: output, shape index: {}]
  %s6 = sld [smem:[#allocation0]]
  $region53: #{auxiliary_psp_forward_nhwc.1} parent=0
    _
  %s8 = ssub.s32 1, %s6
  %s9 = scalar_select 0, %s8, %s6
  loop: start=0, step=1, limit=4
  $region2: #{auxiliary_psp_forward_nhwc.1} parent=0 // loop_pre_header
    _
  $region3: #{auxiliary_psp_forward_nhwc.1} parent=0 // loop_header
    %s11 = sphi 0, %s15
    %p12 = scmp.ge.s32.totalorder %s11, 4
    %s18 = sphi 0, %s30
    %s19 = sphi 0, %s26
    %s20 = sphi 0, %s18
    %s21 = sphi 0, %s19
    %s22 = sphi 0, %s20
    %s23 = sphi 0, %s21
    %s33 = sphi 0, %s35
    %s36 = sphi 0, %s33
    %s37 = sphi 0, %s36
    %s53 = sphi 0, %s37
    %s57 = sphi 0, %s57
    %s59 = sphi 0, %s57
    %s60 = sphi 0, %s59
    %s74 = sphi 0, %s60
    %s78 = sphi 0, %s78
    %s80 = sphi 0, %s78
    %s81 = sphi 0, %s80
    %s95 = sphi 0, %s81
    %s99 = sphi 0, %s99
    %s101 = sphi 0, %s99
    %s102 = sphi 0, %s101
    %s116 = sphi 0, %s102
    %s120 = sphi 0, %s120
    %s122 = sphi 0, %s120
    %s123 = sphi 0, %s122
    %s137 = sphi 0, %s123
    %s145 = sphi 0, %s147
    %s148 = sphi 0, %s145
    %s149 = sphi 0, %s148
    %s165 = sphi 0, %s149
  $region4: #{auxiliary_psp_forward_nhwc.1} parent=0 // loop_header_branch
    %14 = sbr.rel (%p12) target = $region8
  $region5: #{auxiliary_psp_forward_nhwc.1} parent=0 // loop_body
    %s16 = ssub.s32 %s11, 1
    %s17 = ssub.s32 %s11, 2
    %s24 = sadd.s32 1, %s19
    %p25 = scmp.ge.s32.totalorder %s24, 1
    %s26 = scalar_select %p25, 0, %s24
    %s27 = sadd.s32 1, %s18
    %s28 = scalar_select %p25, %s27, %s18
    %p29 = scmp.ge.s32.totalorder %s28, 2
    %s30 = scalar_select %p29, 0, %s28
    %s31 = ssub.s32 %s18, %s30
    %p32 = scmp.eq.s32.totalorder %s31, 0
    %s34 = sadd.s32 %s33, 1
    %s35 = scalar_select %p32, %s33, %s34
    %p38 = pneg %p32
    %p39 = scmp.eq.s32.totalorder %s11, 1
    %p40 = por %p38, %p39
    %p41 = scmp.ne.s32.totalorder %s33, %s36
    %p42 = scmp.eq.s32.totalorder %s11, 0
    %p43 = por %p41, %p42
    %p44 = scmp.ne.s32.totalorder %s33, %s36
    %p45 = scmp.eq.s32.totalorder %s16, 1
    %p46 = por %p44, %p45
    %p47 = scmp.ne.s32.totalorder %s36, %s37
    %p48 = scmp.eq.s32.totalorder %s16, 0
    %p49 = por %p47, %p48
    %p50 = scmp.ne.s32.totalorder %s36, %s37
    %p51 = scmp.eq.s32.totalorder %s17, 1
    %p52 = por %p50, %p51
    %p54 = scmp.ne.s32.totalorder %s37, %s53
    %p55 = scmp.eq.s32.totalorder %s17, 0
    %p56 = por %p54, %p55
    %s58 = sadd.s32 %s57, 1
    %p61 = scmp.eq.s32.totalorder %s11, 1
    %p62 = scmp.ne.s32.totalorder %s57, %s59
    %p63 = scmp.eq.s32.totalorder %s11, 0
    %p64 = por %p62, %p63
    %p65 = scmp.ne.s32.totalorder %s57, %s59
    %p66 = scmp.eq.s32.totalorder %s16, 1
    %p67 = por %p65, %p66
    %p68 = scmp.ne.s32.totalorder %s59, %s60
    %p69 = scmp.eq.s32.totalorder %s16, 0
    %p70 = por %p68, %p69
    %p71 = scmp.ne.s32.totalorder %s59, %s60
    %p72 = scmp.eq.s32.totalorder %s17, 1
    %p73 = por %p71, %p72
    %p75 = scmp.ne.s32.totalorder %s60, %s74
    %p76 = scmp.eq.s32.totalorder %s17, 0
    %p77 = por %p75, %p76
    %s79 = sadd.s32 %s78, 1
    %p82 = scmp.eq.s32.totalorder %s11, 1
    %p83 = scmp.ne.s32.totalorder %s78, %s80
    %p84 = scmp.eq.s32.totalorder %s11, 0
    %p85 = por %p83, %p84
    %p86 = scmp.ne.s32.totalorder %s78, %s80
    %p87 = scmp.eq.s32.totalorder %s16, 1
    %p88 = por %p86, %p87
    %p89 = scmp.ne.s32.totalorder %s80, %s81
    %p90 = scmp.eq.s32.totalorder %s16, 0
    %p91 = por %p89, %p90
    %p92 = scmp.ne.s32.totalorder %s80, %s81
    %p93 = scmp.eq.s32.totalorder %s17, 1
    %p94 = por %p92, %p93
    %p96 = scmp.ne.s32.totalorder %s81, %s95
    %p97 = scmp.eq.s32.totalorder %s17, 0
    %p98 = por %p96, %p97
    %s100 = sadd.s32 %s99, 1
    %p103 = scmp.eq.s32.totalorder %s11, 1
    %p104 = scmp.ne.s32.totalorder %s99, %s101
    %p105 = scmp.eq.s32.totalorder %s11, 0
    %p106 = por %p104, %p105
    %p107 = scmp.ne.s32.totalorder %s99, %s101
    %p108 = scmp.eq.s32.totalorder %s16, 1
    %p109 = por %p107, %p108
    %p110 = scmp.ne.s32.totalorder %s101, %s102
    %p111 = scmp.eq.s32.totalorder %s16, 0
    %p112 = por %p110, %p111
    %p113 = scmp.ne.s32.totalorder %s101, %s102
    %p114 = scmp.eq.s32.totalorder %s17, 1
    %p115 = por %p113, %p114
    %p117 = scmp.ne.s32.totalorder %s102, %s116
    %p118 = scmp.eq.s32.totalorder %s17, 0
    %p119 = por %p117, %p118
    %s121 = sadd.s32 %s120, 1
    %p124 = scmp.eq.s32.totalorder %s11, 1
    %p125 = scmp.ne.s32.totalorder %s120, %s122
    %p126 = scmp.eq.s32.totalorder %s11, 0
    %p127 = por %p125, %p126
    %p128 = scmp.ne.s32.totalorder %s120, %s122
    %p129 = scmp.eq.s32.totalorder %s16, 1
    %p130 = por %p128, %p129
    %p131 = scmp.ne.s32.totalorder %s122, %s123
    %p132 = scmp.eq.s32.totalorder %s16, 0
    %p133 = por %p131, %p132
    %p134 = scmp.ne.s32.totalorder %s122, %s123
    %p135 = scmp.eq.s32.totalorder %s17, 1
    %p136 = por %p134, %p135
    %p138 = scmp.ne.s32.totalorder %s123, %s137
    %p139 = scmp.eq.s32.totalorder %s17, 0
    %p140 = por %p138, %p139
    %s141 = ssub.s32 %s18, %s30
    %s142 = ssub.s32 %s19, %s26
    %s143 = sor.u32 %s141, %s142
    %p144 = scmp.eq.s32.totalorder %s143, 0
    %s146 = sadd.s32 %s145, 1
    %s147 = scalar_select %p144, %s145, %s146
    %p150 = pneg %p144
    %p151 = scmp.eq.s32.totalorder %s11, 1
    %p152 = por %p150, %p151
    %p153 = scmp.ne.s32.totalorder %s145, %s148
    %p154 = scmp.eq.s32.totalorder %s11, 0
    %p155 = por %p153, %p154
    %p156 = scmp.ne.s32.totalorder %s145, %s148
    %p157 = scmp.eq.s32.totalorder %s16, 1
    %p158 = por %p156, %p157
    %p159 = scmp.ne.s32.totalorder %s148, %s149
    %p160 = scmp.eq.s32.totalorder %s16, 0
    %p161 = por %p159, %p160
    %p162 = scmp.ne.s32.totalorder %s148, %s149
    %p163 = scmp.eq.s32.totalorder %s17, 1
    %p164 = por %p162, %p163
    %p166 = scmp.ne.s32.totalorder %s149, %s165
    %p167 = scmp.eq.s32.totalorder %s17, 0
    %p168 = por %p166, %p167
    %p169 = scmp.le.s32.totalorder 1, %s11
    %p170 = scmp.lt.s32.totalorder %s11, 3
    %p171 = pnand %p169, %p170
    %p172 = pneg %p171
    // Predicated region
    $region9: #{auxiliary_psp_forward_nhwc.1} parent=5 // pred_check
      _
    $region10: #{auxiliary_psp_forward_nhwc.1} parent=5 // pred_check_branch
      %174 = sbr.rel (%p171) target = $region12
    $region11: #{auxiliary_psp_forward_nhwc.1} parent=5 // pred_region
      %s175 = ssub.s32 %s11, 1
      // Predicated region
      $region13: #{auxiliary_psp_forward_nhwc.1} parent=11 // pred_check
        %p176 = pneg %p70
      $region14: #{auxiliary_psp_forward_nhwc.1} parent=11 // pred_check_branch
        %178 = sbr.rel (%p176) target = $region16
      $region15: #{auxiliary_psp_forward_nhwc.1} parent=11 // pred_region
        _
      $region16: #{auxiliary_psp_forward_nhwc.1} parent=11 // pred_fallthru
        _
      // Predicated region
      $region17: #{auxiliary_psp_forward_nhwc.1} parent=11 // pred_check
        %p179 = pneg %p91
      $region18: #{auxiliary_psp_forward_nhwc.1} parent=11 // pred_check_branch
        %181 = sbr.rel (%p179) target = $region20
      $region19: #{auxiliary_psp_forward_nhwc.1} parent=11 // pred_region
        _
      $region20: #{auxiliary_psp_forward_nhwc.1} parent=11 // pred_fallthru
        _
      // Predicated region
      $region21: #{auxiliary_psp_forward_nhwc.1} parent=11 // pred_check
        %p182 = pneg %p112
      $region22: #{auxiliary_psp_forward_nhwc.1} parent=11 // pred_check_branch
        %184 = sbr.rel (%p182) target = $region24
      $region23: #{auxiliary_psp_forward_nhwc.1} parent=11 // pred_region
        _
      $region24: #{auxiliary_psp_forward_nhwc.1} parent=11 // pred_fallthru
        _
      // Predicated region
      $region25: #{auxiliary_psp_forward_nhwc.1} parent=11 // pred_check
        %p185 = pneg %p133
      $region26: #{auxiliary_psp_forward_nhwc.1} parent=11 // pred_check_branch
        %187 = sbr.rel (%p185) target = $region28
      $region27: #{auxiliary_psp_forward_nhwc.1} parent=11 // pred_region
        _
      $region28: #{auxiliary_psp_forward_nhwc.1} parent=11 // pred_fallthru
        _
    $region12: #{auxiliary_psp_forward_nhwc.1} parent=5 // pred_fallthru
      _
    %p188 = scmp.lt.s32.totalorder %s11, 2
    // Predicated region
    $region29: #{auxiliary_psp_forward_nhwc.1} parent=5 // pred_check
      %p189 = pneg %p188
    $region30: #{auxiliary_psp_forward_nhwc.1} parent=5 // pred_check_branch
      %191 = sbr.rel (%p189) target = $region32
    $region31: #{auxiliary_psp_forward_nhwc.1} parent=5 // pred_region
      // Predicated region
      $region33: #{auxiliary_psp_forward_nhwc.1} parent=31 // pred_check
        %p192 = pneg %p43
      $region34: #{auxiliary_psp_forward_nhwc.1} parent=31 // pred_check_branch
        %194 = sbr.rel (%p192) target = $region36
      $region35: #{auxiliary_psp_forward_nhwc.1} parent=31 // pred_region
        %p195 = scmp.lt.s32.totalorder %s18, 1
        %s196 = scalar_select %p195, %s18, 1
        %s197 = smul.addr %s196, 54
        %s198 = smul.addr %s197, 4
        %s199 = scalar_lea.vmem %s0, %s198
      $region36: #{auxiliary_psp_forward_nhwc.1} parent=31 // pred_fallthru
        _
    $region32: #{auxiliary_psp_forward_nhwc.1} parent=5 // pred_fallthru
      _
    %p200 = scmp.le.s32.totalorder 1, %s11
    %p201 = scmp.lt.s32.totalorder %s11, 3
    %p202 = pnand %p200, %p201
    %p203 = pneg %p202
    // Predicated region
    $region37: #{auxiliary_psp_forward_nhwc.1} parent=5 // pred_check
      _
    $region38: #{auxiliary_psp_forward_nhwc.1} parent=5 // pred_check_branch
      %205 = sbr.rel (%p202) target = $region40
    $region39: #{auxiliary_psp_forward_nhwc.1} parent=5 // pred_region
      %s206 = ssub.s32 %s11, 1
      %p207 = scmp.lt.s32.totalorder %s20, 1
      %s208 = scalar_select %p207, %s20, 1
      %s209 = smul.addr %s208, 54
      %s210 = smul.addr %s209, 4
      %s211 = scalar_lea.vmem %s0, %s210
      %p212 = pneg %p49
      %p213 = pneg %p46
      %p214 = pneg %p70
      %p215 = pneg %p67
      %p216 = pneg %p91
      %p217 = pneg %p88
      %p218 = pneg %p112
      %p219 = pneg %p109
      %p220 = pneg %p133
      %p221 = pneg %p130
      %p222 = pneg %p161
      %p223 = pneg %p158
      %s224 = smul.u32 16, %s21
      %p225 = scmp.lt.s32.totalorder %s20, 1
      %s226 = scalar_select %p225, %s20, 1
      %p227 = scmp.lt.s32.totalorder %s224, 15
      %s228 = scalar_select %p227, %s224, 15
      %s229 = smul.addr %s228, 2
      %s230 = smul.addr %s226, 32
      %s231 = sadd.s32 %s229, %s230
      %s232 = smul.addr %s231, 4
      %s233 = scalar_lea.vmem %s5, %s232
      %p234 = scmp.lt.s32.totalorder %s20, 1
      %s235 = scalar_select %p234, %s20, 1
      %s236 = smul.addr %s235, 54
      %s237 = smul.addr %s236, 4
      %s238 = scalar_lea.vmem %s0, %s237
      %s239 = smul.u32 16, %s21
      %p240 = scmp.lt.s32.totalorder %s20, 1
      %s241 = scalar_select %p240, %s20, 1
      %p242 = scmp.lt.s32.totalorder %s239, 15
      %s243 = scalar_select %p242, %s239, 15
      %s244 = smul.addr %s243, 2
      %s245 = smul.addr %s241, 32
      %s246 = sadd.s32 %s244, %s245
      %s247 = smul.addr %s246, 4
      %s248 = scalar_lea.vmem %s5, %s247
      %s249 = smul.u32 16, %s21
      %s251 = smul.u32 %s21, 16
      %s252 = smul.u32 %s251, 3
      %s253 = smul.addr %s252, 4
      %s254 = scalar_lea.vmem %s238, %s253
      %v255 = vld [vmem:[%s254] sm:$0xf]
      %v256 = vld [vmem:[%s254 + $0x4] sm:$0xf]
      %v257 = vld [vmem:[%s254 + $0xc] sm:$0xf]
      %v258 = vld [vmem:[%s254 + $0x10] sm:$0xf]
      %v259 = vld [vmem:[%s254 + $0x18] sm:$0xf]
      %v260 = vld [vmem:[%s254 + $0x1c] sm:$0xf]
      %v261 = vld [vmem:[%s254 + $0x24] sm:$0xf]
      %v262 = vld [vmem:[%s254 + $0x28] sm:$0xf]
      %v263 = vld [vmem:[%s254 + $0x30] sm:$0xf]
      %v264 = vld [vmem:[%s254 + $0x34] sm:$0xf]
      %v265 = vld [vmem:[%s254 + $0x3c] sm:$0xf]
      %v266 = vld [vmem:[%s254 + $0x40] sm:$0xf]
      %v267 = vld [vmem:[%s254 + $0x48] sm:$0xf]
      %v268 = vld [vmem:[%s254 + $0x4c] sm:$0xf]
      %v269 = vld [vmem:[%s254 + $0x54] sm:$0xf]
      %v270 = vld [vmem:[%s254 + $0x58] sm:$0xf]
      %v271 = vld [vmem:[%s254 + $0x60] sm:$0xf]
      %v272 = vld [vmem:[%s254 + $0x64] sm:$0xf]
      %v273 = vld [vmem:[%s254 + $0x6c] sm:$0xf]
      %v274 = vld [vmem:[%s254 + $0x70] sm:$0xf]
      %v275 = vld [vmem:[%s254 + $0x78] sm:$0xf]
      %v276 = vld [vmem:[%s254 + $0x7c] sm:$0xf]
      %v277 = vld [vmem:[%s254 + $0x84] sm:$0xf]
      %v278 = vld [vmem:[%s254 + $0x88] sm:$0xf]
      %v279 = vld [vmem:[%s254 + $0x90] sm:$0xf]
      %v280 = vld [vmem:[%s254 + $0x94] sm:$0xf]
      %v281 = vld [vmem:[%s254 + $0x9c] sm:$0xf]
      %v282 = vld [vmem:[%s254 + $0xa0] sm:$0xf]
      %v283 = vld [vmem:[%s254 + $0xa8] sm:$0xf]
      %v284 = vld [vmem:[%s254 + $0xac] sm:$0xf]
      %v285 = vld [vmem:[%s254 + $0xb4] sm:$0xf]
      %v286 = vld [vmem:[%s254 + $0xb8] sm:$0xf]
      %v287 = vld [vmem:[%s1] sm:$0xf]
      %v288 = vld [vmem:[%s254 + $0x8] sm:$0x1]
      %v289 = vld [vmem:[%s254 + $0x14] sm:$0x1]
      %v290 = vld [vmem:[%s254 + $0x20] sm:$0x1]
      %v291 = vld [vmem:[%s254 + $0x2c] sm:$0x1]
      %v292 = vld [vmem:[%s254 + $0x38] sm:$0x1]
      %v293 = vld [vmem:[%s254 + $0x44] sm:$0x1]
      %v294 = vld [vmem:[%s254 + $0x50] sm:$0x1]
      %v295 = vld [vmem:[%s254 + $0x5c] sm:$0x1]
      %v296 = vld [vmem:[%s254 + $0x68] sm:$0x1]
      %v297 = vld [vmem:[%s254 + $0x74] sm:$0x1]
      %v298 = vld [vmem:[%s254 + $0x80] sm:$0x1]
      %v299 = vld [vmem:[%s254 + $0x8c] sm:$0x1]
      %v300 = vld [vmem:[%s254 + $0x98] sm:$0x1]
      %v301 = vld [vmem:[%s254 + $0xa4] sm:$0x1]
      %v302 = vld [vmem:[%s254 + $0xb0] sm:$0x1]
      %v303 = vld [vmem:[%s254 + $0xbc] sm:$0x1]
      %vm304 = vsmask.f32 3328
      %vm305 = vsmask.f32 7440
      %vm306 = vmor %vm304, %vm305
      %v308 = vshrl.u32 %v255, 16
      %v310 = vrot.slane %v308, 4
      %v311 = vshll.u32 %v255, 16
      %v313 = vrot.slane %v311, 5
      %v314 = vor.u32 %v310, %v313
      %v315 = vrot.slane %v314, 4
      %v317 = vshll.u32 %v256, 16
      %v319 = vrot.slane %v317, 5
      %v320 = vsel %vm306, %v315, %v319
      %v321 = vshrl.u32 %v256, 16
      %v323 = vrot.slane %v321, 4
      %v324 = vor.u32 %v323, %v319
      %v325 = vrot.slane %v324, 4
      %v327 = vshll.u32 %v288, 16
      %v329 = vrot.slane %v327, 5
      %v330 = vsel %vm306, %v325, %v329
      %v332 = vshrl.u32 %v257, 16
      %v334 = vrot.slane %v332, 4
      %v335 = vshll.u32 %v257, 16
      %v337 = vrot.slane %v335, 5
      %v338 = vor.u32 %v334, %v337
      %v339 = vrot.slane %v338, 4
      %v341 = vshll.u32 %v258, 16
      %v343 = vrot.slane %v341, 5
      %v344 = vsel %vm306, %v339, %v343
      %v345 = vshrl.u32 %v258, 16
      %v347 = vrot.slane %v345, 4
      %v348 = vor.u32 %v347, %v343
      %v349 = vrot.slane %v348, 4
      %v351 = vshll.u32 %v289, 16
      %v353 = vrot.slane %v351, 5
      %v354 = vsel %vm306, %v349, %v353
      %v356 = vshrl.u32 %v259, 16
      %v358 = vrot.slane %v356, 4
      %v359 = vshll.u32 %v259, 16
      %v361 = vrot.slane %v359, 5
      %v362 = vor.u32 %v358, %v361
      %v363 = vrot.slane %v362, 4
      %v365 = vshll.u32 %v260, 16
      %v367 = vrot.slane %v365, 5
      %v368 = vsel %vm306, %v363, %v367
      %v369 = vshrl.u32 %v260, 16
      %v371 = vrot.slane %v369, 4
      %v372 = vor.u32 %v371, %v367
      %v373 = vrot.slane %v372, 4
      %v375 = vshll.u32 %v290, 16
      %v377 = vrot.slane %v375, 5
      %v378 = vsel %vm306, %v373, %v377
      %v380 = vshrl.u32 %v261, 16
      %v382 = vrot.slane %v380, 4
      %v383 = vshll.u32 %v261, 16
      %v385 = vrot.slane %v383, 5
      %v386 = vor.u32 %v382, %v385
      %v387 = vrot.slane %v386, 4
      %v389 = vshll.u32 %v262, 16
      %v391 = vrot.slane %v389, 5
      %v392 = vsel %vm306, %v387, %v391
      %v393 = vshrl.u32 %v262, 16
      %v395 = vrot.slane %v393, 4
      %v396 = vor.u32 %v395, %v391
      %v397 = vrot.slane %v396, 4
      %v399 = vshll.u32 %v291, 16
      %v401 = vrot.slane %v399, 5
      %v402 = vsel %vm306, %v397, %v401
      %v404 = vshrl.u32 %v263, 16
      %v406 = vrot.slane %v404, 4
      %v407 = vshll.u32 %v263, 16
      %v409 = vrot.slane %v407, 5
      %v410 = vor.u32 %v406, %v409
      %v411 = vrot.slane %v410, 4
      %v413 = vshll.u32 %v264, 16
      %v415 = vrot.slane %v413, 5
      %v416 = vsel %vm306, %v411, %v415
      %v417 = vshrl.u32 %v264, 16
      %v419 = vrot.slane %v417, 4
      %v420 = vor.u32 %v419, %v415
      %v421 = vrot.slane %v420, 4
      %v423 = vshll.u32 %v292, 16
      %v425 = vrot.slane %v423, 5
      %v426 = vsel %vm306, %v421, %v425
      %v428 = vshrl.u32 %v265, 16
      %v430 = vrot.slane %v428, 4
      %v431 = vshll.u32 %v265, 16
      %v433 = vrot.slane %v431, 5
      %v434 = vor.u32 %v430, %v433
      %v435 = vrot.slane %v434, 4
      %v437 = vshll.u32 %v266, 16
      %v439 = vrot.slane %v437, 5
      %v440 = vsel %vm306, %v435, %v439
      %v441 = vshrl.u32 %v266, 16
      %v443 = vrot.slane %v441, 4
      %v444 = vor.u32 %v443, %v439
      %v445 = vrot.slane %v444, 4
      %v447 = vshll.u32 %v293, 16
      %v449 = vrot.slane %v447, 5
      %v450 = vsel %vm306, %v445, %v449
      %v452 = vshrl.u32 %v267, 16
      %v454 = vrot.slane %v452, 4
      %v455 = vshll.u32 %v267, 16
      %v457 = vrot.slane %v455, 5
      %v458 = vor.u32 %v454, %v457
      %v459 = vrot.slane %v458, 4
      %v461 = vshll.u32 %v268, 16
      %v463 = vrot.slane %v461, 5
      %v464 = vsel %vm306, %v459, %v463
      %v465 = vshrl.u32 %v268, 16
      %v467 = vrot.slane %v465, 4
      %v468 = vor.u32 %v467, %v463
      %v469 = vrot.slane %v468, 4
      %v471 = vshll.u32 %v294, 16
      %v473 = vrot.slane %v471, 5
      %v474 = vsel %vm306, %v469, %v473
      %v476 = vshrl.u32 %v269, 16
      %v478 = vrot.slane %v476, 4
      %v479 = vshll.u32 %v269, 16
      %v481 = vrot.slane %v479, 5
      %v482 = vor.u32 %v478, %v481
      %v483 = vrot.slane %v482, 4
      %v485 = vshll.u32 %v270, 16
      %v487 = vrot.slane %v485, 5
      %v488 = vsel %vm306, %v483, %v487
      %v489 = vshrl.u32 %v270, 16
      %v491 = vrot.slane %v489, 4
      %v492 = vor.u32 %v491, %v487
      %v493 = vrot.slane %v492, 4
      %v495 = vshll.u32 %v295, 16
      %v497 = vrot.slane %v495, 5
      %v498 = vsel %vm306, %v493, %v497
      %v500 = vshrl.u32 %v271, 16
      %v502 = vrot.slane %v500, 4
      %v503 = vshll.u32 %v271, 16
      %v505 = vrot.slane %v503, 5
      %v506 = vor.u32 %v502, %v505
      %v507 = vrot.slane %v506, 4
      %v509 = vshll.u32 %v272, 16
      %v511 = vrot.slane %v509, 5
      %v512 = vsel %vm306, %v507, %v511
      %v513 = vshrl.u32 %v272, 16
      %v515 = vrot.slane %v513, 4
      %v516 = vor.u32 %v515, %v511
      %v517 = vrot.slane %v516, 4
      %v519 = vshll.u32 %v296, 16
      %v521 = vrot.slane %v519, 5
      %v522 = vsel %vm306, %v517, %v521
      %v524 = vshrl.u32 %v273, 16
      %v526 = vrot.slane %v524, 4
      %v527 = vshll.u32 %v273, 16
      %v529 = vrot.slane %v527, 5
      %v530 = vor.u32 %v526, %v529
      %v531 = vrot.slane %v530, 4
      %v533 = vshll.u32 %v274, 16
      %v535 = vrot.slane %v533, 5
      %v536 = vsel %vm306, %v531, %v535
      %v537 = vshrl.u32 %v274, 16
      %v539 = vrot.slane %v537, 4
      %v540 = vor.u32 %v539, %v535
      %v541 = vrot.slane %v540, 4
      %v543 = vshll.u32 %v297, 16
      %v545 = vrot.slane %v543, 5
      %v546 = vsel %vm306, %v541, %v545
      %v548 = vshrl.u32 %v275, 16
      %v550 = vrot.slane %v548, 4
      %v551 = vshll.u32 %v275, 16
      %v553 = vrot.slane %v551, 5
      %v554 = vor.u32 %v550, %v553
      %v555 = vrot.slane %v554, 4
      %v557 = vshll.u32 %v276, 16
      %v559 = vrot.slane %v557, 5
      %v560 = vsel %vm306, %v555, %v559
      %v561 = vshrl.u32 %v276, 16
      %v563 = vrot.slane %v561, 4
      %v564 = vor.u32 %v563, %v559
      %v565 = vrot.slane %v564, 4
      %v567 = vshll.u32 %v298, 16
      %v569 = vrot.slane %v567, 5
      %v570 = vsel %vm306, %v565, %v569
      %v572 = vshrl.u32 %v277, 16
      %v574 = vrot.slane %v572, 4
      %v575 = vshll.u32 %v277, 16
      %v577 = vrot.slane %v575, 5
      %v578 = vor.u32 %v574, %v577
      %v579 = vrot.slane %v578, 4
      %v581 = vshll.u32 %v278, 16
      %v583 = vrot.slane %v581, 5
      %v584 = vsel %vm306, %v579, %v583
      %v585 = vshrl.u32 %v278, 16
      %v587 = vrot.slane %v585, 4
      %v588 = vor.u32 %v587, %v583
      %v589 = vrot.slane %v588, 4
      %v591 = vshll.u32 %v299, 16
      %v593 = vrot.slane %v591, 5
      %v594 = vsel %vm306, %v589, %v593
      %v596 = vshrl.u32 %v279, 16
      %v598 = vrot.slane %v596, 4
      %v599 = vshll.u32 %v279, 16
      %v601 = vrot.slane %v599, 5
      %v602 = vor.u32 %v598, %v601
      %v603 = vrot.slane %v602, 4
      %v605 = vshll.u32 %v280, 16
      %v607 = vrot.slane %v605, 5
      %v608 = vsel %vm306, %v603, %v607
      %v609 = vshrl.u32 %v280, 16
      %v611 = vrot.slane %v609, 4
      %v612 = vor.u32 %v611, %v607
      %v613 = vrot.slane %v612, 4
      %v615 = vshll.u32 %v300, 16
      %v617 = vrot.slane %v615, 5
      %v618 = vsel %vm306, %v613, %v617
      %v620 = vshrl.u32 %v281, 16
      %v622 = vrot.slane %v620, 4
      %v623 = vshll.u32 %v281, 16
      %v625 = vrot.slane %v623, 5
      %v626 = vor.u32 %v622, %v625
      %v627 = vrot.slane %v626, 4
      %v629 = vshll.u32 %v282, 16
      %v631 = vrot.slane %v629, 5
      %v632 = vsel %vm306, %v627, %v631
      %v633 = vshrl.u32 %v282, 16
      %v635 = vrot.slane %v633, 4
      %v636 = vor.u32 %v635, %v631
      %v637 = vrot.slane %v636, 4
      %v639 = vshll.u32 %v301, 16
      %v641 = vrot.slane %v639, 5
      %v642 = vsel %vm306, %v637, %v641
      %v644 = vshrl.u32 %v283, 16
      %v646 = vrot.slane %v644, 4
      %v647 = vshll.u32 %v283, 16
      %v649 = vrot.slane %v647, 5
      %v650 = vor.u32 %v646, %v649
      %v651 = vrot.slane %v650, 4
      %v653 = vshll.u32 %v284, 16
      %v655 = vrot.slane %v653, 5
      %v656 = vsel %vm306, %v651, %v655
      %v657 = vshrl.u32 %v284, 16
      %v659 = vrot.slane %v657, 4
      %v660 = vor.u32 %v659, %v655
      %v661 = vrot.slane %v660, 4
      %v663 = vshll.u32 %v302, 16
      %v665 = vrot.slane %v663, 5
      %v666 = vsel %vm306, %v661, %v665
      %v668 = vshrl.u32 %v285, 16
      %v670 = vrot.slane %v668, 4
      %v671 = vshll.u32 %v285, 16
      %v673 = vrot.slane %v671, 5
      %v674 = vor.u32 %v670, %v673
      %v675 = vrot.slane %v674, 4
      %v677 = vshll.u32 %v286, 16
      %v679 = vrot.slane %v677, 5
      %v680 = vsel %vm306, %v675, %v679
      %v681 = vshrl.u32 %v286, 16
      %v683 = vrot.slane %v681, 4
      %v684 = vor.u32 %v683, %v679
      %v685 = vrot.slane %v684, 4
      %v687 = vshll.u32 %v303, 16
      %v689 = vrot.slane %v687, 5
      %v690 = vsel %vm306, %v685, %v689
      %s691 = scalar_lea.vmem %s1, 4
      %v692 = vld [vmem:[%s691] sm:$0xf]
      %v693 = vunpack.c.l.b16 %v320
      %v694 = vunpack.c.l.b16 %v330
      %v695 = vunpack.c.l.b16 %v344
      %v696 = vunpack.c.l.b16 %v354
      %v697 = vunpack.c.l.b16 %v368
      %v698 = vunpack.c.l.b16 %v378
      %v699 = vunpack.c.l.b16 %v392
      %v700 = vunpack.c.l.b16 %v402
      %v701 = vunpack.c.l.b16 %v416
      %v702 = vunpack.c.l.b16 %v426
      %v703 = vunpack.c.l.b16 %v440
      %v704 = vunpack.c.l.b16 %v450
      %v705 = vunpack.c.l.b16 %v464
      %v706 = vunpack.c.l.b16 %v474
      %v707 = vunpack.c.l.b16 %v488
      %v708 = vunpack.c.l.b16 %v498
      %v709 = vunpack.c.l.b16 %v512
      %v710 = vunpack.c.l.b16 %v522
      %v711 = vunpack.c.l.b16 %v536
      %v712 = vunpack.c.l.b16 %v546
      %v713 = vunpack.c.l.b16 %v560
      %v714 = vunpack.c.l.b16 %v570
      %v715 = vunpack.c.l.b16 %v584
      %v716 = vunpack.c.l.b16 %v594
      %v717 = vunpack.c.l.b16 %v608
      %v718 = vunpack.c.l.b16 %v618
      %v719 = vunpack.c.l.b16 %v632
      %v720 = vunpack.c.l.b16 %v642
      %v721 = vunpack.c.l.b16 %v656
      %v722 = vunpack.c.l.b16 %v666
      %v723 = vunpack.c.l.b16 %v680
      %v724 = vunpack.c.l.b16 %v690
      %v725 = vpack.c.b16 %v694, %v693
      %v726 = vpack.c.b16 %v696, %v695
      %v727 = vpack.c.b16 %v698, %v697
      %v728 = vpack.c.b16 %v700, %v699
      %v729 = vpack.c.b16 %v702, %v701
      %v730 = vpack.c.b16 %v704, %v703
      %v731 = vpack.c.b16 %v706, %v705
      %v732 = vpack.c.b16 %v708, %v707
      %v733 = vpack.c.b16 %v710, %v709
      %v734 = vpack.c.b16 %v712, %v711
      %v735 = vpack.c.b16 %v714, %v713
      %v736 = vpack.c.b16 %v716, %v715
      %v737 = vpack.c.b16 %v718, %v717
      %v738 = vpack.c.b16 %v720, %v719
      %v739 = vpack.c.b16 %v722, %v721
      %v740 = vpack.c.b16 %v724, %v723
      %742 = vst [vmem:[#allocation1] ss:$4 sm:$0xff] %v692
      %v743 = vld.sshfl [vmem:[#allocation1] sm:$0xff pattern:$0x73625140]
      %v744 = vld.sshfl [vmem:[#allocation1 + $0x8] sm:$0xff pattern:$0x73625140]
      %vm745 = vcmask 31744
      %v747 = vsel %vm745, %v725, 0
      %v750 = vsel %vm745, %v726, 0
      %v753 = vsel %vm745, %v727, 0
      %v756 = vsel %vm745, %v728, 0
      %v759 = vsel %vm745, %v729, 0
      %v762 = vsel %vm745, %v730, 0
      %v765 = vsel %vm745, %v731, 0
      %v768 = vsel %vm745, %v732, 0
      %v771 = vsel %vm745, %v733, 0
      %v774 = vsel %vm745, %v734, 0
      %v777 = vsel %vm745, %v735, 0
      %v780 = vsel %vm745, %v736, 0
      %v783 = vsel %vm745, %v737, 0
      %v786 = vsel %vm745, %v738, 0
      %v789 = vsel %vm745, %v739, 0
      %v792 = vsel %vm745, %v740, 0
      %vm794 = vcmask 1041408
      %v795 = vsel %vm794, %v743, 0
      %v797 = vsel %vm794, %v744, 0
      %799 = vmatpush.bf16.msra.mxu0 0
      %800 = vmatpush.bf16.msra.mxu0 0
      %801 = vmatpush.bf16.msra.mxu0 0
      %802 = vmatpush.bf16.msra.mxu0 0
      %803 = vmatpush.bf16.msra.mxu0 0
      %804 = vmatpush.bf16.msra.mxu0 0
      %805 = vmatpush.bf16.msra.mxu0 0
      %806 = vmatpush.bf16.msra.mxu0 %v795
      %807 = vmatmul.bf16.gmra.mxu0 %v747
      %v808 = vpop.f32.mrf.mxu0
      %v809 = vadd.f32 0.0, %v808
      %v810 = vpop.f32.mrf.mxu0
      %v811 = vadd.f32 0.0, %v810
      %812 = vmatmul.bf16.gmra.mxu0 %v750
      %v813 = vpop.f32.mrf.mxu0
      %v814 = vadd.f32 0.0, %v813
      %v815 = vpop.f32.mrf.mxu0
      %v816 = vadd.f32 0.0, %v815
      %817 = vmatmul.bf16.gmra.mxu0 %v753
      %v818 = vpop.f32.mrf.mxu0
      %v819 = vadd.f32 0.0, %v818
      %v820 = vpop.f32.mrf.mxu0
      %v821 = vadd.f32 0.0, %v820
      %822 = vmatmul.bf16.gmra.mxu0 %v756
      %v823 = vpop.f32.mrf.mxu0
      %v824 = vadd.f32 0.0, %v823
      %v825 = vpop.f32.mrf.mxu0
      %v826 = vadd.f32 0.0, %v825
      %827 = vmatmul.bf16.gmra.mxu0 %v759
      %v828 = vpop.f32.mrf.mxu0
      %v829 = vadd.f32 0.0, %v828
      %v830 = vpop.f32.mrf.mxu0
      %v831 = vadd.f32 0.0, %v830
      %832 = vmatmul.bf16.gmra.mxu0 %v762
      %v833 = vpop.f32.mrf.mxu0
      %v834 = vadd.f32 0.0, %v833
      %v835 = vpop.f32.mrf.mxu0
      %v836 = vadd.f32 0.0, %v835
      %837 = vmatmul.bf16.gmra.mxu0 %v765
      %v838 = vpop.f32.mrf.mxu0
      %v839 = vadd.f32 0.0, %v838
      %v840 = vpop.f32.mrf.mxu0
      %v841 = vadd.f32 0.0, %v840
      %842 = vmatmul.bf16.gmra.mxu0 %v768
      %v843 = vpop.f32.mrf.mxu0
      %v844 = vadd.f32 0.0, %v843
      %v845 = vpop.f32.mrf.mxu0
      %v846 = vadd.f32 0.0, %v845
      %847 = vmatmul.bf16.gmra.mxu0 %v771
      %v848 = vpop.f32.mrf.mxu0
      %v849 = vadd.f32 0.0, %v848
      %v850 = vpop.f32.mrf.mxu0
      %v851 = vadd.f32 0.0, %v850
      %852 = vmatmul.bf16.gmra.mxu0 %v774
      %v853 = vpop.f32.mrf.mxu0
      %v854 = vadd.f32 0.0, %v853
      %v855 = vpop.f32.mrf.mxu0
      %v856 = vadd.f32 0.0, %v855
      %857 = vmatmul.bf16.gmra.mxu0 %v777
      %v858 = vpop.f32.mrf.mxu0
      %v859 = vadd.f32 0.0, %v858
      %v860 = vpop.f32.mrf.mxu0
      %v861 = vadd.f32 0.0, %v860
      %862 = vmatmul.bf16.gmra.mxu0 %v780
      %v863 = vpop.f32.mrf.mxu0
      %v864 = vadd.f32 0.0, %v863
      %v865 = vpop.f32.mrf.mxu0
      %v866 = vadd.f32 0.0, %v865
      %867 = vmatmul.bf16.gmra.mxu0 %v783
      %v868 = vpop.f32.mrf.mxu0
      %v869 = vadd.f32 0.0, %v868
      %v870 = vpop.f32.mrf.mxu0
      %v871 = vadd.f32 0.0, %v870
      %872 = vmatmul.bf16.gmra.mxu0 %v786
      %v873 = vpop.f32.mrf.mxu0
      %v874 = vadd.f32 0.0, %v873
      %v875 = vpop.f32.mrf.mxu0
      %v876 = vadd.f32 0.0, %v875
      %877 = vmatmul.bf16.gmra.mxu0 %v789
      %v878 = vpop.f32.mrf.mxu0
      %v879 = vadd.f32 0.0, %v878
      %v880 = vpop.f32.mrf.mxu0
      %v881 = vadd.f32 0.0, %v880
      %882 = vmatmul.bf16.gmra.mxu0 %v792
      %v883 = vpop.f32.mrf.mxu0
      %v884 = vadd.f32 0.0, %v883
      %v885 = vpop.f32.mrf.mxu0
      %v886 = vadd.f32 0.0, %v885
      %887 = vdwg.mxu0
      %888 = vmatpush.bf16.msra.mxu0 0
      %889 = vmatpush.bf16.msra.mxu0 0
      %890 = vmatpush.bf16.msra.mxu0 0
      %891 = vmatpush.bf16.msra.mxu0 0
      %892 = vmatpush.bf16.msra.mxu0 0
      %893 = vmatpush.bf16.msra.mxu0 0
      %894 = vmatpush.bf16.msra.mxu0 0
      %895 = vmatpush.bf16.msra.mxu0 %v797
      %896 = vmatmul.bf16.gmra.mxu0 %v747
      %v897 = vpop.f32.mrf.mxu0
      %v898 = vadd.f32 0.0, %v897
      %v899 = vpop.f32.mrf.mxu0
      %v900 = vadd.f32 0.0, %v899
      %901 = vmatmul.bf16.gmra.mxu0 %v750
      %v902 = vpop.f32.mrf.mxu0
      %v903 = vadd.f32 0.0, %v902
      %v904 = vpop.f32.mrf.mxu0
      %v905 = vadd.f32 0.0, %v904
      %906 = vmatmul.bf16.gmra.mxu0 %v753
      %v907 = vpop.f32.mrf.mxu0
      %v908 = vadd.f32 0.0, %v907
      %v909 = vpop.f32.mrf.mxu0
      %v910 = vadd.f32 0.0, %v909
      %911 = vmatmul.bf16.gmra.mxu0 %v756
      %v912 = vpop.f32.mrf.mxu0
      %v913 = vadd.f32 0.0, %v912
      %v914 = vpop.f32.mrf.mxu0
      %v915 = vadd.f32 0.0, %v914
      %916 = vmatmul.bf16.gmra.mxu0 %v759
      %v917 = vpop.f32.mrf.mxu0
      %v918 = vadd.f32 0.0, %v917
      %v919 = vpop.f32.mrf.mxu0
      %v920 = vadd.f32 0.0, %v919
      %921 = vmatmul.bf16.gmra.mxu0 %v762
      %v922 = vpop.f32.mrf.mxu0
      %v923 = vadd.f32 0.0, %v922
      %v924 = vpop.f32.mrf.mxu0
      %v925 = vadd.f32 0.0, %v924
      %926 = vmatmul.bf16.gmra.mxu0 %v765
      %v927 = vpop.f32.mrf.mxu0
      %v928 = vadd.f32 0.0, %v927
      %v929 = vpop.f32.mrf.mxu0
      %v930 = vadd.f32 0.0, %v929
      %931 = vmatmul.bf16.gmra.mxu0 %v768
      %v932 = vpop.f32.mrf.mxu0
      %v933 = vadd.f32 0.0, %v932
      %v934 = vpop.f32.mrf.mxu0
      %v935 = vadd.f32 0.0, %v934
      %936 = vmatmul.bf16.gmra.mxu0 %v771
      %v937 = vpop.f32.mrf.mxu0
      %v938 = vadd.f32 0.0, %v937
      %v939 = vpop.f32.mrf.mxu0
      %v940 = vadd.f32 0.0, %v939
      %941 = vmatmul.bf16.gmra.mxu0 %v774
      %v942 = vpop.f32.mrf.mxu0
      %v943 = vadd.f32 0.0, %v942
      %v944 = vpop.f32.mrf.mxu0
      %v945 = vadd.f32 0.0, %v944
      %946 = vmatmul.bf16.gmra.mxu0 %v777
      %v947 = vpop.f32.mrf.mxu0
      %v948 = vadd.f32 0.0, %v947
      %v949 = vpop.f32.mrf.mxu0
      %v950 = vadd.f32 0.0, %v949
      %951 = vmatmul.bf16.gmra.mxu0 %v780
      %v952 = vpop.f32.mrf.mxu0
      %v953 = vadd.f32 0.0, %v952
      %v954 = vpop.f32.mrf.mxu0
      %v955 = vadd.f32 0.0, %v954
      %956 = vmatmul.bf16.gmra.mxu0 %v783
      %v957 = vpop.f32.mrf.mxu0
      %v958 = vadd.f32 0.0, %v957
      %v959 = vpop.f32.mrf.mxu0
      %v960 = vadd.f32 0.0, %v959
      %961 = vmatmul.bf16.gmra.mxu0 %v786
      %v962 = vpop.f32.mrf.mxu0
      %v963 = vadd.f32 0.0, %v962
      %v964 = vpop.f32.mrf.mxu0
      %v965 = vadd.f32 0.0, %v964
      %966 = vmatmul.bf16.gmra.mxu0 %v789
      %v967 = vpop.f32.mrf.mxu0
      %v968 = vadd.f32 0.0, %v967
      %v969 = vpop.f32.mrf.mxu0
      %v970 = vadd.f32 0.0, %v969
      %971 = vmatmul.bf16.gmra.mxu0 %v792
      %v972 = vpop.f32.mrf.mxu0
      %v973 = vadd.f32 0.0, %v972
      %v974 = vpop.f32.mrf.mxu0
      %v975 = vadd.f32 0.0, %v974
      %976 = vdwg.mxu0
      %v1009 = vunpack.c.l.b16 %v255
      %v1010 = vunpack.c.l.b16 %v256
      %v1011 = vunpack.c.l.b16 %v257
      %v1012 = vunpack.c.l.b16 %v258
      %v1013 = vunpack.c.l.b16 %v259
      %v1014 = vunpack.c.l.b16 %v260
      %v1015 = vunpack.c.l.b16 %v261
      %v1016 = vunpack.c.l.b16 %v262
      %v1017 = vunpack.c.l.b16 %v263
      %v1018 = vunpack.c.l.b16 %v264
      %v1019 = vunpack.c.l.b16 %v265
      %v1020 = vunpack.c.l.b16 %v266
      %v1021 = vunpack.c.l.b16 %v267
      %v1022 = vunpack.c.l.b16 %v268
      %v1023 = vunpack.c.l.b16 %v269
      %v1024 = vunpack.c.l.b16 %v270
      %v1025 = vunpack.c.l.b16 %v271
      %v1026 = vunpack.c.l.b16 %v272
      %v1027 = vunpack.c.l.b16 %v273
      %v1028 = vunpack.c.l.b16 %v274
      %v1029 = vunpack.c.l.b16 %v275
      %v1030 = vunpack.c.l.b16 %v276
      %v1031 = vunpack.c.l.b16 %v277
      %v1032 = vunpack.c.l.b16 %v278
      %v1033 = vunpack.c.l.b16 %v279
      %v1034 = vunpack.c.l.b16 %v280
      %v1035 = vunpack.c.l.b16 %v281
      %v1036 = vunpack.c.l.b16 %v282
      %v1037 = vunpack.c.l.b16 %v283
      %v1038 = vunpack.c.l.b16 %v284
      %v1039 = vunpack.c.l.b16 %v285
      %v1040 = vunpack.c.l.b16 %v286
      %v1041 = vpack.c.b16 %v1010, %v1009
      %v1042 = vpack.c.b16 %v1012, %v1011
      %v1043 = vpack.c.b16 %v1014, %v1013
      %v1044 = vpack.c.b16 %v1016, %v1015
      %v1045 = vpack.c.b16 %v1018, %v1017
      %v1046 = vpack.c.b16 %v1020, %v1019
      %v1047 = vpack.c.b16 %v1022, %v1021
      %v1048 = vpack.c.b16 %v1024, %v1023
      %v1049 = vpack.c.b16 %v1026, %v1025
      %v1050 = vpack.c.b16 %v1028, %v1027
      %v1051 = vpack.c.b16 %v1030, %v1029
      %v1052 = vpack.c.b16 %v1032, %v1031
      %v1053 = vpack.c.b16 %v1034, %v1033
      %v1054 = vpack.c.b16 %v1036, %v1035
      %v1055 = vpack.c.b16 %v1038, %v1037
      %v1056 = vpack.c.b16 %v1040, %v1039
      %1058 = vst [vmem:[#allocation1] ss:$4 sm:$0xff] %v287
      %v1059 = vld.sshfl [vmem:[#allocation1] sm:$0xff pattern:$0x73625140]
      %v1060 = vld.sshfl [vmem:[#allocation1 + $0x8] sm:$0xff pattern:$0x73625140]
      %v1062 = vsel %vm745, %v1041, 0
      %v1065 = vsel %vm745, %v1042, 0
      %v1068 = vsel %vm745, %v1043, 0
      %v1071 = vsel %vm745, %v1044, 0
      %v1074 = vsel %vm745, %v1045, 0
      %v1077 = vsel %vm745, %v1046, 0
      %v1080 = vsel %vm745, %v1047, 0
      %v1083 = vsel %vm745, %v1048, 0
      %v1086 = vsel %vm745, %v1049, 0
      %v1089 = vsel %vm745, %v1050, 0
      %v1092 = vsel %vm745, %v1051, 0
      %v1095 = vsel %vm745, %v1052, 0
      %v1098 = vsel %vm745, %v1053, 0
      %v1101 = vsel %vm745, %v1054, 0
      %v1104 = vsel %vm745, %v1055, 0
      %v1107 = vsel %vm745, %v1056, 0
      %v1109 = vsel %vm794, %v1059, 0
      %v1111 = vsel %vm794, %v1060, 0
      %1113 = vmatpush.bf16.msra.mxu0 0
      %1114 = vmatpush.bf16.msra.mxu0 0
      %1115 = vmatpush.bf16.msra.mxu0 0
      %1116 = vmatpush.bf16.msra.mxu0 0
      %1117 = vmatpush.bf16.msra.mxu0 0
      %1118 = vmatpush.bf16.msra.mxu0 0
      %1119 = vmatpush.bf16.msra.mxu0 0
      %1120 = vmatpush.bf16.msra.mxu0 %v1109
      %1121 = vmatmul.bf16.gmra.mxu0 %v1062
      %v1122 = vpop.f32.mrf.mxu0
      %v1123 = vadd.f32 %v809, %v1122
      %v1124 = vpop.f32.mrf.mxu0
      %v1125 = vadd.f32 %v811, %v1124
      %1126 = vmatmul.bf16.gmra.mxu0 %v1065
      %v1127 = vpop.f32.mrf.mxu0
      %v1128 = vadd.f32 %v814, %v1127
      %v1129 = vpop.f32.mrf.mxu0
      %v1130 = vadd.f32 %v816, %v1129
      %1131 = vmatmul.bf16.gmra.mxu0 %v1068
      %v1132 = vpop.f32.mrf.mxu0
      %v1133 = vadd.f32 %v819, %v1132
      %v1134 = vpop.f32.mrf.mxu0
      %v1135 = vadd.f32 %v821, %v1134
      %1136 = vmatmul.bf16.gmra.mxu0 %v1071
      %v1137 = vpop.f32.mrf.mxu0
      %v1138 = vadd.f32 %v824, %v1137
      %v1139 = vpop.f32.mrf.mxu0
      %v1140 = vadd.f32 %v826, %v1139
      %1141 = vmatmul.bf16.gmra.mxu0 %v1074
      %v1142 = vpop.f32.mrf.mxu0
      %v1143 = vadd.f32 %v829, %v1142
      %v1144 = vpop.f32.mrf.mxu0
      %v1145 = vadd.f32 %v831, %v1144
      %1146 = vmatmul.bf16.gmra.mxu0 %v1077
      %v1147 = vpop.f32.mrf.mxu0
      %v1148 = vadd.f32 %v834, %v1147
      %v1149 = vpop.f32.mrf.mxu0
      %v1150 = vadd.f32 %v836, %v1149
      %1151 = vmatmul.bf16.gmra.mxu0 %v1080
      %v1152 = vpop.f32.mrf.mxu0
      %v1153 = vadd.f32 %v839, %v1152
      %v1154 = vpop.f32.mrf.mxu0
      %v1155 = vadd.f32 %v841, %v1154
      %1156 = vmatmul.bf16.gmra.mxu0 %v1083
      %v1157 = vpop.f32.mrf.mxu0
      %v1158 = vadd.f32 %v844, %v1157
      %v1159 = vpop.f32.mrf.mxu0
      %v1160 = vadd.f32 %v846, %v1159
      %1161 = vmatmul.bf16.gmra.mxu0 %v1086
      %v1162 = vpop.f32.mrf.mxu0
      %v1163 = vadd.f32 %v849, %v1162
      %v1164 = vpop.f32.mrf.mxu0
      %v1165 = vadd.f32 %v851, %v1164
      %1166 = vmatmul.bf16.gmra.mxu0 %v1089
      %v1167 = vpop.f32.mrf.mxu0
      %v1168 = vadd.f32 %v854, %v1167
      %v1169 = vpop.f32.mrf.mxu0
      %v1170 = vadd.f32 %v856, %v1169
      %1171 = vmatmul.bf16.gmra.mxu0 %v1092
      %v1172 = vpop.f32.mrf.mxu0
      %v1173 = vadd.f32 %v859, %v1172
      %v1174 = vpop.f32.mrf.mxu0
      %v1175 = vadd.f32 %v861, %v1174
      %1176 = vmatmul.bf16.gmra.mxu0 %v1095
      %v1177 = vpop.f32.mrf.mxu0
      %v1178 = vadd.f32 %v864, %v1177
      %v1179 = vpop.f32.mrf.mxu0
      %v1180 = vadd.f32 %v866, %v1179
      %1181 = vmatmul.bf16.gmra.mxu0 %v1098
      %v1182 = vpop.f32.mrf.mxu0
      %v1183 = vadd.f32 %v869, %v1182
      %v1184 = vpop.f32.mrf.mxu0
      %v1185 = vadd.f32 %v871, %v1184
      %1186 = vmatmul.bf16.gmra.mxu0 %v1101
      %v1187 = vpop.f32.mrf.mxu0
      %v1188 = vadd.f32 %v874, %v1187
      %v1189 = vpop.f32.mrf.mxu0
      %v1190 = vadd.f32 %v876, %v1189
      %1191 = vmatmul.bf16.gmra.mxu0 %v1104
      %v1192 = vpop.f32.mrf.mxu0
      %v1193 = vadd.f32 %v879, %v1192
      %v1194 = vpop.f32.mrf.mxu0
      %v1195 = vadd.f32 %v881, %v1194
      %1196 = vmatmul.bf16.gmra.mxu0 %v1107
      %v1197 = vpop.f32.mrf.mxu0
      %v1198 = vadd.f32 %v884, %v1197
      %v1199 = vpop.f32.mrf.mxu0
      %v1200 = vadd.f32 %v886, %v1199
      %1201 = vdwg.mxu0
      %1202 = vmatpush.bf16.msra.mxu0 0
      %1203 = vmatpush.bf16.msra.mxu0 0
      %1204 = vmatpush.bf16.msra.mxu0 0
      %1205 = vmatpush.bf16.msra.mxu0 0
      %1206 = vmatpush.bf16.msra.mxu0 0
      %1207 = vmatpush.bf16.msra.mxu0 0
      %1208 = vmatpush.bf16.msra.mxu0 0
      %1209 = vmatpush.bf16.msra.mxu0 %v1111
      %1210 = vmatmul.bf16.gmra.mxu0 %v1062
      %v1211 = vpop.f32.mrf.mxu0
      %v1212 = vadd.f32 %v898, %v1211
      %v1213 = vpop.f32.mrf.mxu0
      %v1214 = vadd.f32 %v900, %v1213
      %1215 = vmatmul.bf16.gmra.mxu0 %v1065
      %v1216 = vpop.f32.mrf.mxu0
      %v1217 = vadd.f32 %v903, %v1216
      %v1218 = vpop.f32.mrf.mxu0
      %v1219 = vadd.f32 %v905, %v1218
      %1220 = vmatmul.bf16.gmra.mxu0 %v1068
      %v1221 = vpop.f32.mrf.mxu0
      %v1222 = vadd.f32 %v908, %v1221
      %v1223 = vpop.f32.mrf.mxu0
      %v1224 = vadd.f32 %v910, %v1223
      %1225 = vmatmul.bf16.gmra.mxu0 %v1071
      %v1226 = vpop.f32.mrf.mxu0
      %v1227 = vadd.f32 %v913, %v1226
      %v1228 = vpop.f32.mrf.mxu0
      %v1229 = vadd.f32 %v915, %v1228
      %1230 = vmatmul.bf16.gmra.mxu0 %v1074
      %v1231 = vpop.f32.mrf.mxu0
      %v1232 = vadd.f32 %v918, %v1231
      %v1233 = vpop.f32.mrf.mxu0
      %v1234 = vadd.f32 %v920, %v1233
      %1235 = vmatmul.bf16.gmra.mxu0 %v1077
      %v1236 = vpop.f32.mrf.mxu0
      %v1237 = vadd.f32 %v923, %v1236
      %v1238 = vpop.f32.mrf.mxu0
      %v1239 = vadd.f32 %v925, %v1238
      %1240 = vmatmul.bf16.gmra.mxu0 %v1080
      %v1241 = vpop.f32.mrf.mxu0
      %v1242 = vadd.f32 %v928, %v1241
      %v1243 = vpop.f32.mrf.mxu0
      %v1244 = vadd.f32 %v930, %v1243
      %1245 = vmatmul.bf16.gmra.mxu0 %v1083
      %v1246 = vpop.f32.mrf.mxu0
      %v1247 = vadd.f32 %v933, %v1246
      %v1248 = vpop.f32.mrf.mxu0
      %v1249 = vadd.f32 %v935, %v1248
      %1250 = vmatmul.bf16.gmra.mxu0 %v1086
      %v1251 = vpop.f32.mrf.mxu0
      %v1252 = vadd.f32 %v938, %v1251
      %v1253 = vpop.f32.mrf.mxu0
      %v1254 = vadd.f32 %v940, %v1253
      %1255 = vmatmul.bf16.gmra.mxu0 %v1089
      %v1256 = vpop.f32.mrf.mxu0
      %v1257 = vadd.f32 %v943, %v1256
      %v1258 = vpop.f32.mrf.mxu0
      %v1259 = vadd.f32 %v945, %v1258
      %1260 = vmatmul.bf16.gmra.mxu0 %v1092
      %v1261 = vpop.f32.mrf.mxu0
      %v1262 = vadd.f32 %v948, %v1261
      %v1263 = vpop.f32.mrf.mxu0
      %v1264 = vadd.f32 %v950, %v1263
      %1265 = vmatmul.bf16.gmra.mxu0 %v1095
      %v1266 = vpop.f32.mrf.mxu0
      %v1267 = vadd.f32 %v953, %v1266
      %v1268 = vpop.f32.mrf.mxu0
      %v1269 = vadd.f32 %v955, %v1268
      %1270 = vmatmul.bf16.gmra.mxu0 %v1098
      %v1271 = vpop.f32.mrf.mxu0
      %v1272 = vadd.f32 %v958, %v1271
      %v1273 = vpop.f32.mrf.mxu0
      %v1274 = vadd.f32 %v960, %v1273
      %1275 = vmatmul.bf16.gmra.mxu0 %v1101
      %v1276 = vpop.f32.mrf.mxu0
      %v1277 = vadd.f32 %v963, %v1276
      %v1278 = vpop.f32.mrf.mxu0
      %v1279 = vadd.f32 %v965, %v1278
      %1280 = vmatmul.bf16.gmra.mxu0 %v1104
      %v1281 = vpop.f32.mrf.mxu0
      %v1282 = vadd.f32 %v968, %v1281
      %v1283 = vpop.f32.mrf.mxu0
      %v1284 = vadd.f32 %v970, %v1283
      %1285 = vmatmul.bf16.gmra.mxu0 %v1107
      %v1286 = vpop.f32.mrf.mxu0
      %v1287 = vadd.f32 %v973, %v1286
      %v1288 = vpop.f32.mrf.mxu0
      %v1289 = vadd.f32 %v975, %v1288
      %1290 = vdwg.mxu0
      %v1291 = vld [vmem:[%s254] sm:$0xe]
      %v1292 = vld [vmem:[%s254 + $0x4] sm:$0xf]
      %v1293 = vld [vmem:[%s254 + $0x8] sm:$0x1]
      %v1294 = vld [vmem:[%s254 + $0xc] sm:$0xe]
      %v1295 = vld [vmem:[%s254 + $0x10] sm:$0xf]
      %v1296 = vld [vmem:[%s254 + $0x14] sm:$0x1]
      %v1297 = vld [vmem:[%s254 + $0x18] sm:$0xe]
      %v1298 = vld [vmem:[%s254 + $0x1c] sm:$0xf]
      %v1299 = vld [vmem:[%s254 + $0x20] sm:$0x1]
      %v1300 = vld [vmem:[%s254 + $0x24] sm:$0xe]
      %v1301 = vld [vmem:[%s254 + $0x28] sm:$0xf]
      %v1302 = vld [vmem:[%s254 + $0x2c] sm:$0x1]
      %v1303 = vld [vmem:[%s254 + $0x30] sm:$0xe]
      %v1304 = vld [vmem:[%s254 + $0x34] sm:$0xf]
      %v1305 = vld [vmem:[%s254 + $0x38] sm:$0x1]
      %v1306 = vld [vmem:[%s254 + $0x3c] sm:$0xe]
      %v1307 = vld [vmem:[%s254 + $0x40] sm:$0xf]
      %v1308 = vld [vmem:[%s254 + $0x44] sm:$0x1]
      %v1309 = vld [vmem:[%s254 + $0x48] sm:$0xe]
      %v1310 = vld [vmem:[%s254 + $0x4c] sm:$0xf]
      %v1311 = vld [vmem:[%s254 + $0x50] sm:$0x1]
      %v1312 = vld [vmem:[%s254 + $0x54] sm:$0xe]
      %v1313 = vld [vmem:[%s254 + $0x58] sm:$0xf]
      %v1314 = vld [vmem:[%s254 + $0x5c] sm:$0x1]
      %v1315 = vld [vmem:[%s254 + $0x60] sm:$0xe]
      %v1316 = vld [vmem:[%s254 + $0x64] sm:$0xf]
      %v1317 = vld [vmem:[%s254 + $0x68] sm:$0x1]
      %v1318 = vld [vmem:[%s254 + $0x6c] sm:$0xe]
      %v1319 = vld [vmem:[%s254 + $0x70] sm:$0xf]
      %v1320 = vld [vmem:[%s254 + $0x74] sm:$0x1]
      %v1321 = vld [vmem:[%s254 + $0x78] sm:$0xe]
      %v1322 = vld [vmem:[%s254 + $0x7c] sm:$0xf]
      %v1323 = vld [vmem:[%s254 + $0x80] sm:$0x1]
      %v1324 = vld [vmem:[%s254 + $0x84] sm:$0xe]
      %v1325 = vld [vmem:[%s254 + $0x88] sm:$0xf]
      %v1326 = vld [vmem:[%s254 + $0x8c] sm:$0x1]
      %v1327 = vld [vmem:[%s254 + $0x90] sm:$0xe]
      %v1328 = vld [vmem:[%s254 + $0x94] sm:$0xf]
      %v1329 = vld [vmem:[%s254 + $0x98] sm:$0x1]
      %v1330 = vld [vmem:[%s254 + $0x9c] sm:$0xe]
      %v1331 = vld [vmem:[%s254 + $0xa0] sm:$0xf]
      %v1332 = vld [vmem:[%s254 + $0xa4] sm:$0x1]
      %v1333 = vld [vmem:[%s254 + $0xa8] sm:$0xe]
      %v1334 = vld [vmem:[%s254 + $0xac] sm:$0xf]
      %v1335 = vld [vmem:[%s254 + $0xb0] sm:$0x1]
      %v1336 = vld [vmem:[%s254 + $0xb4] sm:$0xe]
      %v1337 = vld [vmem:[%s254 + $0xb8] sm:$0xf]
      %v1338 = vld [vmem:[%s254 + $0xbc] sm:$0x1]
      %vm1387 = vcmask 1042432
      %vm1388 = vcmask 1046532
      %vm1389 = vmor %vm1387, %vm1388
      %v1390 = vrot.slane %v1291, 5
      %v1391 = vrot.slane %v1390, 4
      %v1392 = vrot.slane %v1292, 5
      %v1393 = vsel %vm1389, %v1391, %v1392
      %v1394 = vrot.slane %v1392, 4
      %v1395 = vrot.slane %v1293, 5
      %v1396 = vsel %vm1389, %v1394, %v1395
      %v1397 = vrot.slane %v1294, 5
      %v1398 = vrot.slane %v1397, 4
      %v1399 = vrot.slane %v1295, 5
      %v1400 = vsel %vm1389, %v1398, %v1399
      %v1401 = vrot.slane %v1399, 4
      %v1402 = vrot.slane %v1296, 5
      %v1403 = vsel %vm1389, %v1401, %v1402
      %v1404 = vrot.slane %v1297, 5
      %v1405 = vrot.slane %v1404, 4
      %v1406 = vrot.slane %v1298, 5
      %v1407 = vsel %vm1389, %v1405, %v1406
      %v1408 = vrot.slane %v1406, 4
      %v1409 = vrot.slane %v1299, 5
      %v1410 = vsel %vm1389, %v1408, %v1409
      %v1411 = vrot.slane %v1300, 5
      %v1412 = vrot.slane %v1411, 4
      %v1413 = vrot.slane %v1301, 5
      %v1414 = vsel %vm1389, %v1412, %v1413
      %v1415 = vrot.slane %v1413, 4
      %v1416 = vrot.slane %v1302, 5
      %v1417 = vsel %vm1389, %v1415, %v1416
      %v1418 = vrot.slane %v1303, 5
      %v1419 = vrot.slane %v1418, 4
      %v1420 = vrot.slane %v1304, 5
      %v1421 = vsel %vm1389, %v1419, %v1420
      %v1422 = vrot.slane %v1420, 4
      %v1423 = vrot.slane %v1305, 5
      %v1424 = vsel %vm1389, %v1422, %v1423
      %v1425 = vrot.slane %v1306, 5
      %v1426 = vrot.slane %v1425, 4
      %v1427 = vrot.slane %v1307, 5
      %v1428 = vsel %vm1389, %v1426, %v1427
      %v1429 = vrot.slane %v1427, 4
      %v1430 = vrot.slane %v1308, 5
      %v1431 = vsel %vm1389, %v1429, %v1430
      %v1432 = vrot.slane %v1309, 5
      %v1433 = vrot.slane %v1432, 4
      %v1434 = vrot.slane %v1310, 5
      %v1435 = vsel %vm1389, %v1433, %v1434
      %v1436 = vrot.slane %v1434, 4
      %v1437 = vrot.slane %v1311, 5
      %v1438 = vsel %vm1389, %v1436, %v1437
      %v1439 = vrot.slane %v1312, 5
      %v1440 = vrot.slane %v1439, 4
      %v1441 = vrot.slane %v1313, 5
      %v1442 = vsel %vm1389, %v1440, %v1441
      %v1443 = vrot.slane %v1441, 4
      %v1444 = vrot.slane %v1314, 5
      %v1445 = vsel %vm1389, %v1443, %v1444
      %v1446 = vrot.slane %v1315, 5
      %v1447 = vrot.slane %v1446, 4
      %v1448 = vrot.slane %v1316, 5
      %v1449 = vsel %vm1389, %v1447, %v1448
      %v1450 = vrot.slane %v1448, 4
      %v1451 = vrot.slane %v1317, 5
      %v1452 = vsel %vm1389, %v1450, %v1451
      %v1453 = vrot.slane %v1318, 5
      %v1454 = vrot.slane %v1453, 4
      %v1455 = vrot.slane %v1319, 5
      %v1456 = vsel %vm1389, %v1454, %v1455
      %v1457 = vrot.slane %v1455, 4
      %v1458 = vrot.slane %v1320, 5
      %v1459 = vsel %vm1389, %v1457, %v1458
      %v1460 = vrot.slane %v1321, 5
      %v1461 = vrot.slane %v1460, 4
      %v1462 = vrot.slane %v1322, 5
      %v1463 = vsel %vm1389, %v1461, %v1462
      %v1464 = vrot.slane %v1462, 4
      %v1465 = vrot.slane %v1323, 5
      %v1466 = vsel %vm1389, %v1464, %v1465
      %v1467 = vrot.slane %v1324, 5
      %v1468 = vrot.slane %v1467, 4
      %v1469 = vrot.slane %v1325, 5
      %v1470 = vsel %vm1389, %v1468, %v1469
      %v1471 = vrot.slane %v1469, 4
      %v1472 = vrot.slane %v1326, 5
      %v1473 = vsel %vm1389, %v1471, %v1472
      %v1474 = vrot.slane %v1327, 5
      %v1475 = vrot.slane %v1474, 4
      %v1476 = vrot.slane %v1328, 5
      %v1477 = vsel %vm1389, %v1475, %v1476
      %v1478 = vrot.slane %v1476, 4
      %v1479 = vrot.slane %v1329, 5
      %v1480 = vsel %vm1389, %v1478, %v1479
      %v1481 = vrot.slane %v1330, 5
      %v1482 = vrot.slane %v1481, 4
      %v1483 = vrot.slane %v1331, 5
      %v1484 = vsel %vm1389, %v1482, %v1483
      %v1485 = vrot.slane %v1483, 4
      %v1486 = vrot.slane %v1332, 5
      %v1487 = vsel %vm1389, %v1485, %v1486
      %v1488 = vrot.slane %v1333, 5
      %v1489 = vrot.slane %v1488, 4
      %v1490 = vrot.slane %v1334, 5
      %v1491 = vsel %vm1389, %v1489, %v1490
      %v1492 = vrot.slane %v1490, 4
      %v1493 = vrot.slane %v1335, 5
      %v1494 = vsel %vm1389, %v1492, %v1493
      %v1495 = vrot.slane %v1336, 5
      %v1496 = vrot.slane %v1495, 4
      %v1497 = vrot.slane %v1337, 5
      %v1498 = vsel %vm1389, %v1496, %v1497
      %v1499 = vrot.slane %v1497, 4
      %v1500 = vrot.slane %v1338, 5
      %v1501 = vsel %vm1389, %v1499, %v1500
      %s1502 = scalar_lea.vmem %s1, 8
      %v1503 = vld [vmem:[%s1502] sm:$0xf]
      %v1504 = vunpack.c.l.b16 %v1393
      %v1505 = vunpack.c.l.b16 %v1396
      %v1506 = vunpack.c.l.b16 %v1400
      %v1507 = vunpack.c.l.b16 %v1403
      %v1508 = vunpack.c.l.b16 %v1407
      %v1509 = vunpack.c.l.b16 %v1410
      %v1510 = vunpack.c.l.b16 %v1414
      %v1511 = vunpack.c.l.b16 %v1417
      %v1512 = vunpack.c.l.b16 %v1421
      %v1513 = vunpack.c.l.b16 %v1424
      %v1514 = vunpack.c.l.b16 %v1428
      %v1515 = vunpack.c.l.b16 %v1431
      %v1516 = vunpack.c.l.b16 %v1435
      %v1517 = vunpack.c.l.b16 %v1438
      %v1518 = vunpack.c.l.b16 %v1442
      %v1519 = vunpack.c.l.b16 %v1445
      %v1520 = vunpack.c.l.b16 %v1449
      %v1521 = vunpack.c.l.b16 %v1452
      %v1522 = vunpack.c.l.b16 %v1456
      %v1523 = vunpack.c.l.b16 %v1459
      %v1524 = vunpack.c.l.b16 %v1463
      %v1525 = vunpack.c.l.b16 %v1466
      %v1526 = vunpack.c.l.b16 %v1470
      %v1527 = vunpack.c.l.b16 %v1473
      %v1528 = vunpack.c.l.b16 %v1477
      %v1529 = vunpack.c.l.b16 %v1480
      %v1530 = vunpack.c.l.b16 %v1484
      %v1531 = vunpack.c.l.b16 %v1487
      %v1532 = vunpack.c.l.b16 %v1491
      %v1533 = vunpack.c.l.b16 %v1494
      %v1534 = vunpack.c.l.b16 %v1498
      %v1535 = vunpack.c.l.b16 %v1501
      %v1536 = vpack.c.b16 %v1505, %v1504
      %v1537 = vpack.c.b16 %v1507, %v1506
      %v1538 = vpack.c.b16 %v1509, %v1508
      %v1539 = vpack.c.b16 %v1511, %v1510
      %v1540 = vpack.c.b16 %v1513, %v1512
      %v1541 = vpack.c.b16 %v1515, %v1514
      %v1542 = vpack.c.b16 %v1517, %v1516
      %v1543 = vpack.c.b16 %v1519, %v1518
      %v1544 = vpack.c.b16 %v1521, %v1520
      %v1545 = vpack.c.b16 %v1523, %v1522
      %v1546 = vpack.c.b16 %v1525, %v1524
      %v1547 = vpack.c.b16 %v1527, %v1526
      %v1548 = vpack.c.b16 %v1529, %v1528
      %v1549 = vpack.c.b16 %v1531, %v1530
      %v1550 = vpack.c.b16 %v1533, %v1532
      %v1551 = vpack.c.b16 %v1535, %v1534
      %1553 = vst [vmem:[#allocation1] ss:$4 sm:$0xff] %v1503
      %v1554 = vld.sshfl [vmem:[#allocation1] sm:$0xff pattern:$0x73625140]
      %v1555 = vld.sshfl [vmem:[#allocation1 + $0x8] sm:$0xff pattern:$0x73625140]
      %v1557 = vsel %vm745, %v1536, 0
      %v1560 = vsel %vm745, %v1537, 0
      %v1563 = vsel %vm745, %v1538, 0
      %v1566 = vsel %vm745, %v1539, 0
      %v1569 = vsel %vm745, %v1540, 0
      %v1572 = vsel %vm745, %v1541, 0
      %v1575 = vsel %vm745, %v1542, 0
      %v1578 = vsel %vm745, %v1543, 0
      %v1581 = vsel %vm745, %v1544, 0
      %v1584 = vsel %vm745, %v1545, 0
      %v1587 = vsel %vm745, %v1546, 0
      %v1590 = vsel %vm745, %v1547, 0
      %v1593 = vsel %vm745, %v1548, 0
      %v1596 = vsel %vm745, %v1549, 0
      %v1599 = vsel %vm745, %v1550, 0
      %v1602 = vsel %vm745, %v1551, 0
      %v1604 = vsel %vm794, %v1554, 0
      %v1606 = vsel %vm794, %v1555, 0
      %1608 = vmatpush.bf16.msra.mxu0 0
      %1609 = vmatpush.bf16.msra.mxu0 0
      %1610 = vmatpush.bf16.msra.mxu0 0
      %1611 = vmatpush.bf16.msra.mxu0 0
      %1612 = vmatpush.bf16.msra.mxu0 0
      %1613 = vmatpush.bf16.msra.mxu0 0
      %1614 = vmatpush.bf16.msra.mxu0 0
      %1615 = vmatpush.bf16.msra.mxu0 %v1604
      %1616 = vmatmul.bf16.gmra.mxu0 %v1557
      %v1617 = vpop.f32.mrf.mxu0
      %v1618 = vadd.f32 0.0, %v1617
      %v1619 = vpop.f32.mrf.mxu0
      %v1620 = vadd.f32 0.0, %v1619
      %1621 = vmatmul.bf16.gmra.mxu0 %v1560
      %v1622 = vpop.f32.mrf.mxu0
      %v1623 = vadd.f32 0.0, %v1622
      %v1624 = vpop.f32.mrf.mxu0
      %v1625 = vadd.f32 0.0, %v1624
      %1626 = vmatmul.bf16.gmra.mxu0 %v1563
      %v1627 = vpop.f32.mrf.mxu0
      %v1628 = vadd.f32 0.0, %v1627
      %v1629 = vpop.f32.mrf.mxu0
      %v1630 = vadd.f32 0.0, %v1629
      %1631 = vmatmul.bf16.gmra.mxu0 %v1566
      %v1632 = vpop.f32.mrf.mxu0
      %v1633 = vadd.f32 0.0, %v1632
      %v1634 = vpop.f32.mrf.mxu0
      %v1635 = vadd.f32 0.0, %v1634
      %1636 = vmatmul.bf16.gmra.mxu0 %v1569
      %v1637 = vpop.f32.mrf.mxu0
      %v1638 = vadd.f32 0.0, %v1637
      %v1639 = vpop.f32.mrf.mxu0
      %v1640 = vadd.f32 0.0, %v1639
      %1641 = vmatmul.bf16.gmra.mxu0 %v1572
      %v1642 = vpop.f32.mrf.mxu0
      %v1643 = vadd.f32 0.0, %v1642
      %v1644 = vpop.f32.mrf.mxu0
      %v1645 = vadd.f32 0.0, %v1644
      %1646 = vmatmul.bf16.gmra.mxu0 %v1575
      %v1647 = vpop.f32.mrf.mxu0
      %v1648 = vadd.f32 0.0, %v1647
      %v1649 = vpop.f32.mrf.mxu0
      %v1650 = vadd.f32 0.0, %v1649
      %1651 = vmatmul.bf16.gmra.mxu0 %v1578
      %v1652 = vpop.f32.mrf.mxu0
      %v1653 = vadd.f32 0.0, %v1652
      %v1654 = vpop.f32.mrf.mxu0
      %v1655 = vadd.f32 0.0, %v1654
      %1656 = vmatmul.bf16.gmra.mxu0 %v1581
      %v1657 = vpop.f32.mrf.mxu0
      %v1658 = vadd.f32 0.0, %v1657
      %v1659 = vpop.f32.mrf.mxu0
      %v1660 = vadd.f32 0.0, %v1659
      %1661 = vmatmul.bf16.gmra.mxu0 %v1584
      %v1662 = vpop.f32.mrf.mxu0
      %v1663 = vadd.f32 0.0, %v1662
      %v1664 = vpop.f32.mrf.mxu0
      %v1665 = vadd.f32 0.0, %v1664
      %1666 = vmatmul.bf16.gmra.mxu0 %v1587
      %v1667 = vpop.f32.mrf.mxu0
      %v1668 = vadd.f32 0.0, %v1667
      %v1669 = vpop.f32.mrf.mxu0
      %v1670 = vadd.f32 0.0, %v1669
      %1671 = vmatmul.bf16.gmra.mxu0 %v1590
      %v1672 = vpop.f32.mrf.mxu0
      %v1673 = vadd.f32 0.0, %v1672
      %v1674 = vpop.f32.mrf.mxu0
      %v1675 = vadd.f32 0.0, %v1674
      %1676 = vmatmul.bf16.gmra.mxu0 %v1593
      %v1677 = vpop.f32.mrf.mxu0
      %v1678 = vadd.f32 0.0, %v1677
      %v1679 = vpop.f32.mrf.mxu0
      %v1680 = vadd.f32 0.0, %v1679
      %1681 = vmatmul.bf16.gmra.mxu0 %v1596
      %v1682 = vpop.f32.mrf.mxu0
      %v1683 = vadd.f32 0.0, %v1682
      %v1684 = vpop.f32.mrf.mxu0
      %v1685 = vadd.f32 0.0, %v1684
      %1686 = vmatmul.bf16.gmra.mxu0 %v1599
      %v1687 = vpop.f32.mrf.mxu0
      %v1688 = vadd.f32 0.0, %v1687
      %v1689 = vpop.f32.mrf.mxu0
      %v1690 = vadd.f32 0.0, %v1689
      %1691 = vmatmul.bf16.gmra.mxu0 %v1602
      %v1692 = vpop.f32.mrf.mxu0
      %v1693 = vadd.f32 0.0, %v1692
      %v1694 = vpop.f32.mrf.mxu0
      %v1695 = vadd.f32 0.0, %v1694
      %1696 = vdwg.mxu0
      %1697 = vmatpush.bf16.msra.mxu0 0
      %1698 = vmatpush.bf16.msra.mxu0 0
      %1699 = vmatpush.bf16.msra.mxu0 0
      %1700 = vmatpush.bf16.msra.mxu0 0
      %1701 = vmatpush.bf16.msra.mxu0 0
      %1702 = vmatpush.bf16.msra.mxu0 0
      %1703 = vmatpush.bf16.msra.mxu0 0
      %1704 = vmatpush.bf16.msra.mxu0 %v1606
      %1705 = vmatmul.bf16.gmra.mxu0 %v1557
      %v1706 = vpop.f32.mrf.mxu0
      %v1707 = vadd.f32 0.0, %v1706
      %v1708 = vpop.f32.mrf.mxu0
      %v1709 = vadd.f32 0.0, %v1708
      %1710 = vmatmul.bf16.gmra.mxu0 %v1560
      %v1711 = vpop.f32.mrf.mxu0
      %v1712 = vadd.f32 0.0, %v1711
      %v1713 = vpop.f32.mrf.mxu0
      %v1714 = vadd.f32 0.0, %v1713
      %1715 = vmatmul.bf16.gmra.mxu0 %v1563
      %v1716 = vpop.f32.mrf.mxu0
      %v1717 = vadd.f32 0.0, %v1716
      %v1718 = vpop.f32.mrf.mxu0
      %v1719 = vadd.f32 0.0, %v1718
      %1720 = vmatmul.bf16.gmra.mxu0 %v1566
      %v1721 = vpop.f32.mrf.mxu0
      %v1722 = vadd.f32 0.0, %v1721
      %v1723 = vpop.f32.mrf.mxu0
      %v1724 = vadd.f32 0.0, %v1723
      %1725 = vmatmul.bf16.gmra.mxu0 %v1569
      %v1726 = vpop.f32.mrf.mxu0
      %v1727 = vadd.f32 0.0, %v1726
      %v1728 = vpop.f32.mrf.mxu0
      %v1729 = vadd.f32 0.0, %v1728
      %1730 = vmatmul.bf16.gmra.mxu0 %v1572
      %v1731 = vpop.f32.mrf.mxu0
      %v1732 = vadd.f32 0.0, %v1731
      %v1733 = vpop.f32.mrf.mxu0
      %v1734 = vadd.f32 0.0, %v1733
      %1735 = vmatmul.bf16.gmra.mxu0 %v1575
      %v1736 = vpop.f32.mrf.mxu0
      %v1737 = vadd.f32 0.0, %v1736
      %v1738 = vpop.f32.mrf.mxu0
      %v1739 = vadd.f32 0.0, %v1738
      %1740 = vmatmul.bf16.gmra.mxu0 %v1578
      %v1741 = vpop.f32.mrf.mxu0
      %v1742 = vadd.f32 0.0, %v1741
      %v1743 = vpop.f32.mrf.mxu0
      %v1744 = vadd.f32 0.0, %v1743
      %1745 = vmatmul.bf16.gmra.mxu0 %v1581
      %v1746 = vpop.f32.mrf.mxu0
      %v1747 = vadd.f32 0.0, %v1746
      %v1748 = vpop.f32.mrf.mxu0
      %v1749 = vadd.f32 0.0, %v1748
      %1750 = vmatmul.bf16.gmra.mxu0 %v1584
      %v1751 = vpop.f32.mrf.mxu0
      %v1752 = vadd.f32 0.0, %v1751
      %v1753 = vpop.f32.mrf.mxu0
      %v1754 = vadd.f32 0.0, %v1753
      %1755 = vmatmul.bf16.gmra.mxu0 %v1587
      %v1756 = vpop.f32.mrf.mxu0
      %v1757 = vadd.f32 0.0, %v1756
      %v1758 = vpop.f32.mrf.mxu0
      %v1759 = vadd.f32 0.0, %v1758
      %1760 = vmatmul.bf16.gmra.mxu0 %v1590
      %v1761 = vpop.f32.mrf.mxu0
      %v1762 = vadd.f32 0.0, %v1761
      %v1763 = vpop.f32.mrf.mxu0
      %v1764 = vadd.f32 0.0, %v1763
      %1765 = vmatmul.bf16.gmra.mxu0 %v1593
      %v1766 = vpop.f32.mrf.mxu0
      %v1767 = vadd.f32 0.0, %v1766
      %v1768 = vpop.f32.mrf.mxu0
      %v1769 = vadd.f32 0.0, %v1768
      %1770 = vmatmul.bf16.gmra.mxu0 %v1596
      %v1771 = vpop.f32.mrf.mxu0
      %v1772 = vadd.f32 0.0, %v1771
      %v1773 = vpop.f32.mrf.mxu0
      %v1774 = vadd.f32 0.0, %v1773
      %1775 = vmatmul.bf16.gmra.mxu0 %v1599
      %v1776 = vpop.f32.mrf.mxu0
      %v1777 = vadd.f32 0.0, %v1776
      %v1778 = vpop.f32.mrf.mxu0
      %v1779 = vadd.f32 0.0, %v1778
      %1780 = vmatmul.bf16.gmra.mxu0 %v1602
      %v1781 = vpop.f32.mrf.mxu0
      %v1782 = vadd.f32 0.0, %v1781
      %v1783 = vpop.f32.mrf.mxu0
      %v1784 = vadd.f32 0.0, %v1783
      %1785 = vdwg.mxu0
      %v1786 = vadd.f32 %v1123, %v1618
      %v1787 = vadd.f32 %v1212, %v1707
      %v1788 = vadd.f32 %v1125, %v1620
      %v1789 = vadd.f32 %v1214, %v1709
      %v1790 = vadd.f32 %v1128, %v1623
      %v1791 = vadd.f32 %v1217, %v1712
      %v1792 = vadd.f32 %v1130, %v1625
      %v1793 = vadd.f32 %v1219, %v1714
      %v1794 = vadd.f32 %v1133, %v1628
      %v1795 = vadd.f32 %v1222, %v1717
      %v1796 = vadd.f32 %v1135, %v1630
      %v1797 = vadd.f32 %v1224, %v1719
      %v1798 = vadd.f32 %v1138, %v1633
      %v1799 = vadd.f32 %v1227, %v1722
      %v1800 = vadd.f32 %v1140, %v1635
      %v1801 = vadd.f32 %v1229, %v1724
      %v1802 = vadd.f32 %v1143, %v1638
      %v1803 = vadd.f32 %v1232, %v1727
      %v1804 = vadd.f32 %v1145, %v1640
      %v1805 = vadd.f32 %v1234, %v1729
      %v1806 = vadd.f32 %v1148, %v1643
      %v1807 = vadd.f32 %v1237, %v1732
      %v1808 = vadd.f32 %v1150, %v1645
      %v1809 = vadd.f32 %v1239, %v1734
      %v1810 = vadd.f32 %v1153, %v1648
      %v1811 = vadd.f32 %v1242, %v1737
      %v1812 = vadd.f32 %v1155, %v1650
      %v1813 = vadd.f32 %v1244, %v1739
      %v1814 = vadd.f32 %v1158, %v1653
      %v1815 = vadd.f32 %v1247, %v1742
      %v1816 = vadd.f32 %v1160, %v1655
      %v1817 = vadd.f32 %v1249, %v1744
      %v1818 = vadd.f32 %v1163, %v1658
      %v1819 = vadd.f32 %v1252, %v1747
      %v1820 = vadd.f32 %v1165, %v1660
      %v1821 = vadd.f32 %v1254, %v1749
      %v1822 = vadd.f32 %v1168, %v1663
      %v1823 = vadd.f32 %v1257, %v1752
      %v1824 = vadd.f32 %v1170, %v1665
      %v1825 = vadd.f32 %v1259, %v1754
      %v1826 = vadd.f32 %v1173, %v1668
      %v1827 = vadd.f32 %v1262, %v1757
      %v1828 = vadd.f32 %v1175, %v1670
      %v1829 = vadd.f32 %v1264, %v1759
      %v1830 = vadd.f32 %v1178, %v1673
      %v1831 = vadd.f32 %v1267, %v1762
      %v1832 = vadd.f32 %v1180, %v1675
      %v1833 = vadd.f32 %v1269, %v1764
      %v1834 = vadd.f32 %v1183, %v1678
      %v1835 = vadd.f32 %v1272, %v1767
      %v1836 = vadd.f32 %v1185, %v1680
      %v1837 = vadd.f32 %v1274, %v1769
      %v1838 = vadd.f32 %v1188, %v1683
      %v1839 = vadd.f32 %v1277, %v1772
      %v1840 = vadd.f32 %v1190, %v1685
      %v1841 = vadd.f32 %v1279, %v1774
      %v1842 = vadd.f32 %v1193, %v1688
      %v1843 = vadd.f32 %v1282, %v1777
      %v1844 = vadd.f32 %v1195, %v1690
      %v1845 = vadd.f32 %v1284, %v1779
      %v1846 = vadd.f32 %v1198, %v1693
      %v1847 = vadd.f32 %v1287, %v1782
      %v1848 = vadd.f32 %v1200, %v1695
      %v1849 = vadd.f32 %v1289, %v1784
      %s1850 = sadd.s32 %s251, 1
      %s1851 = smul.u32 %s1850, 3
      %s1852 = smul.addr %s1851, 4
      %s1853 = scalar_lea.vmem %s238, %s1852
      %v1854 = vld [vmem:[%s1853] sm:$0xf]
      %v1855 = vld [vmem:[%s1853 + $0x4] sm:$0xf]
      %v1856 = vld [vmem:[%s1853 + $0xc] sm:$0xf]
      %v1857 = vld [vmem:[%s1853 + $0x10] sm:$0xf]
      %v1858 = vld [vmem:[%s1853 + $0x18] sm:$0xf]
      %v1859 = vld [vmem:[%s1853 + $0x1c] sm:$0xf]
      %v1860 = vld [vmem:[%s1853 + $0x24] sm:$0xf]
      %v1861 = vld [vmem:[%s1853 + $0x28] sm:$0xf]
      %v1862 = vld [vmem:[%s1853 + $0x30] sm:$0xf]
      %v1863 = vld [vmem:[%s1853 + $0x34] sm:$0xf]
      %v1864 = vld [vmem:[%s1853 + $0x3c] sm:$0xf]
      %v1865 = vld [vmem:[%s1853 + $0x40] sm:$0xf]
      %v1866 = vld [vmem:[%s1853 + $0x48] sm:$0xf]
      %v1867 = vld [vmem:[%s1853 + $0x4c] sm:$0xf]
      %v1868 = vld [vmem:[%s1853 + $0x54] sm:$0xf]
      %v1869 = vld [vmem:[%s1853 + $0x58] sm:$0xf]
      %v1870 = vld [vmem:[%s1853 + $0x60] sm:$0xf]
      %v1871 = vld [vmem:[%s1853 + $0x64] sm:$0xf]
      %v1872 = vld [vmem:[%s1853 + $0x6c] sm:$0xf]
      %v1873 = vld [vmem:[%s1853 + $0x70] sm:$0xf]
      %v1874 = vld [vmem:[%s1853 + $0x78] sm:$0xf]
      %v1875 = vld [vmem:[%s1853 + $0x7c] sm:$0xf]
      %v1876 = vld [vmem:[%s1853 + $0x84] sm:$0xf]
      %v1877 = vld [vmem:[%s1853 + $0x88] sm:$0xf]
      %v1878 = vld [vmem:[%s1853 + $0x90] sm:$0xf]
      %v1879 = vld [vmem:[%s1853 + $0x94] sm:$0xf]
      %v1880 = vld [vmem:[%s1853 + $0x9c] sm:$0xf]
      %v1881 = vld [vmem:[%s1853 + $0xa0] sm:$0xf]
      %v1882 = vld [vmem:[%s1853 + $0xa8] sm:$0xf]
      %v1883 = vld [vmem:[%s1853 + $0xac] sm:$0xf]
      %v1884 = vld [vmem:[%s1853 + $0xb4] sm:$0xf]
      %v1885 = vld [vmem:[%s1853 + $0xb8] sm:$0xf]
      %s1886 = scalar_lea.vmem %s1, 12
      %v1887 = vld [vmem:[%s1886] sm:$0xf]
      %v1920 = vunpack.c.l.b16 %v1854
      %v1921 = vunpack.c.l.b16 %v1855
      %v1922 = vunpack.c.l.b16 %v1856
      %v1923 = vunpack.c.l.b16 %v1857
      %v1924 = vunpack.c.l.b16 %v1858
      %v1925 = vunpack.c.l.b16 %v1859
      %v1926 = vunpack.c.l.b16 %v1860
      %v1927 = vunpack.c.l.b16 %v1861
      %v1928 = vunpack.c.l.b16 %v1862
      %v1929 = vunpack.c.l.b16 %v1863
      %v1930 = vunpack.c.l.b16 %v1864
      %v1931 = vunpack.c.l.b16 %v1865
      %v1932 = vunpack.c.l.b16 %v1866
      %v1933 = vunpack.c.l.b16 %v1867
      %v1934 = vunpack.c.l.b16 %v1868
      %v1935 = vunpack.c.l.b16 %v1869
      %v1936 = vunpack.c.l.b16 %v1870
      %v1937 = vunpack.c.l.b16 %v1871
      %v1938 = vunpack.c.l.b16 %v1872
      %v1939 = vunpack.c.l.b16 %v1873
      %v1940 = vunpack.c.l.b16 %v1874
      %v1941 = vunpack.c.l.b16 %v1875
      %v1942 = vunpack.c.l.b16 %v1876
      %v1943 = vunpack.c.l.b16 %v1877
      %v1944 = vunpack.c.l.b16 %v1878
      %v1945 = vunpack.c.l.b16 %v1879
      %v1946 = vunpack.c.l.b16 %v1880
      %v1947 = vunpack.c.l.b16 %v1881
      %v1948 = vunpack.c.l.b16 %v1882
      %v1949 = vunpack.c.l.b16 %v1883
      %v1950 = vunpack.c.l.b16 %v1884
      %v1951 = vunpack.c.l.b16 %v1885
      %v1952 = vpack.c.b16 %v1921, %v1920
      %v1953 = vpack.c.b16 %v1923, %v1922
      %v1954 = vpack.c.b16 %v1925, %v1924
      %v1955 = vpack.c.b16 %v1927, %v1926
      %v1956 = vpack.c.b16 %v1929, %v1928
      %v1957 = vpack.c.b16 %v1931, %v1930
      %v1958 = vpack.c.b16 %v1933, %v1932
      %v1959 = vpack.c.b16 %v1935, %v1934
      %v1960 = vpack.c.b16 %v1937, %v1936
      %v1961 = vpack.c.b16 %v1939, %v1938
      %v1962 = vpack.c.b16 %v1941, %v1940
      %v1963 = vpack.c.b16 %v1943, %v1942
      %v1964 = vpack.c.b16 %v1945, %v1944
      %v1965 = vpack.c.b16 %v1947, %v1946
      %v1966 = vpack.c.b16 %v1949, %v1948
      %v1967 = vpack.c.b16 %v1951, %v1950
      %1969 = vst [vmem:[#allocation1] ss:$4 sm:$0xff] %v1887
      %v1970 = vld.sshfl [vmem:[#allocation1] sm:$0xff pattern:$0x73625140]
      %v1971 = vld.sshfl [vmem:[#allocation1 + $0x8] sm:$0xff pattern:$0x73625140]
      %v1973 = vsel %vm745, %v1952, 0
      %v1976 = vsel %vm745, %v1953, 0
      %v1979 = vsel %vm745, %v1954, 0
      %v1982 = vsel %vm745, %v1955, 0
      %v1985 = vsel %vm745, %v1956, 0
      %v1988 = vsel %vm745, %v1957, 0
      %v1991 = vsel %vm745, %v1958, 0
      %v1994 = vsel %vm745, %v1959, 0
      %v1997 = vsel %vm745, %v1960, 0
      %v2000 = vsel %vm745, %v1961, 0
      %v2003 = vsel %vm745, %v1962, 0
      %v2006 = vsel %vm745, %v1963, 0
      %v2009 = vsel %vm745, %v1964, 0
      %v2012 = vsel %vm745, %v1965, 0
      %v2015 = vsel %vm745, %v1966, 0
      %v2018 = vsel %vm745, %v1967, 0
      %v2020 = vsel %vm794, %v1970, 0
      %v2022 = vsel %vm794, %v1971, 0
      %2024 = vmatpush.bf16.msra.mxu0 0
      %2025 = vmatpush.bf16.msra.mxu0 0
      %2026 = vmatpush.bf16.msra.mxu0 0
      %2027 = vmatpush.bf16.msra.mxu0 0
      %2028 = vmatpush.bf16.msra.mxu0 0
      %2029 = vmatpush.bf16.msra.mxu0 0
      %2030 = vmatpush.bf16.msra.mxu0 0
      %2031 = vmatpush.bf16.msra.mxu0 %v2020
      %2032 = vmatmul.bf16.gmra.mxu0 %v1973
      %v2033 = vpop.f32.mrf.mxu0
      %v2034 = vadd.f32 0.0, %v2033
      %v2035 = vpop.f32.mrf.mxu0
      %v2036 = vadd.f32 0.0, %v2035
      %2037 = vmatmul.bf16.gmra.mxu0 %v1976
      %v2038 = vpop.f32.mrf.mxu0
      %v2039 = vadd.f32 0.0, %v2038
      %v2040 = vpop.f32.mrf.mxu0
      %v2041 = vadd.f32 0.0, %v2040
      %2042 = vmatmul.bf16.gmra.mxu0 %v1979
      %v2043 = vpop.f32.mrf.mxu0
      %v2044 = vadd.f32 0.0, %v2043
      %v2045 = vpop.f32.mrf.mxu0
      %v2046 = vadd.f32 0.0, %v2045
      %2047 = vmatmul.bf16.gmra.mxu0 %v1982
      %v2048 = vpop.f32.mrf.mxu0
      %v2049 = vadd.f32 0.0, %v2048
      %v2050 = vpop.f32.mrf.mxu0
      %v2051 = vadd.f32 0.0, %v2050
      %2052 = vmatmul.bf16.gmra.mxu0 %v1985
      %v2053 = vpop.f32.mrf.mxu0
      %v2054 = vadd.f32 0.0, %v2053
      %v2055 = vpop.f32.mrf.mxu0
      %v2056 = vadd.f32 0.0, %v2055
      %2057 = vmatmul.bf16.gmra.mxu0 %v1988
      %v2058 = vpop.f32.mrf.mxu0
      %v2059 = vadd.f32 0.0, %v2058
      %v2060 = vpop.f32.mrf.mxu0
      %v2061 = vadd.f32 0.0, %v2060
      %2062 = vmatmul.bf16.gmra.mxu0 %v1991
      %v2063 = vpop.f32.mrf.mxu0
      %v2064 = vadd.f32 0.0, %v2063
      %v2065 = vpop.f32.mrf.mxu0
      %v2066 = vadd.f32 0.0, %v2065
      %2067 = vmatmul.bf16.gmra.mxu0 %v1994
      %v2068 = vpop.f32.mrf.mxu0
      %v2069 = vadd.f32 0.0, %v2068
      %v2070 = vpop.f32.mrf.mxu0
      %v2071 = vadd.f32 0.0, %v2070
      %2072 = vmatmul.bf16.gmra.mxu0 %v1997
      %v2073 = vpop.f32.mrf.mxu0
      %v2074 = vadd.f32 0.0, %v2073
      %v2075 = vpop.f32.mrf.mxu0
      %v2076 = vadd.f32 0.0, %v2075
      %2077 = vmatmul.bf16.gmra.mxu0 %v2000
      %v2078 = vpop.f32.mrf.mxu0
      %v2079 = vadd.f32 0.0, %v2078
      %v2080 = vpop.f32.mrf.mxu0
      %v2081 = vadd.f32 0.0, %v2080
      %2082 = vmatmul.bf16.gmra.mxu0 %v2003
      %v2083 = vpop.f32.mrf.mxu0
      %v2084 = vadd.f32 0.0, %v2083
      %v2085 = vpop.f32.mrf.mxu0
      %v2086 = vadd.f32 0.0, %v2085
      %2087 = vmatmul.bf16.gmra.mxu0 %v2006
      %v2088 = vpop.f32.mrf.mxu0
      %v2089 = vadd.f32 0.0, %v2088
      %v2090 = vpop.f32.mrf.mxu0
      %v2091 = vadd.f32 0.0, %v2090
      %2092 = vmatmul.bf16.gmra.mxu0 %v2009
      %v2093 = vpop.f32.mrf.mxu0
      %v2094 = vadd.f32 0.0, %v2093
      %v2095 = vpop.f32.mrf.mxu0
      %v2096 = vadd.f32 0.0, %v2095
      %2097 = vmatmul.bf16.gmra.mxu0 %v2012
      %v2098 = vpop.f32.mrf.mxu0
      %v2099 = vadd.f32 0.0, %v2098
      %v2100 = vpop.f32.mrf.mxu0
      %v2101 = vadd.f32 0.0, %v2100
      %2102 = vmatmul.bf16.gmra.mxu0 %v2015
      %v2103 = vpop.f32.mrf.mxu0
      %v2104 = vadd.f32 0.0, %v2103
      %v2105 = vpop.f32.mrf.mxu0
      %v2106 = vadd.f32 0.0, %v2105
      %2107 = vmatmul.bf16.gmra.mxu0 %v2018
      %v2108 = vpop.f32.mrf.mxu0
      %v2109 = vadd.f32 0.0, %v2108
      %v2110 = vpop.f32.mrf.mxu0
      %v2111 = vadd.f32 0.0, %v2110
      %2112 = vdwg.mxu0
      %2113 = vmatpush.bf16.msra.mxu0 0
      %2114 = vmatpush.bf16.msra.mxu0 0
      %2115 = vmatpush.bf16.msra.mxu0 0
      %2116 = vmatpush.bf16.msra.mxu0 0
      %2117 = vmatpush.bf16.msra.mxu0 0
      %2118 = vmatpush.bf16.msra.mxu0 0
      %2119 = vmatpush.bf16.msra.mxu0 0
      %2120 = vmatpush.bf16.msra.mxu0 %v2022
      %2121 = vmatmul.bf16.gmra.mxu0 %v1973
      %v2122 = vpop.f32.mrf.mxu0
      %v2123 = vadd.f32 0.0, %v2122
      %v2124 = vpop.f32.mrf.mxu0
      %v2125 = vadd.f32 0.0, %v2124
      %2126 = vmatmul.bf16.gmra.mxu0 %v1976
      %v2127 = vpop.f32.mrf.mxu0
      %v2128 = vadd.f32 0.0, %v2127
      %v2129 = vpop.f32.mrf.mxu0
      %v2130 = vadd.f32 0.0, %v2129
      %2131 = vmatmul.bf16.gmra.mxu0 %v1979
      %v2132 = vpop.f32.mrf.mxu0
      %v2133 = vadd.f32 0.0, %v2132
      %v2134 = vpop.f32.mrf.mxu0
      %v2135 = vadd.f32 0.0, %v2134
      %2136 = vmatmul.bf16.gmra.mxu0 %v1982
      %v2137 = vpop.f32.mrf.mxu0
      %v2138 = vadd.f32 0.0, %v2137
      %v2139 = vpop.f32.mrf.mxu0
      %v2140 = vadd.f32 0.0, %v2139
      %2141 = vmatmul.bf16.gmra.mxu0 %v1985
      %v2142 = vpop.f32.mrf.mxu0
      %v2143 = vadd.f32 0.0, %v2142
      %v2144 = vpop.f32.mrf.mxu0
      %v2145 = vadd.f32 0.0, %v2144
      %2146 = vmatmul.bf16.gmra.mxu0 %v1988
      %v2147 = vpop.f32.mrf.mxu0
      %v2148 = vadd.f32 0.0, %v2147
      %v2149 = vpop.f32.mrf.mxu0
      %v2150 = vadd.f32 0.0, %v2149
      %2151 = vmatmul.bf16.gmra.mxu0 %v1991
      %v2152 = vpop.f32.mrf.mxu0
      %v2153 = vadd.f32 0.0, %v2152
      %v2154 = vpop.f32.mrf.mxu0
      %v2155 = vadd.f32 0.0, %v2154
      %2156 = vmatmul.bf16.gmra.mxu0 %v1994
      %v2157 = vpop.f32.mrf.mxu0
      %v2158 = vadd.f32 0.0, %v2157
      %v2159 = vpop.f32.mrf.mxu0
      %v2160 = vadd.f32 0.0, %v2159
      %2161 = vmatmul.bf16.gmra.mxu0 %v1997
      %v2162 = vpop.f32.mrf.mxu0
      %v2163 = vadd.f32 0.0, %v2162
      %v2164 = vpop.f32.mrf.mxu0
      %v2165 = vadd.f32 0.0, %v2164
      %2166 = vmatmul.bf16.gmra.mxu0 %v2000
      %v2167 = vpop.f32.mrf.mxu0
      %v2168 = vadd.f32 0.0, %v2167
      %v2169 = vpop.f32.mrf.mxu0
      %v2170 = vadd.f32 0.0, %v2169
      %2171 = vmatmul.bf16.gmra.mxu0 %v2003
      %v2172 = vpop.f32.mrf.mxu0
      %v2173 = vadd.f32 0.0, %v2172
      %v2174 = vpop.f32.mrf.mxu0
      %v2175 = vadd.f32 0.0, %v2174
      %2176 = vmatmul.bf16.gmra.mxu0 %v2006
      %v2177 = vpop.f32.mrf.mxu0
      %v2178 = vadd.f32 0.0, %v2177
      %v2179 = vpop.f32.mrf.mxu0
      %v2180 = vadd.f32 0.0, %v2179
      %2181 = vmatmul.bf16.gmra.mxu0 %v2009
      %v2182 = vpop.f32.mrf.mxu0
      %v2183 = vadd.f32 0.0, %v2182
      %v2184 = vpop.f32.mrf.mxu0
      %v2185 = vadd.f32 0.0, %v2184
      %2186 = vmatmul.bf16.gmra.mxu0 %v2012
      %v2187 = vpop.f32.mrf.mxu0
      %v2188 = vadd.f32 0.0, %v2187
      %v2189 = vpop.f32.mrf.mxu0
      %v2190 = vadd.f32 0.0, %v2189
      %2191 = vmatmul.bf16.gmra.mxu0 %v2015
      %v2192 = vpop.f32.mrf.mxu0
      %v2193 = vadd.f32 0.0, %v2192
      %v2194 = vpop.f32.mrf.mxu0
      %v2195 = vadd.f32 0.0, %v2194
      %2196 = vmatmul.bf16.gmra.mxu0 %v2018
      %v2197 = vpop.f32.mrf.mxu0
      %v2198 = vadd.f32 0.0, %v2197
      %v2199 = vpop.f32.mrf.mxu0
      %v2200 = vadd.f32 0.0, %v2199
      %2201 = vdwg.mxu0
      %v2202 = vadd.f32 %v1786, %v2034
      %v2203 = vadd.f32 %v1787, %v2123
      %v2204 = vadd.f32 %v1788, %v2036
      %v2205 = vadd.f32 %v1789, %v2125
      %v2206 = vadd.f32 %v1790, %v2039
      %v2207 = vadd.f32 %v1791, %v2128
      %v2208 = vadd.f32 %v1792, %v2041
      %v2209 = vadd.f32 %v1793, %v2130
      %v2210 = vadd.f32 %v1794, %v2044
      %v2211 = vadd.f32 %v1795, %v2133
      %v2212 = vadd.f32 %v1796, %v2046
      %v2213 = vadd.f32 %v1797, %v2135
      %v2214 = vadd.f32 %v1798, %v2049
      %v2215 = vadd.f32 %v1799, %v2138
      %v2216 = vadd.f32 %v1800, %v2051
      %v2217 = vadd.f32 %v1801, %v2140
      %v2218 = vadd.f32 %v1802, %v2054
      %v2219 = vadd.f32 %v1803, %v2143
      %v2220 = vadd.f32 %v1804, %v2056
      %v2221 = vadd.f32 %v1805, %v2145
      %v2222 = vadd.f32 %v1806, %v2059
      %v2223 = vadd.f32 %v1807, %v2148
      %v2224 = vadd.f32 %v1808, %v2061
      %v2225 = vadd.f32 %v1809, %v2150
      %v2226 = vadd.f32 %v1810, %v2064
      %v2227 = vadd.f32 %v1811, %v2153
      %v2228 = vadd.f32 %v1812, %v2066
      %v2229 = vadd.f32 %v1813, %v2155
      %v2230 = vadd.f32 %v1814, %v2069
      %v2231 = vadd.f32 %v1815, %v2158
      %v2232 = vadd.f32 %v1816, %v2071
      %v2233 = vadd.f32 %v1817, %v2160
      %v2234 = vadd.f32 %v1818, %v2074
      %v2235 = vadd.f32 %v1819, %v2163
      %v2236 = vadd.f32 %v1820, %v2076
      %v2237 = vadd.f32 %v1821, %v2165
      %v2238 = vadd.f32 %v1822, %v2079
      %v2239 = vadd.f32 %v1823, %v2168
      %v2240 = vadd.f32 %v1824, %v2081
      %v2241 = vadd.f32 %v1825, %v2170
      %v2242 = vadd.f32 %v1826, %v2084
      %v2243 = vadd.f32 %v1827, %v2173
      %v2244 = vadd.f32 %v1828, %v2086
      %v2245 = vadd.f32 %v1829, %v2175
      %v2246 = vadd.f32 %v1830, %v2089
      %v2247 = vadd.f32 %v1831, %v2178
      %v2248 = vadd.f32 %v1832, %v2091
      %v2249 = vadd.f32 %v1833, %v2180
      %v2250 = vadd.f32 %v1834, %v2094
      %v2251 = vadd.f32 %v1835, %v2183
      %v2252 = vadd.f32 %v1836, %v2096
      %v2253 = vadd.f32 %v1837, %v2185
      %v2254 = vadd.f32 %v1838, %v2099
      %v2255 = vadd.f32 %v1839, %v2188
      %v2256 = vadd.f32 %v1840, %v2101
      %v2257 = vadd.f32 %v1841, %v2190
      %v2258 = vadd.f32 %v1842, %v2104
      %v2259 = vadd.f32 %v1843, %v2193
      %v2260 = vadd.f32 %v1844, %v2106
      %v2261 = vadd.f32 %v1845, %v2195
      %v2262 = vadd.f32 %v1846, %v2109
      %v2263 = vadd.f32 %v1847, %v2198
      %v2264 = vadd.f32 %v1848, %v2111
      %v2265 = vadd.f32 %v1849, %v2200
      %v2266 = vld [vmem:[%s1853] sm:$0xf]
      %v2267 = vld [vmem:[%s1853 + $0x4] sm:$0xf]
      %v2268 = vld [vmem:[%s1853 + $0x8] sm:$0x1]
      %v2269 = vld [vmem:[%s1853 + $0xc] sm:$0xf]
      %v2270 = vld [vmem:[%s1853 + $0x10] sm:$0xf]
      %v2271 = vld [vmem:[%s1853 + $0x14] sm:$0x1]
      %v2272 = vld [vmem:[%s1853 + $0x18] sm:$0xf]
      %v2273 = vld [vmem:[%s1853 + $0x1c] sm:$0xf]
      %v2274 = vld [vmem:[%s1853 + $0x20] sm:$0x1]
      %v2275 = vld [vmem:[%s1853 + $0x24] sm:$0xf]
      %v2276 = vld [vmem:[%s1853 + $0x28] sm:$0xf]
      %v2277 = vld [vmem:[%s1853 + $0x2c] sm:$0x1]
      %v2278 = vld [vmem:[%s1853 + $0x30] sm:$0xf]
      %v2279 = vld [vmem:[%s1853 + $0x34] sm:$0xf]
      %v2280 = vld [vmem:[%s1853 + $0x38] sm:$0x1]
      %v2281 = vld [vmem:[%s1853 + $0x3c] sm:$0xf]
      %v2282 = vld [vmem:[%s1853 + $0x40] sm:$0xf]
      %v2283 = vld [vmem:[%s1853 + $0x44] sm:$0x1]
      %v2284 = vld [vmem:[%s1853 + $0x48] sm:$0xf]
      %v2285 = vld [vmem:[%s1853 + $0x4c] sm:$0xf]
      %v2286 = vld [vmem:[%s1853 + $0x50] sm:$0x1]
      %v2287 = vld [vmem:[%s1853 + $0x54] sm:$0xf]
      %v2288 = vld [vmem:[%s1853 + $0x58] sm:$0xf]
      %v2289 = vld [vmem:[%s1853 + $0x5c] sm:$0x1]
      %v2290 = vld [vmem:[%s1853 + $0x60] sm:$0xf]
      %v2291 = vld [vmem:[%s1853 + $0x64] sm:$0xf]
      %v2292 = vld [vmem:[%s1853 + $0x68] sm:$0x1]
      %v2293 = vld [vmem:[%s1853 + $0x6c] sm:$0xf]
      %v2294 = vld [vmem:[%s1853 + $0x70] sm:$0xf]
      %v2295 = vld [vmem:[%s1853 + $0x74] sm:$0x1]
      %v2296 = vld [vmem:[%s1853 + $0x78] sm:$0xf]
      %v2297 = vld [vmem:[%s1853 + $0x7c] sm:$0xf]
      %v2298 = vld [vmem:[%s1853 + $0x80] sm:$0x1]
      %v2299 = vld [vmem:[%s1853 + $0x84] sm:$0xf]
      %v2300 = vld [vmem:[%s1853 + $0x88] sm:$0xf]
      %v2301 = vld [vmem:[%s1853 + $0x8c] sm:$0x1]
      %v2302 = vld [vmem:[%s1853 + $0x90] sm:$0xf]
      %v2303 = vld [vmem:[%s1853 + $0x94] sm:$0xf]
      %v2304 = vld [vmem:[%s1853 + $0x98] sm:$0x1]
      %v2305 = vld [vmem:[%s1853 + $0x9c] sm:$0xf]
      %v2306 = vld [vmem:[%s1853 + $0xa0] sm:$0xf]
      %v2307 = vld [vmem:[%s1853 + $0xa4] sm:$0x1]
      %v2308 = vld [vmem:[%s1853 + $0xa8] sm:$0xf]
      %v2309 = vld [vmem:[%s1853 + $0xac] sm:$0xf]
      %v2310 = vld [vmem:[%s1853 + $0xb0] sm:$0x1]
      %v2311 = vld [vmem:[%s1853 + $0xb4] sm:$0xf]
      %v2312 = vld [vmem:[%s1853 + $0xb8] sm:$0xf]
      %v2313 = vld [vmem:[%s1853 + $0xbc] sm:$0x1]
      %v2315 = vshrl.u32 %v2266, 16
      %v2317 = vrot.slane %v2315, 4
      %v2318 = vshll.u32 %v2266, 16
      %v2320 = vrot.slane %v2318, 5
      %v2321 = vor.u32 %v2317, %v2320
      %v2322 = vrot.slane %v2321, 4
      %v2324 = vshll.u32 %v2267, 16
      %v2326 = vrot.slane %v2324, 5
      %v2327 = vsel %vm306, %v2322, %v2326
      %v2328 = vshrl.u32 %v2267, 16
      %v2330 = vrot.slane %v2328, 4
      %v2331 = vor.u32 %v2330, %v2326
      %v2332 = vrot.slane %v2331, 4
      %v2334 = vshll.u32 %v2268, 16
      %v2336 = vrot.slane %v2334, 5
      %v2337 = vsel %vm306, %v2332, %v2336
      %v2339 = vshrl.u32 %v2269, 16
      %v2341 = vrot.slane %v2339, 4
      %v2342 = vshll.u32 %v2269, 16
      %v2344 = vrot.slane %v2342, 5
      %v2345 = vor.u32 %v2341, %v2344
      %v2346 = vrot.slane %v2345, 4
      %v2348 = vshll.u32 %v2270, 16
      %v2350 = vrot.slane %v2348, 5
      %v2351 = vsel %vm306, %v2346, %v2350
      %v2352 = vshrl.u32 %v2270, 16
      %v2354 = vrot.slane %v2352, 4
      %v2355 = vor.u32 %v2354, %v2350
      %v2356 = vrot.slane %v2355, 4
      %v2358 = vshll.u32 %v2271, 16
      %v2360 = vrot.slane %v2358, 5
      %v2361 = vsel %vm306, %v2356, %v2360
      %v2363 = vshrl.u32 %v2272, 16
      %v2365 = vrot.slane %v2363, 4
      %v2366 = vshll.u32 %v2272, 16
      %v2368 = vrot.slane %v2366, 5
      %v2369 = vor.u32 %v2365, %v2368
      %v2370 = vrot.slane %v2369, 4
      %v2372 = vshll.u32 %v2273, 16
      %v2374 = vrot.slane %v2372, 5
      %v2375 = vsel %vm306, %v2370, %v2374
      %v2376 = vshrl.u32 %v2273, 16
      %v2378 = vrot.slane %v2376, 4
      %v2379 = vor.u32 %v2378, %v2374
      %v2380 = vrot.slane %v2379, 4
      %v2382 = vshll.u32 %v2274, 16
      %v2384 = vrot.slane %v2382, 5
      %v2385 = vsel %vm306, %v2380, %v2384
      %v2387 = vshrl.u32 %v2275, 16
      %v2389 = vrot.slane %v2387, 4
      %v2390 = vshll.u32 %v2275, 16
      %v2392 = vrot.slane %v2390, 5
      %v2393 = vor.u32 %v2389, %v2392
      %v2394 = vrot.slane %v2393, 4
      %v2396 = vshll.u32 %v2276, 16
      %v2398 = vrot.slane %v2396, 5
      %v2399 = vsel %vm306, %v2394, %v2398
      %v2400 = vshrl.u32 %v2276, 16
      %v2402 = vrot.slane %v2400, 4
      %v2403 = vor.u32 %v2402, %v2398
      %v2404 = vrot.slane %v2403, 4
      %v2406 = vshll.u32 %v2277, 16
      %v2408 = vrot.slane %v2406, 5
      %v2409 = vsel %vm306, %v2404, %v2408
      %v2411 = vshrl.u32 %v2278, 16
      %v2413 = vrot.slane %v2411, 4
      %v2414 = vshll.u32 %v2278, 16
      %v2416 = vrot.slane %v2414, 5
      %v2417 = vor.u32 %v2413, %v2416
      %v2418 = vrot.slane %v2417, 4
      %v2420 = vshll.u32 %v2279, 16
      %v2422 = vrot.slane %v2420, 5
      %v2423 = vsel %vm306, %v2418, %v2422
      %v2424 = vshrl.u32 %v2279, 16
      %v2426 = vrot.slane %v2424, 4
      %v2427 = vor.u32 %v2426, %v2422
      %v2428 = vrot.slane %v2427, 4
      %v2430 = vshll.u32 %v2280, 16
      %v2432 = vrot.slane %v2430, 5
      %v2433 = vsel %vm306, %v2428, %v2432
      %v2435 = vshrl.u32 %v2281, 16
      %v2437 = vrot.slane %v2435, 4
      %v2438 = vshll.u32 %v2281, 16
      %v2440 = vrot.slane %v2438, 5
      %v2441 = vor.u32 %v2437, %v2440
      %v2442 = vrot.slane %v2441, 4
      %v2444 = vshll.u32 %v2282, 16
      %v2446 = vrot.slane %v2444, 5
      %v2447 = vsel %vm306, %v2442, %v2446
      %v2448 = vshrl.u32 %v2282, 16
      %v2450 = vrot.slane %v2448, 4
      %v2451 = vor.u32 %v2450, %v2446
      %v2452 = vrot.slane %v2451, 4
      %v2454 = vshll.u32 %v2283, 16
      %v2456 = vrot.slane %v2454, 5
      %v2457 = vsel %vm306, %v2452, %v2456
      %v2459 = vshrl.u32 %v2284, 16
      %v2461 = vrot.slane %v2459, 4
      %v2462 = vshll.u32 %v2284, 16
      %v2464 = vrot.slane %v2462, 5
      %v2465 = vor.u32 %v2461, %v2464
      %v2466 = vrot.slane %v2465, 4
      %v2468 = vshll.u32 %v2285, 16
      %v2470 = vrot.slane %v2468, 5
      %v2471 = vsel %vm306, %v2466, %v2470
      %v2472 = vshrl.u32 %v2285, 16
      %v2474 = vrot.slane %v2472, 4
      %v2475 = vor.u32 %v2474, %v2470
      %v2476 = vrot.slane %v2475, 4
      %v2478 = vshll.u32 %v2286, 16
      %v2480 = vrot.slane %v2478, 5
      %v2481 = vsel %vm306, %v2476, %v2480
      %v2483 = vshrl.u32 %v2287, 16
      %v2485 = vrot.slane %v2483, 4
      %v2486 = vshll.u32 %v2287, 16
      %v2488 = vrot.slane %v2486, 5
      %v2489 = vor.u32 %v2485, %v2488
      %v2490 = vrot.slane %v2489, 4
      %v2492 = vshll.u32 %v2288, 16
      %v2494 = vrot.slane %v2492, 5
      %v2495 = vsel %vm306, %v2490, %v2494
      %v2496 = vshrl.u32 %v2288, 16
      %v2498 = vrot.slane %v2496, 4
      %v2499 = vor.u32 %v2498, %v2494
      %v2500 = vrot.slane %v2499, 4
      %v2502 = vshll.u32 %v2289, 16
      %v2504 = vrot.slane %v2502, 5
      %v2505 = vsel %vm306, %v2500, %v2504
      %v2507 = vshrl.u32 %v2290, 16
      %v2509 = vrot.slane %v2507, 4
      %v2510 = vshll.u32 %v2290, 16
      %v2512 = vrot.slane %v2510, 5
      %v2513 = vor.u32 %v2509, %v2512
      %v2514 = vrot.slane %v2513, 4
      %v2516 = vshll.u32 %v2291, 16
      %v2518 = vrot.slane %v2516, 5
      %v2519 = vsel %vm306, %v2514, %v2518
      %v2520 = vshrl.u32 %v2291, 16
      %v2522 = vrot.slane %v2520, 4
      %v2523 = vor.u32 %v2522, %v2518
      %v2524 = vrot.slane %v2523, 4
      %v2526 = vshll.u32 %v2292, 16
      %v2528 = vrot.slane %v2526, 5
      %v2529 = vsel %vm306, %v2524, %v2528
      %v2531 = vshrl.u32 %v2293, 16
      %v2533 = vrot.slane %v2531, 4
      %v2534 = vshll.u32 %v2293, 16
      %v2536 = vrot.slane %v2534, 5
      %v2537 = vor.u32 %v2533, %v2536
      %v2538 = vrot.slane %v2537, 4
      %v2540 = vshll.u32 %v2294, 16
      %v2542 = vrot.slane %v2540, 5
      %v2543 = vsel %vm306, %v2538, %v2542
      %v2544 = vshrl.u32 %v2294, 16
      %v2546 = vrot.slane %v2544, 4
      %v2547 = vor.u32 %v2546, %v2542
      %v2548 = vrot.slane %v2547, 4
      %v2550 = vshll.u32 %v2295, 16
      %v2552 = vrot.slane %v2550, 5
      %v2553 = vsel %vm306, %v2548, %v2552
      %v2555 = vshrl.u32 %v2296, 16
      %v2557 = vrot.slane %v2555, 4
      %v2558 = vshll.u32 %v2296, 16
      %v2560 = vrot.slane %v2558, 5
      %v2561 = vor.u32 %v2557, %v2560
      %v2562 = vrot.slane %v2561, 4
      %v2564 = vshll.u32 %v2297, 16
      %v2566 = vrot.slane %v2564, 5
      %v2567 = vsel %vm306, %v2562, %v2566
      %v2568 = vshrl.u32 %v2297, 16
      %v2570 = vrot.slane %v2568, 4
      %v2571 = vor.u32 %v2570, %v2566
      %v2572 = vrot.slane %v2571, 4
      %v2574 = vshll.u32 %v2298, 16
      %v2576 = vrot.slane %v2574, 5
      %v2577 = vsel %vm306, %v2572, %v2576
      %v2579 = vshrl.u32 %v2299, 16
      %v2581 = vrot.slane %v2579, 4
      %v2582 = vshll.u32 %v2299, 16
      %v2584 = vrot.slane %v2582, 5
      %v2585 = vor.u32 %v2581, %v2584
      %v2586 = vrot.slane %v2585, 4
      %v2588 = vshll.u32 %v2300, 16
      %v2590 = vrot.slane %v2588, 5
      %v2591 = vsel %vm306, %v2586, %v2590
      %v2592 = vshrl.u32 %v2300, 16
      %v2594 = vrot.slane %v2592, 4
      %v2595 = vor.u32 %v2594, %v2590
      %v2596 = vrot.slane %v2595, 4
      %v2598 = vshll.u32 %v2301, 16
      %v2600 = vrot.slane %v2598, 5
      %v2601 = vsel %vm306, %v2596, %v2600
      %v2603 = vshrl.u32 %v2302, 16
      %v2605 = vrot.slane %v2603, 4
      %v2606 = vshll.u32 %v2302, 16
      %v2608 = vrot.slane %v2606, 5
      %v2609 = vor.u32 %v2605, %v2608
      %v2610 = vrot.slane %v2609, 4
      %v2612 = vshll.u32 %v2303, 16
      %v2614 = vrot.slane %v2612, 5
      %v2615 = vsel %vm306, %v2610, %v2614
      %v2616 = vshrl.u32 %v2303, 16
      %v2618 = vrot.slane %v2616, 4
      %v2619 = vor.u32 %v2618, %v2614
      %v2620 = vrot.slane %v2619, 4
      %v2622 = vshll.u32 %v2304, 16
      %v2624 = vrot.slane %v2622, 5
      %v2625 = vsel %vm306, %v2620, %v2624
      %v2627 = vshrl.u32 %v2305, 16
      %v2629 = vrot.slane %v2627, 4
      %v2630 = vshll.u32 %v2305, 16
      %v2632 = vrot.slane %v2630, 5
      %v2633 = vor.u32 %v2629, %v2632
      %v2634 = vrot.slane %v2633, 4
      %v2636 = vshll.u32 %v2306, 16
      %v2638 = vrot.slane %v2636, 5
      %v2639 = vsel %vm306, %v2634, %v2638
      %v2640 = vshrl.u32 %v2306, 16
      %v2642 = vrot.slane %v2640, 4
      %v2643 = vor.u32 %v2642, %v2638
      %v2644 = vrot.slane %v2643, 4
      %v2646 = vshll.u32 %v2307, 16
      %v2648 = vrot.slane %v2646, 5
      %v2649 = vsel %vm306, %v2644, %v2648
      %v2651 = vshrl.u32 %v2308, 16
      %v2653 = vrot.slane %v2651, 4
      %v2654 = vshll.u32 %v2308, 16
      %v2656 = vrot.slane %v2654, 5
      %v2657 = vor.u32 %v2653, %v2656
      %v2658 = vrot.slane %v2657, 4
      %v2660 = vshll.u32 %v2309, 16
      %v2662 = vrot.slane %v2660, 5
      %v2663 = vsel %vm306, %v2658, %v2662
      %v2664 = vshrl.u32 %v2309, 16
      %v2666 = vrot.slane %v2664, 4
      %v2667 = vor.u32 %v2666, %v2662
      %v2668 = vrot.slane %v2667, 4
      %v2670 = vshll.u32 %v2310, 16
      %v2672 = vrot.slane %v2670, 5
      %v2673 = vsel %vm306, %v2668, %v2672
      %v2675 = vshrl.u32 %v2311, 16
      %v2677 = vrot.slane %v2675, 4
      %v2678 = vshll.u32 %v2311, 16
      %v2680 = vrot.slane %v2678, 5
      %v2681 = vor.u32 %v2677, %v2680
      %v2682 = vrot.slane %v2681, 4
      %v2684 = vshll.u32 %v2312, 16
      %v2686 = vrot.slane %v2684, 5
      %v2687 = vsel %vm306, %v2682, %v2686
      %v2688 = vshrl.u32 %v2312, 16
      %v2690 = vrot.slane %v2688, 4
      %v2691 = vor.u32 %v2690, %v2686
      %v2692 = vrot.slane %v2691, 4
      %v2694 = vshll.u32 %v2313, 16
      %v2696 = vrot.slane %v2694, 5
      %v2697 = vsel %vm306, %v2692, %v2696
      %s2698 = scalar_lea.vmem %s1, 16
      %v2699 = vld [vmem:[%s2698] sm:$0xf]
      %v2700 = vunpack.c.l.b16 %v2327
      %v2701 = vunpack.c.l.b16 %v2337
      %v2702 = vunpack.c.l.b16 %v2351
      %v2703 = vunpack.c.l.b16 %v2361
      %v2704 = vunpack.c.l.b16 %v2375
      %v2705 = vunpack.c.l.b16 %v2385
      %v2706 = vunpack.c.l.b16 %v2399
      %v2707 = vunpack.c.l.b16 %v2409
      %v2708 = vunpack.c.l.b16 %v2423
      %v2709 = vunpack.c.l.b16 %v2433
      %v2710 = vunpack.c.l.b16 %v2447
      %v2711 = vunpack.c.l.b16 %v2457
      %v2712 = vunpack.c.l.b16 %v2471
      %v2713 = vunpack.c.l.b16 %v2481
      %v2714 = vunpack.c.l.b16 %v2495
      %v2715 = vunpack.c.l.b16 %v2505
      %v2716 = vunpack.c.l.b16 %v2519
      %v2717 = vunpack.c.l.b16 %v2529
      %v2718 = vunpack.c.l.b16 %v2543
      %v2719 = vunpack.c.l.b16 %v2553
      %v2720 = vunpack.c.l.b16 %v2567
      %v2721 = vunpack.c.l.b16 %v2577
      %v2722 = vunpack.c.l.b16 %v2591
      %v2723 = vunpack.c.l.b16 %v2601
      %v2724 = vunpack.c.l.b16 %v2615
      %v2725 = vunpack.c.l.b16 %v2625
      %v2726 = vunpack.c.l.b16 %v2639
      %v2727 = vunpack.c.l.b16 %v2649
      %v2728 = vunpack.c.l.b16 %v2663
      %v2729 = vunpack.c.l.b16 %v2673
      %v2730 = vunpack.c.l.b16 %v2687
      %v2731 = vunpack.c.l.b16 %v2697
      %v2732 = vpack.c.b16 %v2701, %v2700
      %v2733 = vpack.c.b16 %v2703, %v2702
      %v2734 = vpack.c.b16 %v2705, %v2704
      %v2735 = vpack.c.b16 %v2707, %v2706
      %v2736 = vpack.c.b16 %v2709, %v2708
      %v2737 = vpack.c.b16 %v2711, %v2710
      %v2738 = vpack.c.b16 %v2713, %v2712
      %v2739 = vpack.c.b16 %v2715, %v2714
      %v2740 = vpack.c.b16 %v2717, %v2716
      %v2741 = vpack.c.b16 %v2719, %v2718
      %v2742 = vpack.c.b16 %v2721, %v2720
      %v2743 = vpack.c.b16 %v2723, %v2722
      %v2744 = vpack.c.b16 %v2725, %v2724
      %v2745 = vpack.c.b16 %v2727, %v2726
      %v2746 = vpack.c.b16 %v2729, %v2728
      %v2747 = vpack.c.b16 %v2731, %v2730
      %2749 = vst [vmem:[#allocation1] ss:$4 sm:$0xff] %v2699
      %v2750 = vld.sshfl [vmem:[#allocation1] sm:$0xff pattern:$0x73625140]
      %v2751 = vld.sshfl [vmem:[#allocation1 + $0x8] sm:$0xff pattern:$0x73625140]
      %v2753 = vsel %vm745, %v2732, 0
      %v2756 = vsel %vm745, %v2733, 0
      %v2759 = vsel %vm745, %v2734, 0
      %v2762 = vsel %vm745, %v2735, 0
      %v2765 = vsel %vm745, %v2736, 0
      %v2768 = vsel %vm745, %v2737, 0
      %v2771 = vsel %vm745, %v2738, 0
      %v2774 = vsel %vm745, %v2739, 0
      %v2777 = vsel %vm745, %v2740, 0
      %v2780 = vsel %vm745, %v2741, 0
      %v2783 = vsel %vm745, %v2742, 0
      %v2786 = vsel %vm745, %v2743, 0
      %v2789 = vsel %vm745, %v2744, 0
      %v2792 = vsel %vm745, %v2745, 0
      %v2795 = vsel %vm745, %v2746, 0
      %v2798 = vsel %vm745, %v2747, 0
      %v2800 = vsel %vm794, %v2750, 0
      %v2802 = vsel %vm794, %v2751, 0
      %2804 = vmatpush.bf16.msra.mxu0 0
      %2805 = vmatpush.bf16.msra.mxu0 0
      %2806 = vmatpush.bf16.msra.mxu0 0
      %2807 = vmatpush.bf16.msra.mxu0 0
      %2808 = vmatpush.bf16.msra.mxu0 0
      %2809 = vmatpush.bf16.msra.mxu0 0
      %2810 = vmatpush.bf16.msra.mxu0 0
      %2811 = vmatpush.bf16.msra.mxu0 %v2800
      %2812 = vmatmul.bf16.gmra.mxu0 %v2753
      %v2813 = vpop.f32.mrf.mxu0
      %v2814 = vadd.f32 0.0, %v2813
      %v2815 = vpop.f32.mrf.mxu0
      %v2816 = vadd.f32 0.0, %v2815
      %2817 = vmatmul.bf16.gmra.mxu0 %v2756
      %v2818 = vpop.f32.mrf.mxu0
      %v2819 = vadd.f32 0.0, %v2818
      %v2820 = vpop.f32.mrf.mxu0
      %v2821 = vadd.f32 0.0, %v2820
      %2822 = vmatmul.bf16.gmra.mxu0 %v2759
      %v2823 = vpop.f32.mrf.mxu0
      %v2824 = vadd.f32 0.0, %v2823
      %v2825 = vpop.f32.mrf.mxu0
      %v2826 = vadd.f32 0.0, %v2825
      %2827 = vmatmul.bf16.gmra.mxu0 %v2762
      %v2828 = vpop.f32.mrf.mxu0
      %v2829 = vadd.f32 0.0, %v2828
      %v2830 = vpop.f32.mrf.mxu0
      %v2831 = vadd.f32 0.0, %v2830
      %2832 = vmatmul.bf16.gmra.mxu0 %v2765
      %v2833 = vpop.f32.mrf.mxu0
      %v2834 = vadd.f32 0.0, %v2833
      %v2835 = vpop.f32.mrf.mxu0
      %v2836 = vadd.f32 0.0, %v2835
      %2837 = vmatmul.bf16.gmra.mxu0 %v2768
      %v2838 = vpop.f32.mrf.mxu0
      %v2839 = vadd.f32 0.0, %v2838
      %v2840 = vpop.f32.mrf.mxu0
      %v2841 = vadd.f32 0.0, %v2840
      %2842 = vmatmul.bf16.gmra.mxu0 %v2771
      %v2843 = vpop.f32.mrf.mxu0
      %v2844 = vadd.f32 0.0, %v2843
      %v2845 = vpop.f32.mrf.mxu0
      %v2846 = vadd.f32 0.0, %v2845
      %2847 = vmatmul.bf16.gmra.mxu0 %v2774
      %v2848 = vpop.f32.mrf.mxu0
      %v2849 = vadd.f32 0.0, %v2848
      %v2850 = vpop.f32.mrf.mxu0
      %v2851 = vadd.f32 0.0, %v2850
      %2852 = vmatmul.bf16.gmra.mxu0 %v2777
      %v2853 = vpop.f32.mrf.mxu0
      %v2854 = vadd.f32 0.0, %v2853
      %v2855 = vpop.f32.mrf.mxu0
      %v2856 = vadd.f32 0.0, %v2855
      %2857 = vmatmul.bf16.gmra.mxu0 %v2780
      %v2858 = vpop.f32.mrf.mxu0
      %v2859 = vadd.f32 0.0, %v2858
      %v2860 = vpop.f32.mrf.mxu0
      %v2861 = vadd.f32 0.0, %v2860
      %2862 = vmatmul.bf16.gmra.mxu0 %v2783
      %v2863 = vpop.f32.mrf.mxu0
      %v2864 = vadd.f32 0.0, %v2863
      %v2865 = vpop.f32.mrf.mxu0
      %v2866 = vadd.f32 0.0, %v2865
      %2867 = vmatmul.bf16.gmra.mxu0 %v2786
      %v2868 = vpop.f32.mrf.mxu0
      %v2869 = vadd.f32 0.0, %v2868
      %v2870 = vpop.f32.mrf.mxu0
      %v2871 = vadd.f32 0.0, %v2870
      %2872 = vmatmul.bf16.gmra.mxu0 %v2789
      %v2873 = vpop.f32.mrf.mxu0
      %v2874 = vadd.f32 0.0, %v2873
      %v2875 = vpop.f32.mrf.mxu0
      %v2876 = vadd.f32 0.0, %v2875
      %2877 = vmatmul.bf16.gmra.mxu0 %v2792
      %v2878 = vpop.f32.mrf.mxu0
      %v2879 = vadd.f32 0.0, %v2878
      %v2880 = vpop.f32.mrf.mxu0
      %v2881 = vadd.f32 0.0, %v2880
      %2882 = vmatmul.bf16.gmra.mxu0 %v2795
      %v2883 = vpop.f32.mrf.mxu0
      %v2884 = vadd.f32 0.0, %v2883
      %v2885 = vpop.f32.mrf.mxu0
      %v2886 = vadd.f32 0.0, %v2885
      %2887 = vmatmul.bf16.gmra.mxu0 %v2798
      %v2888 = vpop.f32.mrf.mxu0
      %v2889 = vadd.f32 0.0, %v2888
      %v2890 = vpop.f32.mrf.mxu0
      %v2891 = vadd.f32 0.0, %v2890
      %2892 = vdwg.mxu0
      %2893 = vmatpush.bf16.msra.mxu0 0
      %2894 = vmatpush.bf16.msra.mxu0 0
      %2895 = vmatpush.bf16.msra.mxu0 0
      %2896 = vmatpush.bf16.msra.mxu0 0
      %2897 = vmatpush.bf16.msra.mxu0 0
      %2898 = vmatpush.bf16.msra.mxu0 0
      %2899 = vmatpush.bf16.msra.mxu0 0
      %2900 = vmatpush.bf16.msra.mxu0 %v2802
      %2901 = vmatmul.bf16.gmra.mxu0 %v2753
      %v2902 = vpop.f32.mrf.mxu0
      %v2903 = vadd.f32 0.0, %v2902
      %v2904 = vpop.f32.mrf.mxu0
      %v2905 = vadd.f32 0.0, %v2904
      %2906 = vmatmul.bf16.gmra.mxu0 %v2756
      %v2907 = vpop.f32.mrf.mxu0
      %v2908 = vadd.f32 0.0, %v2907
      %v2909 = vpop.f32.mrf.mxu0
      %v2910 = vadd.f32 0.0, %v2909
      %2911 = vmatmul.bf16.gmra.mxu0 %v2759
      %v2912 = vpop.f32.mrf.mxu0
      %v2913 = vadd.f32 0.0, %v2912
      %v2914 = vpop.f32.mrf.mxu0
      %v2915 = vadd.f32 0.0, %v2914
      %2916 = vmatmul.bf16.gmra.mxu0 %v2762
      %v2917 = vpop.f32.mrf.mxu0
      %v2918 = vadd.f32 0.0, %v2917
      %v2919 = vpop.f32.mrf.mxu0
      %v2920 = vadd.f32 0.0, %v2919
      %2921 = vmatmul.bf16.gmra.mxu0 %v2765
      %v2922 = vpop.f32.mrf.mxu0
      %v2923 = vadd.f32 0.0, %v2922
      %v2924 = vpop.f32.mrf.mxu0
      %v2925 = vadd.f32 0.0, %v2924
      %2926 = vmatmul.bf16.gmra.mxu0 %v2768
      %v2927 = vpop.f32.mrf.mxu0
      %v2928 = vadd.f32 0.0, %v2927
      %v2929 = vpop.f32.mrf.mxu0
      %v2930 = vadd.f32 0.0, %v2929
      %2931 = vmatmul.bf16.gmra.mxu0 %v2771
      %v2932 = vpop.f32.mrf.mxu0
      %v2933 = vadd.f32 0.0, %v2932
      %v2934 = vpop.f32.mrf.mxu0
      %v2935 = vadd.f32 0.0, %v2934
      %2936 = vmatmul.bf16.gmra.mxu0 %v2774
      %v2937 = vpop.f32.mrf.mxu0
      %v2938 = vadd.f32 0.0, %v2937
      %v2939 = vpop.f32.mrf.mxu0
      %v2940 = vadd.f32 0.0, %v2939
      %2941 = vmatmul.bf16.gmra.mxu0 %v2777
      %v2942 = vpop.f32.mrf.mxu0
      %v2943 = vadd.f32 0.0, %v2942
      %v2944 = vpop.f32.mrf.mxu0
      %v2945 = vadd.f32 0.0, %v2944
      %2946 = vmatmul.bf16.gmra.mxu0 %v2780
      %v2947 = vpop.f32.mrf.mxu0
      %v2948 = vadd.f32 0.0, %v2947
      %v2949 = vpop.f32.mrf.mxu0
      %v2950 = vadd.f32 0.0, %v2949
      %2951 = vmatmul.bf16.gmra.mxu0 %v2783
      %v2952 = vpop.f32.mrf.mxu0
      %v2953 = vadd.f32 0.0, %v2952
      %v2954 = vpop.f32.mrf.mxu0
      %v2955 = vadd.f32 0.0, %v2954
      %2956 = vmatmul.bf16.gmra.mxu0 %v2786
      %v2957 = vpop.f32.mrf.mxu0
      %v2958 = vadd.f32 0.0, %v2957
      %v2959 = vpop.f32.mrf.mxu0
      %v2960 = vadd.f32 0.0, %v2959
      %2961 = vmatmul.bf16.gmra.mxu0 %v2789
      %v2962 = vpop.f32.mrf.mxu0
      %v2963 = vadd.f32 0.0, %v2962
      %v2964 = vpop.f32.mrf.mxu0
      %v2965 = vadd.f32 0.0, %v2964
      %2966 = vmatmul.bf16.gmra.mxu0 %v2792
      %v2967 = vpop.f32.mrf.mxu0
      %v2968 = vadd.f32 0.0, %v2967
      %v2969 = vpop.f32.mrf.mxu0
      %v2970 = vadd.f32 0.0, %v2969
      %2971 = vmatmul.bf16.gmra.mxu0 %v2795
      %v2972 = vpop.f32.mrf.mxu0
      %v2973 = vadd.f32 0.0, %v2972
      %v2974 = vpop.f32.mrf.mxu0
      %v2975 = vadd.f32 0.0, %v2974
      %2976 = vmatmul.bf16.gmra.mxu0 %v2798
      %v2977 = vpop.f32.mrf.mxu0
      %v2978 = vadd.f32 0.0, %v2977
      %v2979 = vpop.f32.mrf.mxu0
      %v2980 = vadd.f32 0.0, %v2979
      %2981 = vdwg.mxu0
      %v2982 = vadd.f32 %v2202, %v2814
      %v2983 = vadd.f32 %v2203, %v2903
      %v2984 = vadd.f32 %v2204, %v2816
      %v2985 = vadd.f32 %v2205, %v2905
      %v2986 = vadd.f32 %v2206, %v2819
      %v2987 = vadd.f32 %v2207, %v2908
      %v2988 = vadd.f32 %v2208, %v2821
      %v2989 = vadd.f32 %v2209, %v2910
      %v2990 = vadd.f32 %v2210, %v2824
      %v2991 = vadd.f32 %v2211, %v2913
      %v2992 = vadd.f32 %v2212, %v2826
      %v2993 = vadd.f32 %v2213, %v2915
      %v2994 = vadd.f32 %v2214, %v2829
      %v2995 = vadd.f32 %v2215, %v2918
      %v2996 = vadd.f32 %v2216, %v2831
      %v2997 = vadd.f32 %v2217, %v2920
      %v2998 = vadd.f32 %v2218, %v2834
      %v2999 = vadd.f32 %v2219, %v2923
      %v3000 = vadd.f32 %v2220, %v2836
      %v3001 = vadd.f32 %v2221, %v2925
      %v3002 = vadd.f32 %v2222, %v2839
      %v3003 = vadd.f32 %v2223, %v2928
      %v3004 = vadd.f32 %v2224, %v2841
      %v3005 = vadd.f32 %v2225, %v2930
      %v3006 = vadd.f32 %v2226, %v2844
      %v3007 = vadd.f32 %v2227, %v2933
      %v3008 = vadd.f32 %v2228, %v2846
      %v3009 = vadd.f32 %v2229, %v2935
      %v3010 = vadd.f32 %v2230, %v2849
      %v3011 = vadd.f32 %v2231, %v2938
      %v3012 = vadd.f32 %v2232, %v2851
      %v3013 = vadd.f32 %v2233, %v2940
      %v3014 = vadd.f32 %v2234, %v2854
      %v3015 = vadd.f32 %v2235, %v2943
      %v3016 = vadd.f32 %v2236, %v2856
      %v3017 = vadd.f32 %v2237, %v2945
      %v3018 = vadd.f32 %v2238, %v2859
      %v3019 = vadd.f32 %v2239, %v2948
      %v3020 = vadd.f32 %v2240, %v2861
      %v3021 = vadd.f32 %v2241, %v2950
      %v3022 = vadd.f32 %v2242, %v2864
      %v3023 = vadd.f32 %v2243, %v2953
      %v3024 = vadd.f32 %v2244, %v2866
      %v3025 = vadd.f32 %v2245, %v2955
      %v3026 = vadd.f32 %v2246, %v2869
      %v3027 = vadd.f32 %v2247, %v2958
      %v3028 = vadd.f32 %v2248, %v2871
      %v3029 = vadd.f32 %v2249, %v2960
      %v3030 = vadd.f32 %v2250, %v2874
      %v3031 = vadd.f32 %v2251, %v2963
      %v3032 = vadd.f32 %v2252, %v2876
      %v3033 = vadd.f32 %v2253, %v2965
      %v3034 = vadd.f32 %v2254, %v2879
      %v3035 = vadd.f32 %v2255, %v2968
      %v3036 = vadd.f32 %v2256, %v2881
      %v3037 = vadd.f32 %v2257, %v2970
      %v3038 = vadd.f32 %v2258, %v2884
      %v3039 = vadd.f32 %v2259, %v2973
      %v3040 = vadd.f32 %v2260, %v2886
      %v3041 = vadd.f32 %v2261, %v2975
      %v3042 = vadd.f32 %v2262, %v2889
      %v3043 = vadd.f32 %v2263, %v2978
      %v3044 = vadd.f32 %v2264, %v2891
      %v3045 = vadd.f32 %v2265, %v2980
      %v3046 = vld [vmem:[%s1853] sm:$0xe]
      %v3047 = vld [vmem:[%s1853 + $0x4] sm:$0xf]
      %v3048 = vld [vmem:[%s1853 + $0x8] sm:$0x1]
      %v3049 = vld [vmem:[%s1853 + $0xc] sm:$0xe]
      %v3050 = vld [vmem:[%s1853 + $0x10] sm:$0xf]
      %v3051 = vld [vmem:[%s1853 + $0x14] sm:$0x1]
      %v3052 = vld [vmem:[%s1853 + $0x18] sm:$0xe]
      %v3053 = vld [vmem:[%s1853 + $0x1c] sm:$0xf]
      %v3054 = vld [vmem:[%s1853 + $0x20] sm:$0x1]
      %v3055 = vld [vmem:[%s1853 + $0x24] sm:$0xe]
      %v3056 = vld [vmem:[%s1853 + $0x28] sm:$0xf]
      %v3057 = vld [vmem:[%s1853 + $0x2c] sm:$0x1]
      %v3058 = vld [vmem:[%s1853 + $0x30] sm:$0xe]
      %v3059 = vld [vmem:[%s1853 + $0x34] sm:$0xf]
      %v3060 = vld [vmem:[%s1853 + $0x38] sm:$0x1]
      %v3061 = vld [vmem:[%s1853 + $0x3c] sm:$0xe]
      %v3062 = vld [vmem:[%s1853 + $0x40] sm:$0xf]
      %v3063 = vld [vmem:[%s1853 + $0x44] sm:$0x1]
      %v3064 = vld [vmem:[%s1853 + $0x48] sm:$0xe]
      %v3065 = vld [vmem:[%s1853 + $0x4c] sm:$0xf]
      %v3066 = vld [vmem:[%s1853 + $0x50] sm:$0x1]
      %v3067 = vld [vmem:[%s1853 + $0x54] sm:$0xe]
      %v3068 = vld [vmem:[%s1853 + $0x58] sm:$0xf]
      %v3069 = vld [vmem:[%s1853 + $0x5c] sm:$0x1]
      %v3070 = vld [vmem:[%s1853 + $0x60] sm:$0xe]
      %v3071 = vld [vmem:[%s1853 + $0x64] sm:$0xf]
      %v3072 = vld [vmem:[%s1853 + $0x68] sm:$0x1]
      %v3073 = vld [vmem:[%s1853 + $0x6c] sm:$0xe]
      %v3074 = vld [vmem:[%s1853 + $0x70] sm:$0xf]
      %v3075 = vld [vmem:[%s1853 + $0x74] sm:$0x1]
      %v3076 = vld [vmem:[%s1853 + $0x78] sm:$0xe]
      %v3077 = vld [vmem:[%s1853 + $0x7c] sm:$0xf]
      %v3078 = vld [vmem:[%s1853 + $0x80] sm:$0x1]
      %v3079 = vld [vmem:[%s1853 + $0x84] sm:$0xe]
      %v3080 = vld [vmem:[%s1853 + $0x88] sm:$0xf]
      %v3081 = vld [vmem:[%s1853 + $0x8c] sm:$0x1]
      %v3082 = vld [vmem:[%s1853 + $0x90] sm:$0xe]
      %v3083 = vld [vmem:[%s1853 + $0x94] sm:$0xf]
      %v3084 = vld [vmem:[%s1853 + $0x98] sm:$0x1]
      %v3085 = vld [vmem:[%s1853 + $0x9c] sm:$0xe]
      %v3086 = vld [vmem:[%s1853 + $0xa0] sm:$0xf]
      %v3087 = vld [vmem:[%s1853 + $0xa4] sm:$0x1]
      %v3088 = vld [vmem:[%s1853 + $0xa8] sm:$0xe]
      %v3089 = vld [vmem:[%s1853 + $0xac] sm:$0xf]
      %v3090 = vld [vmem:[%s1853 + $0xb0] sm:$0x1]
      %v3091 = vld [vmem:[%s1853 + $0xb4] sm:$0xe]
      %v3092 = vld [vmem:[%s1853 + $0xb8] sm:$0xf]
      %v3093 = vld [vmem:[%s1853 + $0xbc] sm:$0x1]
      %v3142 = vrot.slane %v3046, 5
      %v3143 = vrot.slane %v3142, 4
      %v3144 = vrot.slane %v3047, 5
      %v3145 = vsel %vm1389, %v3143, %v3144
      %v3146 = vrot.slane %v3144, 4
      %v3147 = vrot.slane %v3048, 5
      %v3148 = vsel %vm1389, %v3146, %v3147
      %v3149 = vrot.slane %v3049, 5
      %v3150 = vrot.slane %v3149, 4
      %v3151 = vrot.slane %v3050, 5
      %v3152 = vsel %vm1389, %v3150, %v3151
      %v3153 = vrot.slane %v3151, 4
      %v3154 = vrot.slane %v3051, 5
      %v3155 = vsel %vm1389, %v3153, %v3154
      %v3156 = vrot.slane %v3052, 5
      %v3157 = vrot.slane %v3156, 4
      %v3158 = vrot.slane %v3053, 5
      %v3159 = vsel %vm1389, %v3157, %v3158
      %v3160 = vrot.slane %v3158, 4
      %v3161 = vrot.slane %v3054, 5
      %v3162 = vsel %vm1389, %v3160, %v3161
      %v3163 = vrot.slane %v3055, 5
      %v3164 = vrot.slane %v3163, 4
      %v3165 = vrot.slane %v3056, 5
      %v3166 = vsel %vm1389, %v3164, %v3165
      %v3167 = vrot.slane %v3165, 4
      %v3168 = vrot.slane %v3057, 5
      %v3169 = vsel %vm1389, %v3167, %v3168
      %v3170 = vrot.slane %v3058, 5
      %v3171 = vrot.slane %v3170, 4
      %v3172 = vrot.slane %v3059, 5
      %v3173 = vsel %vm1389, %v3171, %v3172
      %v3174 = vrot.slane %v3172, 4
      %v3175 = vrot.slane %v3060, 5
      %v3176 = vsel %vm1389, %v3174, %v3175
      %v3177 = vrot.slane %v3061, 5
      %v3178 = vrot.slane %v3177, 4
      %v3179 = vrot.slane %v3062, 5
      %v3180 = vsel %vm1389, %v3178, %v3179
      %v3181 = vrot.slane %v3179, 4
      %v3182 = vrot.slane %v3063, 5
      %v3183 = vsel %vm1389, %v3181, %v3182
      %v3184 = vrot.slane %v3064, 5
      %v3185 = vrot.slane %v3184, 4
      %v3186 = vrot.slane %v3065, 5
      %v3187 = vsel %vm1389, %v3185, %v3186
      %v3188 = vrot.slane %v3186, 4
      %v3189 = vrot.slane %v3066, 5
      %v3190 = vsel %vm1389, %v3188, %v3189
      %v3191 = vrot.slane %v3067, 5
      %v3192 = vrot.slane %v3191, 4
      %v3193 = vrot.slane %v3068, 5
      %v3194 = vsel %vm1389, %v3192, %v3193
      %v3195 = vrot.slane %v3193, 4
      %v3196 = vrot.slane %v3069, 5
      %v3197 = vsel %vm1389, %v3195, %v3196
      %v3198 = vrot.slane %v3070, 5
      %v3199 = vrot.slane %v3198, 4
      %v3200 = vrot.slane %v3071, 5
      %v3201 = vsel %vm1389, %v3199, %v3200
      %v3202 = vrot.slane %v3200, 4
      %v3203 = vrot.slane %v3072, 5
      %v3204 = vsel %vm1389, %v3202, %v3203
      %v3205 = vrot.slane %v3073, 5
      %v3206 = vrot.slane %v3205, 4
      %v3207 = vrot.slane %v3074, 5
      %v3208 = vsel %vm1389, %v3206, %v3207
      %v3209 = vrot.slane %v3207, 4
      %v3210 = vrot.slane %v3075, 5
      %v3211 = vsel %vm1389, %v3209, %v3210
      %v3212 = vrot.slane %v3076, 5
      %v3213 = vrot.slane %v3212, 4
      %v3214 = vrot.slane %v3077, 5
      %v3215 = vsel %vm1389, %v3213, %v3214
      %v3216 = vrot.slane %v3214, 4
      %v3217 = vrot.slane %v3078, 5
      %v3218 = vsel %vm1389, %v3216, %v3217
      %v3219 = vrot.slane %v3079, 5
      %v3220 = vrot.slane %v3219, 4
      %v3221 = vrot.slane %v3080, 5
      %v3222 = vsel %vm1389, %v3220, %v3221
      %v3223 = vrot.slane %v3221, 4
      %v3224 = vrot.slane %v3081, 5
      %v3225 = vsel %vm1389, %v3223, %v3224
      %v3226 = vrot.slane %v3082, 5
      %v3227 = vrot.slane %v3226, 4
      %v3228 = vrot.slane %v3083, 5
      %v3229 = vsel %vm1389, %v3227, %v3228
      %v3230 = vrot.slane %v3228, 4
      %v3231 = vrot.slane %v3084, 5
      %v3232 = vsel %vm1389, %v3230, %v3231
      %v3233 = vrot.slane %v3085, 5
      %v3234 = vrot.slane %v3233, 4
      %v3235 = vrot.slane %v3086, 5
      %v3236 = vsel %vm1389, %v3234, %v3235
      %v3237 = vrot.slane %v3235, 4
      %v3238 = vrot.slane %v3087, 5
      %v3239 = vsel %vm1389, %v3237, %v3238
      %v3240 = vrot.slane %v3088, 5
      %v3241 = vrot.slane %v3240, 4
      %v3242 = vrot.slane %v3089, 5
      %v3243 = vsel %vm1389, %v3241, %v3242
      %v3244 = vrot.slane %v3242, 4
      %v3245 = vrot.slane %v3090, 5
      %v3246 = vsel %vm1389, %v3244, %v3245
      %v3247 = vrot.slane %v3091, 5
      %v3248 = vrot.slane %v3247, 4
      %v3249 = vrot.slane %v3092, 5
      %v3250 = vsel %vm1389, %v3248, %v3249
      %v3251 = vrot.slane %v3249, 4
      %v3252 = vrot.slane %v3093, 5
      %v3253 = vsel %vm1389, %v3251, %v3252
      %s3254 = scalar_lea.vmem %s1, 20
      %v3255 = vld [vmem:[%s3254] sm:$0xf]
      %v3256 = vunpack.c.l.b16 %v3145
      %v3257 = vunpack.c.l.b16 %v3148
      %v3258 = vunpack.c.l.b16 %v3152
      %v3259 = vunpack.c.l.b16 %v3155
      %v3260 = vunpack.c.l.b16 %v3159
      %v3261 = vunpack.c.l.b16 %v3162
      %v3262 = vunpack.c.l.b16 %v3166
      %v3263 = vunpack.c.l.b16 %v3169
      %v3264 = vunpack.c.l.b16 %v3173
      %v3265 = vunpack.c.l.b16 %v3176
      %v3266 = vunpack.c.l.b16 %v3180
      %v3267 = vunpack.c.l.b16 %v3183
      %v3268 = vunpack.c.l.b16 %v3187
      %v3269 = vunpack.c.l.b16 %v3190
      %v3270 = vunpack.c.l.b16 %v3194
      %v3271 = vunpack.c.l.b16 %v3197
      %v3272 = vunpack.c.l.b16 %v3201
      %v3273 = vunpack.c.l.b16 %v3204
      %v3274 = vunpack.c.l.b16 %v3208
      %v3275 = vunpack.c.l.b16 %v3211
      %v3276 = vunpack.c.l.b16 %v3215
      %v3277 = vunpack.c.l.b16 %v3218
      %v3278 = vunpack.c.l.b16 %v3222
      %v3279 = vunpack.c.l.b16 %v3225
      %v3280 = vunpack.c.l.b16 %v3229
      %v3281 = vunpack.c.l.b16 %v3232
      %v3282 = vunpack.c.l.b16 %v3236
      %v3283 = vunpack.c.l.b16 %v3239
      %v3284 = vunpack.c.l.b16 %v3243
      %v3285 = vunpack.c.l.b16 %v3246
      %v3286 = vunpack.c.l.b16 %v3250
      %v3287 = vunpack.c.l.b16 %v3253
      %v3288 = vpack.c.b16 %v3257, %v3256
      %v3289 = vpack.c.b16 %v3259, %v3258
      %v3290 = vpack.c.b16 %v3261, %v3260
      %v3291 = vpack.c.b16 %v3263, %v3262
      %v3292 = vpack.c.b16 %v3265, %v3264
      %v3293 = vpack.c.b16 %v3267, %v3266
      %v3294 = vpack.c.b16 %v3269, %v3268
      %v3295 = vpack.c.b16 %v3271, %v3270
      %v3296 = vpack.c.b16 %v3273, %v3272
      %v3297 = vpack.c.b16 %v3275, %v3274
      %v3298 = vpack.c.b16 %v3277, %v3276
      %v3299 = vpack.c.b16 %v3279, %v3278
      %v3300 = vpack.c.b16 %v3281, %v3280
      %v3301 = vpack.c.b16 %v3283, %v3282
      %v3302 = vpack.c.b16 %v3285, %v3284
      %v3303 = vpack.c.b16 %v3287, %v3286
      %3305 = vst [vmem:[#allocation1] ss:$4 sm:$0xff] %v3255
      %v3306 = vld.sshfl [vmem:[#allocation1] sm:$0xff pattern:$0x73625140]
      %v3307 = vld.sshfl [vmem:[#allocation1 + $0x8] sm:$0xff pattern:$0x73625140]
      %v3309 = vsel %vm745, %v3288, 0
      %v3312 = vsel %vm745, %v3289, 0
      %v3315 = vsel %vm745, %v3290, 0
      %v3318 = vsel %vm745, %v3291, 0
      %v3321 = vsel %vm745, %v3292, 0
      %v3324 = vsel %vm745, %v3293, 0
      %v3327 = vsel %vm745, %v3294, 0
      %v3330 = vsel %vm745, %v3295, 0
      %v3333 = vsel %vm745, %v3296, 0
      %v3336 = vsel %vm745, %v3297, 0
      %v3339 = vsel %vm745, %v3298, 0
      %v3342 = vsel %vm745, %v3299, 0
      %v3345 = vsel %vm745, %v3300, 0
      %v3348 = vsel %vm745, %v3301, 0
      %v3351 = vsel %vm745, %v3302, 0
      %v3354 = vsel %vm745, %v3303, 0
      %v3356 = vsel %vm794, %v3306, 0
      %v3358 = vsel %vm794, %v3307, 0
      %3360 = vmatpush.bf16.msra.mxu0 0
      %3361 = vmatpush.bf16.msra.mxu0 0
      %3362 = vmatpush.bf16.msra.mxu0 0
      %3363 = vmatpush.bf16.msra.mxu0 0
      %3364 = vmatpush.bf16.msra.mxu0 0
      %3365 = vmatpush.bf16.msra.mxu0 0
      %3366 = vmatpush.bf16.msra.mxu0 0
      %3367 = vmatpush.bf16.msra.mxu0 %v3356
      %3368 = vmatmul.bf16.gmra.mxu0 %v3309
      %v3369 = vpop.f32.mrf.mxu0
      %v3370 = vadd.f32 0.0, %v3369
      %v3371 = vpop.f32.mrf.mxu0
      %v3372 = vadd.f32 0.0, %v3371
      %3373 = vmatmul.bf16.gmra.mxu0 %v3312
      %v3374 = vpop.f32.mrf.mxu0
      %v3375 = vadd.f32 0.0, %v3374
      %v3376 = vpop.f32.mrf.mxu0
      %v3377 = vadd.f32 0.0, %v3376
      %3378 = vmatmul.bf16.gmra.mxu0 %v3315
      %v3379 = vpop.f32.mrf.mxu0
      %v3380 = vadd.f32 0.0, %v3379
      %v3381 = vpop.f32.mrf.mxu0
      %v3382 = vadd.f32 0.0, %v3381
      %3383 = vmatmul.bf16.gmra.mxu0 %v3318
      %v3384 = vpop.f32.mrf.mxu0
      %v3385 = vadd.f32 0.0, %v3384
      %v3386 = vpop.f32.mrf.mxu0
      %v3387 = vadd.f32 0.0, %v3386
      %3388 = vmatmul.bf16.gmra.mxu0 %v3321
      %v3389 = vpop.f32.mrf.mxu0
      %v3390 = vadd.f32 0.0, %v3389
      %v3391 = vpop.f32.mrf.mxu0
      %v3392 = vadd.f32 0.0, %v3391
      %3393 = vmatmul.bf16.gmra.mxu0 %v3324
      %v3394 = vpop.f32.mrf.mxu0
      %v3395 = vadd.f32 0.0, %v3394
      %v3396 = vpop.f32.mrf.mxu0
      %v3397 = vadd.f32 0.0, %v3396
      %3398 = vmatmul.bf16.gmra.mxu0 %v3327
      %v3399 = vpop.f32.mrf.mxu0
      %v3400 = vadd.f32 0.0, %v3399
      %v3401 = vpop.f32.mrf.mxu0
      %v3402 = vadd.f32 0.0, %v3401
      %3403 = vmatmul.bf16.gmra.mxu0 %v3330
      %v3404 = vpop.f32.mrf.mxu0
      %v3405 = vadd.f32 0.0, %v3404
      %v3406 = vpop.f32.mrf.mxu0
      %v3407 = vadd.f32 0.0, %v3406
      %3408 = vmatmul.bf16.gmra.mxu0 %v3333
      %v3409 = vpop.f32.mrf.mxu0
      %v3410 = vadd.f32 0.0, %v3409
      %v3411 = vpop.f32.mrf.mxu0
      %v3412 = vadd.f32 0.0, %v3411
      %3413 = vmatmul.bf16.gmra.mxu0 %v3336
      %v3414 = vpop.f32.mrf.mxu0
      %v3415 = vadd.f32 0.0, %v3414
      %v3416 = vpop.f32.mrf.mxu0
      %v3417 = vadd.f32 0.0, %v3416
      %3418 = vmatmul.bf16.gmra.mxu0 %v3339
      %v3419 = vpop.f32.mrf.mxu0
      %v3420 = vadd.f32 0.0, %v3419
      %v3421 = vpop.f32.mrf.mxu0
      %v3422 = vadd.f32 0.0, %v3421
      %3423 = vmatmul.bf16.gmra.mxu0 %v3342
      %v3424 = vpop.f32.mrf.mxu0
      %v3425 = vadd.f32 0.0, %v3424
      %v3426 = vpop.f32.mrf.mxu0
      %v3427 = vadd.f32 0.0, %v3426
      %3428 = vmatmul.bf16.gmra.mxu0 %v3345
      %v3429 = vpop.f32.mrf.mxu0
      %v3430 = vadd.f32 0.0, %v3429
      %v3431 = vpop.f32.mrf.mxu0
      %v3432 = vadd.f32 0.0, %v3431
      %3433 = vmatmul.bf16.gmra.mxu0 %v3348
      %v3434 = vpop.f32.mrf.mxu0
      %v3435 = vadd.f32 0.0, %v3434
      %v3436 = vpop.f32.mrf.mxu0
      %v3437 = vadd.f32 0.0, %v3436
      %3438 = vmatmul.bf16.gmra.mxu0 %v3351
      %v3439 = vpop.f32.mrf.mxu0
      %v3440 = vadd.f32 0.0, %v3439
      %v3441 = vpop.f32.mrf.mxu0
      %v3442 = vadd.f32 0.0, %v3441
      %3443 = vmatmul.bf16.gmra.mxu0 %v3354
      %v3444 = vpop.f32.mrf.mxu0
      %v3445 = vadd.f32 0.0, %v3444
      %v3446 = vpop.f32.mrf.mxu0
      %v3447 = vadd.f32 0.0, %v3446
      %3448 = vdwg.mxu0
      %3449 = vmatpush.bf16.msra.mxu0 0
      %3450 = vmatpush.bf16.msra.mxu0 0
      %3451 = vmatpush.bf16.msra.mxu0 0
      %3452 = vmatpush.bf16.msra.mxu0 0
      %3453 = vmatpush.bf16.msra.mxu0 0
      %3454 = vmatpush.bf16.msra.mxu0 0
      %3455 = vmatpush.bf16.msra.mxu0 0
      %3456 = vmatpush.bf16.msra.mxu0 %v3358
      %3457 = vmatmul.bf16.gmra.mxu0 %v3309
      %v3458 = vpop.f32.mrf.mxu0
      %v3459 = vadd.f32 0.0, %v3458
      %v3460 = vpop.f32.mrf.mxu0
      %v3461 = vadd.f32 0.0, %v3460
      %3462 = vmatmul.bf16.gmra.mxu0 %v3312
      %v3463 = vpop.f32.mrf.mxu0
      %v3464 = vadd.f32 0.0, %v3463
      %v3465 = vpop.f32.mrf.mxu0
      %v3466 = vadd.f32 0.0, %v3465
      %3467 = vmatmul.bf16.gmra.mxu0 %v3315
      %v3468 = vpop.f32.mrf.mxu0
      %v3469 = vadd.f32 0.0, %v3468
      %v3470 = vpop.f32.mrf.mxu0
      %v3471 = vadd.f32 0.0, %v3470
      %3472 = vmatmul.bf16.gmra.mxu0 %v3318
      %v3473 = vpop.f32.mrf.mxu0
      %v3474 = vadd.f32 0.0, %v3473
      %v3475 = vpop.f32.mrf.mxu0
      %v3476 = vadd.f32 0.0, %v3475
      %3477 = vmatmul.bf16.gmra.mxu0 %v3321
      %v3478 = vpop.f32.mrf.mxu0
      %v3479 = vadd.f32 0.0, %v3478
      %v3480 = vpop.f32.mrf.mxu0
      %v3481 = vadd.f32 0.0, %v3480
      %3482 = vmatmul.bf16.gmra.mxu0 %v3324
      %v3483 = vpop.f32.mrf.mxu0
      %v3484 = vadd.f32 0.0, %v3483
      %v3485 = vpop.f32.mrf.mxu0
      %v3486 = vadd.f32 0.0, %v3485
      %3487 = vmatmul.bf16.gmra.mxu0 %v3327
      %v3488 = vpop.f32.mrf.mxu0
      %v3489 = vadd.f32 0.0, %v3488
      %v3490 = vpop.f32.mrf.mxu0
      %v3491 = vadd.f32 0.0, %v3490
      %3492 = vmatmul.bf16.gmra.mxu0 %v3330
      %v3493 = vpop.f32.mrf.mxu0
      %v3494 = vadd.f32 0.0, %v3493
      %v3495 = vpop.f32.mrf.mxu0
      %v3496 = vadd.f32 0.0, %v3495
      %3497 = vmatmul.bf16.gmra.mxu0 %v3333
      %v3498 = vpop.f32.mrf.mxu0
      %v3499 = vadd.f32 0.0, %v3498
      %v3500 = vpop.f32.mrf.mxu0
      %v3501 = vadd.f32 0.0, %v3500
      %3502 = vmatmul.bf16.gmra.mxu0 %v3336
      %v3503 = vpop.f32.mrf.mxu0
      %v3504 = vadd.f32 0.0, %v3503
      %v3505 = vpop.f32.mrf.mxu0
      %v3506 = vadd.f32 0.0, %v3505
      %3507 = vmatmul.bf16.gmra.mxu0 %v3339
      %v3508 = vpop.f32.mrf.mxu0
      %v3509 = vadd.f32 0.0, %v3508
      %v3510 = vpop.f32.mrf.mxu0
      %v3511 = vadd.f32 0.0, %v3510
      %3512 = vmatmul.bf16.gmra.mxu0 %v3342
      %v3513 = vpop.f32.mrf.mxu0
      %v3514 = vadd.f32 0.0, %v3513
      %v3515 = vpop.f32.mrf.mxu0
      %v3516 = vadd.f32 0.0, %v3515
      %3517 = vmatmul.bf16.gmra.mxu0 %v3345
      %v3518 = vpop.f32.mrf.mxu0
      %v3519 = vadd.f32 0.0, %v3518
      %v3520 = vpop.f32.mrf.mxu0
      %v3521 = vadd.f32 0.0, %v3520
      %3522 = vmatmul.bf16.gmra.mxu0 %v3348
      %v3523 = vpop.f32.mrf.mxu0
      %v3524 = vadd.f32 0.0, %v3523
      %v3525 = vpop.f32.mrf.mxu0
      %v3526 = vadd.f32 0.0, %v3525
      %3527 = vmatmul.bf16.gmra.mxu0 %v3351
      %v3528 = vpop.f32.mrf.mxu0
      %v3529 = vadd.f32 0.0, %v3528
      %v3530 = vpop.f32.mrf.mxu0
      %v3531 = vadd.f32 0.0, %v3530
      %3532 = vmatmul.bf16.gmra.mxu0 %v3354
      %v3533 = vpop.f32.mrf.mxu0
      %v3534 = vadd.f32 0.0, %v3533
      %v3535 = vpop.f32.mrf.mxu0
      %v3536 = vadd.f32 0.0, %v3535
      %3537 = vdwg.mxu0
      %v3538 = vadd.f32 %v2982, %v3370
      %v3539 = vadd.f32 %v2983, %v3459
      %v3540 = vadd.f32 %v2984, %v3372
      %v3541 = vadd.f32 %v2985, %v3461
      %v3542 = vadd.f32 %v2986, %v3375
      %v3543 = vadd.f32 %v2987, %v3464
      %v3544 = vadd.f32 %v2988, %v3377
      %v3545 = vadd.f32 %v2989, %v3466
      %v3546 = vadd.f32 %v2990, %v3380
      %v3547 = vadd.f32 %v2991, %v3469
      %v3548 = vadd.f32 %v2992, %v3382
      %v3549 = vadd.f32 %v2993, %v3471
      %v3550 = vadd.f32 %v2994, %v3385
      %v3551 = vadd.f32 %v2995, %v3474
      %v3552 = vadd.f32 %v2996, %v3387
      %v3553 = vadd.f32 %v2997, %v3476
      %v3554 = vadd.f32 %v2998, %v3390
      %v3555 = vadd.f32 %v2999, %v3479
      %v3556 = vadd.f32 %v3000, %v3392
      %v3557 = vadd.f32 %v3001, %v3481
      %v3558 = vadd.f32 %v3002, %v3395
      %v3559 = vadd.f32 %v3003, %v3484
      %v3560 = vadd.f32 %v3004, %v3397
      %v3561 = vadd.f32 %v3005, %v3486
      %v3562 = vadd.f32 %v3006, %v3400
      %v3563 = vadd.f32 %v3007, %v3489
      %v3564 = vadd.f32 %v3008, %v3402
      %v3565 = vadd.f32 %v3009, %v3491
      %v3566 = vadd.f32 %v3010, %v3405
      %v3567 = vadd.f32 %v3011, %v3494
      %v3568 = vadd.f32 %v3012, %v3407
      %v3569 = vadd.f32 %v3013, %v3496
      %v3570 = vadd.f32 %v3014, %v3410
      %v3571 = vadd.f32 %v3015, %v3499
      %v3572 = vadd.f32 %v3016, %v3412
      %v3573 = vadd.f32 %v3017, %v3501
      %v3574 = vadd.f32 %v3018, %v3415
      %v3575 = vadd.f32 %v3019, %v3504
      %v3576 = vadd.f32 %v3020, %v3417
      %v3577 = vadd.f32 %v3021, %v3506
      %v3578 = vadd.f32 %v3022, %v3420
      %v3579 = vadd.f32 %v3023, %v3509
      %v3580 = vadd.f32 %v3024, %v3422
      %v3581 = vadd.f32 %v3025, %v3511
      %v3582 = vadd.f32 %v3026, %v3425
      %v3583 = vadd.f32 %v3027, %v3514
      %v3584 = vadd.f32 %v3028, %v3427
      %v3585 = vadd.f32 %v3029, %v3516
      %v3586 = vadd.f32 %v3030, %v3430
      %v3587 = vadd.f32 %v3031, %v3519
      %v3588 = vadd.f32 %v3032, %v3432
      %v3589 = vadd.f32 %v3033, %v3521
      %v3590 = vadd.f32 %v3034, %v3435
      %v3591 = vadd.f32 %v3035, %v3524
      %v3592 = vadd.f32 %v3036, %v3437
      %v3593 = vadd.f32 %v3037, %v3526
      %v3594 = vadd.f32 %v3038, %v3440
      %v3595 = vadd.f32 %v3039, %v3529
      %v3596 = vadd.f32 %v3040, %v3442
      %v3597 = vadd.f32 %v3041, %v3531
      %v3598 = vadd.f32 %v3042, %v3445
      %v3599 = vadd.f32 %v3043, %v3534
      %v3600 = vadd.f32 %v3044, %v3447
      %v3601 = vadd.f32 %v3045, %v3536
      %s3602 = sadd.s32 %s251, 2
      %s3603 = smul.u32 %s3602, 3
      %s3604 = smul.addr %s3603, 4
      %s3605 = scalar_lea.vmem %s238, %s3604
      %v3606 = vld [vmem:[%s3605] sm:$0xf]
      %v3607 = vld [vmem:[%s3605 + $0x4] sm:$0xf]
      %v3608 = vld [vmem:[%s3605 + $0xc] sm:$0xf]
      %v3609 = vld [vmem:[%s3605 + $0x10] sm:$0xf]
      %v3610 = vld [vmem:[%s3605 + $0x18] sm:$0xf]
      %v3611 = vld [vmem:[%s3605 + $0x1c] sm:$0xf]
      %v3612 = vld [vmem:[%s3605 + $0x24] sm:$0xf]
      %v3613 = vld [vmem:[%s3605 + $0x28] sm:$0xf]
      %v3614 = vld [vmem:[%s3605 + $0x30] sm:$0xf]
      %v3615 = vld [vmem:[%s3605 + $0x34] sm:$0xf]
      %v3616 = vld [vmem:[%s3605 + $0x3c] sm:$0xf]
      %v3617 = vld [vmem:[%s3605 + $0x40] sm:$0xf]
      %v3618 = vld [vmem:[%s3605 + $0x48] sm:$0xf]
      %v3619 = vld [vmem:[%s3605 + $0x4c] sm:$0xf]
      %v3620 = vld [vmem:[%s3605 + $0x54] sm:$0xf]
      %v3621 = vld [vmem:[%s3605 + $0x58] sm:$0xf]
      %v3622 = vld [vmem:[%s3605 + $0x60] sm:$0xf]
      %v3623 = vld [vmem:[%s3605 + $0x64] sm:$0xf]
      %v3624 = vld [vmem:[%s3605 + $0x6c] sm:$0xf]
      %v3625 = vld [vmem:[%s3605 + $0x70] sm:$0xf]
      %v3626 = vld [vmem:[%s3605 + $0x78] sm:$0xf]
      %v3627 = vld [vmem:[%s3605 + $0x7c] sm:$0xf]
      %v3628 = vld [vmem:[%s3605 + $0x84] sm:$0xf]
      %v3629 = vld [vmem:[%s3605 + $0x88] sm:$0xf]
      %v3630 = vld [vmem:[%s3605 + $0x90] sm:$0xf]
      %v3631 = vld [vmem:[%s3605 + $0x94] sm:$0xf]
      %v3632 = vld [vmem:[%s3605 + $0x9c] sm:$0xf]
      %v3633 = vld [vmem:[%s3605 + $0xa0] sm:$0xf]
      %v3634 = vld [vmem:[%s3605 + $0xa8] sm:$0xf]
      %v3635 = vld [vmem:[%s3605 + $0xac] sm:$0xf]
      %v3636 = vld [vmem:[%s3605 + $0xb4] sm:$0xf]
      %v3637 = vld [vmem:[%s3605 + $0xb8] sm:$0xf]
      %s3638 = scalar_lea.vmem %s1, 24
      %v3639 = vld [vmem:[%s3638] sm:$0xf]
      %v3672 = vunpack.c.l.b16 %v3606
      %v3673 = vunpack.c.l.b16 %v3607
      %v3674 = vunpack.c.l.b16 %v3608
      %v3675 = vunpack.c.l.b16 %v3609
      %v3676 = vunpack.c.l.b16 %v3610
      %v3677 = vunpack.c.l.b16 %v3611
      %v3678 = vunpack.c.l.b16 %v3612
      %v3679 = vunpack.c.l.b16 %v3613
      %v3680 = vunpack.c.l.b16 %v3614
      %v3681 = vunpack.c.l.b16 %v3615
      %v3682 = vunpack.c.l.b16 %v3616
      %v3683 = vunpack.c.l.b16 %v3617
      %v3684 = vunpack.c.l.b16 %v3618
      %v3685 = vunpack.c.l.b16 %v3619
      %v3686 = vunpack.c.l.b16 %v3620
      %v3687 = vunpack.c.l.b16 %v3621
      %v3688 = vunpack.c.l.b16 %v3622
      %v3689 = vunpack.c.l.b16 %v3623
      %v3690 = vunpack.c.l.b16 %v3624
      %v3691 = vunpack.c.l.b16 %v3625
      %v3692 = vunpack.c.l.b16 %v3626
      %v3693 = vunpack.c.l.b16 %v3627
      %v3694 = vunpack.c.l.b16 %v3628
      %v3695 = vunpack.c.l.b16 %v3629
      %v3696 = vunpack.c.l.b16 %v3630
      %v3697 = vunpack.c.l.b16 %v3631
      %v3698 = vunpack.c.l.b16 %v3632
      %v3699 = vunpack.c.l.b16 %v3633
      %v3700 = vunpack.c.l.b16 %v3634
      %v3701 = vunpack.c.l.b16 %v3635
      %v3702 = vunpack.c.l.b16 %v3636
      %v3703 = vunpack.c.l.b16 %v3637
      %v3704 = vpack.c.b16 %v3673, %v3672
      %v3705 = vpack.c.b16 %v3675, %v3674
      %v3706 = vpack.c.b16 %v3677, %v3676
      %v3707 = vpack.c.b16 %v3679, %v3678
      %v3708 = vpack.c.b16 %v3681, %v3680
      %v3709 = vpack.c.b16 %v3683, %v3682
      %v3710 = vpack.c.b16 %v3685, %v3684
      %v3711 = vpack.c.b16 %v3687, %v3686
      %v3712 = vpack.c.b16 %v3689, %v3688
      %v3713 = vpack.c.b16 %v3691, %v3690
      %v3714 = vpack.c.b16 %v3693, %v3692
      %v3715 = vpack.c.b16 %v3695, %v3694
      %v3716 = vpack.c.b16 %v3697, %v3696
      %v3717 = vpack.c.b16 %v3699, %v3698
      %v3718 = vpack.c.b16 %v3701, %v3700
      %v3719 = vpack.c.b16 %v3703, %v3702
      %3721 = vst [vmem:[#allocation1] ss:$4 sm:$0xff] %v3639
      %v3722 = vld.sshfl [vmem:[#allocation1] sm:$0xff pattern:$0x73625140]
      %v3723 = vld.sshfl [vmem:[#allocation1 + $0x8] sm:$0xff pattern:$0x73625140]
      %v3725 = vsel %vm745, %v3704, 0
      %v3728 = vsel %vm745, %v3705, 0
      %v3731 = vsel %vm745, %v3706, 0
      %v3734 = vsel %vm745, %v3707, 0
      %v3737 = vsel %vm745, %v3708, 0
      %v3740 = vsel %vm745, %v3709, 0
      %v3743 = vsel %vm745, %v3710, 0
      %v3746 = vsel %vm745, %v3711, 0
      %v3749 = vsel %vm745, %v3712, 0
      %v3752 = vsel %vm745, %v3713, 0
      %v3755 = vsel %vm745, %v3714, 0
      %v3758 = vsel %vm745, %v3715, 0
      %v3761 = vsel %vm745, %v3716, 0
      %v3764 = vsel %vm745, %v3717, 0
      %v3767 = vsel %vm745, %v3718, 0
      %v3770 = vsel %vm745, %v3719, 0
      %v3772 = vsel %vm794, %v3722, 0
      %v3774 = vsel %vm794, %v3723, 0
      %3776 = vmatpush.bf16.msra.mxu0 0
      %3777 = vmatpush.bf16.msra.mxu0 0
      %3778 = vmatpush.bf16.msra.mxu0 0
      %3779 = vmatpush.bf16.msra.mxu0 0
      %3780 = vmatpush.bf16.msra.mxu0 0
      %3781 = vmatpush.bf16.msra.mxu0 0
      %3782 = vmatpush.bf16.msra.mxu0 0
      %3783 = vmatpush.bf16.msra.mxu0 %v3772
      %3784 = vmatmul.bf16.gmra.mxu0 %v3725
      %v3785 = vpop.f32.mrf.mxu0
      %v3786 = vadd.f32 0.0, %v3785
      %v3787 = vpop.f32.mrf.mxu0
      %v3788 = vadd.f32 0.0, %v3787
      %3789 = vmatmul.bf16.gmra.mxu0 %v3728
      %v3790 = vpop.f32.mrf.mxu0
      %v3791 = vadd.f32 0.0, %v3790
      %v3792 = vpop.f32.mrf.mxu0
      %v3793 = vadd.f32 0.0, %v3792
      %3794 = vmatmul.bf16.gmra.mxu0 %v3731
      %v3795 = vpop.f32.mrf.mxu0
      %v3796 = vadd.f32 0.0, %v3795
      %v3797 = vpop.f32.mrf.mxu0
      %v3798 = vadd.f32 0.0, %v3797
      %3799 = vmatmul.bf16.gmra.mxu0 %v3734
      %v3800 = vpop.f32.mrf.mxu0
      %v3801 = vadd.f32 0.0, %v3800
      %v3802 = vpop.f32.mrf.mxu0
      %v3803 = vadd.f32 0.0, %v3802
      %3804 = vmatmul.bf16.gmra.mxu0 %v3737
      %v3805 = vpop.f32.mrf.mxu0
      %v3806 = vadd.f32 0.0, %v3805
      %v3807 = vpop.f32.mrf.mxu0
      %v3808 = vadd.f32 0.0, %v3807
      %3809 = vmatmul.bf16.gmra.mxu0 %v3740
      %v3810 = vpop.f32.mrf.mxu0
      %v3811 = vadd.f32 0.0, %v3810
      %v3812 = vpop.f32.mrf.mxu0
      %v3813 = vadd.f32 0.0, %v3812
      %3814 = vmatmul.bf16.gmra.mxu0 %v3743
      %v3815 = vpop.f32.mrf.mxu0
      %v3816 = vadd.f32 0.0, %v3815
      %v3817 = vpop.f32.mrf.mxu0
      %v3818 = vadd.f32 0.0, %v3817
      %3819 = vmatmul.bf16.gmra.mxu0 %v3746
      %v3820 = vpop.f32.mrf.mxu0
      %v3821 = vadd.f32 0.0, %v3820
      %v3822 = vpop.f32.mrf.mxu0
      %v3823 = vadd.f32 0.0, %v3822
      %3824 = vmatmul.bf16.gmra.mxu0 %v3749
      %v3825 = vpop.f32.mrf.mxu0
      %v3826 = vadd.f32 0.0, %v3825
      %v3827 = vpop.f32.mrf.mxu0
      %v3828 = vadd.f32 0.0, %v3827
      %3829 = vmatmul.bf16.gmra.mxu0 %v3752
      %v3830 = vpop.f32.mrf.mxu0
      %v3831 = vadd.f32 0.0, %v3830
      %v3832 = vpop.f32.mrf.mxu0
      %v3833 = vadd.f32 0.0, %v3832
      %3834 = vmatmul.bf16.gmra.mxu0 %v3755
      %v3835 = vpop.f32.mrf.mxu0
      %v3836 = vadd.f32 0.0, %v3835
      %v3837 = vpop.f32.mrf.mxu0
      %v3838 = vadd.f32 0.0, %v3837
      %3839 = vmatmul.bf16.gmra.mxu0 %v3758
      %v3840 = vpop.f32.mrf.mxu0
      %v3841 = vadd.f32 0.0, %v3840
      %v3842 = vpop.f32.mrf.mxu0
      %v3843 = vadd.f32 0.0, %v3842
      %3844 = vmatmul.bf16.gmra.mxu0 %v3761
      %v3845 = vpop.f32.mrf.mxu0
      %v3846 = vadd.f32 0.0, %v3845
      %v3847 = vpop.f32.mrf.mxu0
      %v3848 = vadd.f32 0.0, %v3847
      %3849 = vmatmul.bf16.gmra.mxu0 %v3764
      %v3850 = vpop.f32.mrf.mxu0
      %v3851 = vadd.f32 0.0, %v3850
      %v3852 = vpop.f32.mrf.mxu0
      %v3853 = vadd.f32 0.0, %v3852
      %3854 = vmatmul.bf16.gmra.mxu0 %v3767
      %v3855 = vpop.f32.mrf.mxu0
      %v3856 = vadd.f32 0.0, %v3855
      %v3857 = vpop.f32.mrf.mxu0
      %v3858 = vadd.f32 0.0, %v3857
      %3859 = vmatmul.bf16.gmra.mxu0 %v3770
      %v3860 = vpop.f32.mrf.mxu0
      %v3861 = vadd.f32 0.0, %v3860
      %v3862 = vpop.f32.mrf.mxu0
      %v3863 = vadd.f32 0.0, %v3862
      %3864 = vdwg.mxu0
      %3865 = vmatpush.bf16.msra.mxu0 0
      %3866 = vmatpush.bf16.msra.mxu0 0
      %3867 = vmatpush.bf16.msra.mxu0 0
      %3868 = vmatpush.bf16.msra.mxu0 0
      %3869 = vmatpush.bf16.msra.mxu0 0
      %3870 = vmatpush.bf16.msra.mxu0 0
      %3871 = vmatpush.bf16.msra.mxu0 0
      %3872 = vmatpush.bf16.msra.mxu0 %v3774
      %3873 = vmatmul.bf16.gmra.mxu0 %v3725
      %v3874 = vpop.f32.mrf.mxu0
      %v3875 = vadd.f32 0.0, %v3874
      %v3876 = vpop.f32.mrf.mxu0
      %v3877 = vadd.f32 0.0, %v3876
      %3878 = vmatmul.bf16.gmra.mxu0 %v3728
      %v3879 = vpop.f32.mrf.mxu0
      %v3880 = vadd.f32 0.0, %v3879
      %v3881 = vpop.f32.mrf.mxu0
      %v3882 = vadd.f32 0.0, %v3881
      %3883 = vmatmul.bf16.gmra.mxu0 %v3731
      %v3884 = vpop.f32.mrf.mxu0
      %v3885 = vadd.f32 0.0, %v3884
      %v3886 = vpop.f32.mrf.mxu0
      %v3887 = vadd.f32 0.0, %v3886
      %3888 = vmatmul.bf16.gmra.mxu0 %v3734
      %v3889 = vpop.f32.mrf.mxu0
      %v3890 = vadd.f32 0.0, %v3889
      %v3891 = vpop.f32.mrf.mxu0
      %v3892 = vadd.f32 0.0, %v3891
      %3893 = vmatmul.bf16.gmra.mxu0 %v3737
      %v3894 = vpop.f32.mrf.mxu0
      %v3895 = vadd.f32 0.0, %v3894
      %v3896 = vpop.f32.mrf.mxu0
      %v3897 = vadd.f32 0.0, %v3896
      %3898 = vmatmul.bf16.gmra.mxu0 %v3740
      %v3899 = vpop.f32.mrf.mxu0
      %v3900 = vadd.f32 0.0, %v3899
      %v3901 = vpop.f32.mrf.mxu0
      %v3902 = vadd.f32 0.0, %v3901
      %3903 = vmatmul.bf16.gmra.mxu0 %v3743
      %v3904 = vpop.f32.mrf.mxu0
      %v3905 = vadd.f32 0.0, %v3904
      %v3906 = vpop.f32.mrf.mxu0
      %v3907 = vadd.f32 0.0, %v3906
      %3908 = vmatmul.bf16.gmra.mxu0 %v3746
      %v3909 = vpop.f32.mrf.mxu0
      %v3910 = vadd.f32 0.0, %v3909
      %v3911 = vpop.f32.mrf.mxu0
      %v3912 = vadd.f32 0.0, %v3911
      %3913 = vmatmul.bf16.gmra.mxu0 %v3749
      %v3914 = vpop.f32.mrf.mxu0
      %v3915 = vadd.f32 0.0, %v3914
      %v3916 = vpop.f32.mrf.mxu0
      %v3917 = vadd.f32 0.0, %v3916
      %3918 = vmatmul.bf16.gmra.mxu0 %v3752
      %v3919 = vpop.f32.mrf.mxu0
      %v3920 = vadd.f32 0.0, %v3919
      %v3921 = vpop.f32.mrf.mxu0
      %v3922 = vadd.f32 0.0, %v3921
      %3923 = vmatmul.bf16.gmra.mxu0 %v3755
      %v3924 = vpop.f32.mrf.mxu0
      %v3925 = vadd.f32 0.0, %v3924
      %v3926 = vpop.f32.mrf.mxu0
      %v3927 = vadd.f32 0.0, %v3926
      %3928 = vmatmul.bf16.gmra.mxu0 %v3758
      %v3929 = vpop.f32.mrf.mxu0
      %v3930 = vadd.f32 0.0, %v3929
      %v3931 = vpop.f32.mrf.mxu0
      %v3932 = vadd.f32 0.0, %v3931
      %3933 = vmatmul.bf16.gmra.mxu0 %v3761
      %v3934 = vpop.f32.mrf.mxu0
      %v3935 = vadd.f32 0.0, %v3934
      %v3936 = vpop.f32.mrf.mxu0
      %v3937 = vadd.f32 0.0, %v3936
      %3938 = vmatmul.bf16.gmra.mxu0 %v3764
      %v3939 = vpop.f32.mrf.mxu0
      %v3940 = vadd.f32 0.0, %v3939
      %v3941 = vpop.f32.mrf.mxu0
      %v3942 = vadd.f32 0.0, %v3941
      %3943 = vmatmul.bf16.gmra.mxu0 %v3767
      %v3944 = vpop.f32.mrf.mxu0
      %v3945 = vadd.f32 0.0, %v3944
      %v3946 = vpop.f32.mrf.mxu0
      %v3947 = vadd.f32 0.0, %v3946
      %3948 = vmatmul.bf16.gmra.mxu0 %v3770
      %v3949 = vpop.f32.mrf.mxu0
      %v3950 = vadd.f32 0.0, %v3949
      %v3951 = vpop.f32.mrf.mxu0
      %v3952 = vadd.f32 0.0, %v3951
      %3953 = vdwg.mxu0
      %v3954 = vadd.f32 %v3538, %v3786
      %v3955 = vadd.f32 %v3539, %v3875
      %v3956 = vadd.f32 %v3540, %v3788
      %v3957 = vadd.f32 %v3541, %v3877
      %v3958 = vadd.f32 %v3542, %v3791
      %v3959 = vadd.f32 %v3543, %v3880
      %v3960 = vadd.f32 %v3544, %v3793
      %v3961 = vadd.f32 %v3545, %v3882
      %v3962 = vadd.f32 %v3546, %v3796
      %v3963 = vadd.f32 %v3547, %v3885
      %v3964 = vadd.f32 %v3548, %v3798
      %v3965 = vadd.f32 %v3549, %v3887
      %v3966 = vadd.f32 %v3550, %v3801
      %v3967 = vadd.f32 %v3551, %v3890
      %v3968 = vadd.f32 %v3552, %v3803
      %v3969 = vadd.f32 %v3553, %v3892
      %v3970 = vadd.f32 %v3554, %v3806
      %v3971 = vadd.f32 %v3555, %v3895
      %v3972 = vadd.f32 %v3556, %v3808
      %v3973 = vadd.f32 %v3557, %v3897
      %v3974 = vadd.f32 %v3558, %v3811
      %v3975 = vadd.f32 %v3559, %v3900
      %v3976 = vadd.f32 %v3560, %v3813
      %v3977 = vadd.f32 %v3561, %v3902
      %v3978 = vadd.f32 %v3562, %v3816
      %v3979 = vadd.f32 %v3563, %v3905
      %v3980 = vadd.f32 %v3564, %v3818
      %v3981 = vadd.f32 %v3565, %v3907
      %v3982 = vadd.f32 %v3566, %v3821
      %v3983 = vadd.f32 %v3567, %v3910
      %v3984 = vadd.f32 %v3568, %v3823
      %v3985 = vadd.f32 %v3569, %v3912
      %v3986 = vadd.f32 %v3570, %v3826
      %v3987 = vadd.f32 %v3571, %v3915
      %v3988 = vadd.f32 %v3572, %v3828
      %v3989 = vadd.f32 %v3573, %v3917
      %v3990 = vadd.f32 %v3574, %v3831
      %v3991 = vadd.f32 %v3575, %v3920
      %v3992 = vadd.f32 %v3576, %v3833
      %v3993 = vadd.f32 %v3577, %v3922
      %v3994 = vadd.f32 %v3578, %v3836
      %v3995 = vadd.f32 %v3579, %v3925
      %v3996 = vadd.f32 %v3580, %v3838
      %v3997 = vadd.f32 %v3581, %v3927
      %v3998 = vadd.f32 %v3582, %v3841
      %v3999 = vadd.f32 %v3583, %v3930
      %v4000 = vadd.f32 %v3584, %v3843
      %v4001 = vadd.f32 %v3585, %v3932
      %v4002 = vadd.f32 %v3586, %v3846
      %v4003 = vadd.f32 %v3587, %v3935
      %v4004 = vadd.f32 %v3588, %v3848
      %v4005 = vadd.f32 %v3589, %v3937
      %v4006 = vadd.f32 %v3590, %v3851
      %v4007 = vadd.f32 %v3591, %v3940
      %v4008 = vadd.f32 %v3592, %v3853
      %v4009 = vadd.f32 %v3593, %v3942
      %v4010 = vadd.f32 %v3594, %v3856
      %v4011 = vadd.f32 %v3595, %v3945
      %v4012 = vadd.f32 %v3596, %v3858
      %v4013 = vadd.f32 %v3597, %v3947
      %v4014 = vadd.f32 %v3598, %v3861
      %v4015 = vadd.f32 %v3599, %v3950
      %v4016 = vadd.f32 %v3600, %v3863
      %v4017 = vadd.f32 %v3601, %v3952
      %v4018 = vld [vmem:[%s3605] sm:$0xf]
      %v4019 = vld [vmem:[%s3605 + $0x4] sm:$0xf]
      %v4020 = vld [vmem:[%s3605 + $0x8] sm:$0x1]
      %v4021 = vld [vmem:[%s3605 + $0xc] sm:$0xf]
      %v4022 = vld [vmem:[%s3605 + $0x10] sm:$0xf]
      %v4023 = vld [vmem:[%s3605 + $0x14] sm:$0x1]
      %v4024 = vld [vmem:[%s3605 + $0x18] sm:$0xf]
      %v4025 = vld [vmem:[%s3605 + $0x1c] sm:$0xf]
      %v4026 = vld [vmem:[%s3605 + $0x20] sm:$0x1]
      %v4027 = vld [vmem:[%s3605 + $0x24] sm:$0xf]
      %v4028 = vld [vmem:[%s3605 + $0x28] sm:$0xf]
      %v4029 = vld [vmem:[%s3605 + $0x2c] sm:$0x1]
      %v4030 = vld [vmem:[%s3605 + $0x30] sm:$0xf]
      %v4031 = vld [vmem:[%s3605 + $0x34] sm:$0xf]
      %v4032 = vld [vmem:[%s3605 + $0x38] sm:$0x1]
      %v4033 = vld [vmem:[%s3605 + $0x3c] sm:$0xf]
      %v4034 = vld [vmem:[%s3605 + $0x40] sm:$0xf]
      %v4035 = vld [vmem:[%s3605 + $0x44] sm:$0x1]
      %v4036 = vld [vmem:[%s3605 + $0x48] sm:$0xf]
      %v4037 = vld [vmem:[%s3605 + $0x4c] sm:$0xf]
      %v4038 = vld [vmem:[%s3605 + $0x50] sm:$0x1]
      %v4039 = vld [vmem:[%s3605 + $0x54] sm:$0xf]
      %v4040 = vld [vmem:[%s3605 + $0x58] sm:$0xf]
      %v4041 = vld [vmem:[%s3605 + $0x5c] sm:$0x1]
      %v4042 = vld [vmem:[%s3605 + $0x60] sm:$0xf]
      %v4043 = vld [vmem:[%s3605 + $0x64] sm:$0xf]
      %v4044 = vld [vmem:[%s3605 + $0x68] sm:$0x1]
      %v4045 = vld [vmem:[%s3605 + $0x6c] sm:$0xf]
      %v4046 = vld [vmem:[%s3605 + $0x70] sm:$0xf]
      %v4047 = vld [vmem:[%s3605 + $0x74] sm:$0x1]
      %v4048 = vld [vmem:[%s3605 + $0x78] sm:$0xf]
      %v4049 = vld [vmem:[%s3605 + $0x7c] sm:$0xf]
      %v4050 = vld [vmem:[%s3605 + $0x80] sm:$0x1]
      %v4051 = vld [vmem:[%s3605 + $0x84] sm:$0xf]
      %v4052 = vld [vmem:[%s3605 + $0x88] sm:$0xf]
      %v4053 = vld [vmem:[%s3605 + $0x8c] sm:$0x1]
      %v4054 = vld [vmem:[%s3605 + $0x90] sm:$0xf]
      %v4055 = vld [vmem:[%s3605 + $0x94] sm:$0xf]
      %v4056 = vld [vmem:[%s3605 + $0x98] sm:$0x1]
      %v4057 = vld [vmem:[%s3605 + $0x9c] sm:$0xf]
      %v4058 = vld [vmem:[%s3605 + $0xa0] sm:$0xf]
      %v4059 = vld [vmem:[%s3605 + $0xa4] sm:$0x1]
      %v4060 = vld [vmem:[%s3605 + $0xa8] sm:$0xf]
      %v4061 = vld [vmem:[%s3605 + $0xac] sm:$0xf]
      %v4062 = vld [vmem:[%s3605 + $0xb0] sm:$0x1]
      %v4063 = vld [vmem:[%s3605 + $0xb4] sm:$0xf]
      %v4064 = vld [vmem:[%s3605 + $0xb8] sm:$0xf]
      %v4065 = vld [vmem:[%s3605 + $0xbc] sm:$0x1]
      %v4067 = vshrl.u32 %v4018, 16
      %v4069 = vrot.slane %v4067, 4
      %v4070 = vshll.u32 %v4018, 16
      %v4072 = vrot.slane %v4070, 5
      %v4073 = vor.u32 %v4069, %v4072
      %v4074 = vrot.slane %v4073, 4
      %v4076 = vshll.u32 %v4019, 16
      %v4078 = vrot.slane %v4076, 5
      %v4079 = vsel %vm306, %v4074, %v4078
      %v4080 = vshrl.u32 %v4019, 16
      %v4082 = vrot.slane %v4080, 4
      %v4083 = vor.u32 %v4082, %v4078
      %v4084 = vrot.slane %v4083, 4
      %v4086 = vshll.u32 %v4020, 16
      %v4088 = vrot.slane %v4086, 5
      %v4089 = vsel %vm306, %v4084, %v4088
      %v4091 = vshrl.u32 %v4021, 16
      %v4093 = vrot.slane %v4091, 4
      %v4094 = vshll.u32 %v4021, 16
      %v4096 = vrot.slane %v4094, 5
      %v4097 = vor.u32 %v4093, %v4096
      %v4098 = vrot.slane %v4097, 4
      %v4100 = vshll.u32 %v4022, 16
      %v4102 = vrot.slane %v4100, 5
      %v4103 = vsel %vm306, %v4098, %v4102
      %v4104 = vshrl.u32 %v4022, 16
      %v4106 = vrot.slane %v4104, 4
      %v4107 = vor.u32 %v4106, %v4102
      %v4108 = vrot.slane %v4107, 4
      %v4110 = vshll.u32 %v4023, 16
      %v4112 = vrot.slane %v4110, 5
      %v4113 = vsel %vm306, %v4108, %v4112
      %v4115 = vshrl.u32 %v4024, 16
      %v4117 = vrot.slane %v4115, 4
      %v4118 = vshll.u32 %v4024, 16
      %v4120 = vrot.slane %v4118, 5
      %v4121 = vor.u32 %v4117, %v4120
      %v4122 = vrot.slane %v4121, 4
      %v4124 = vshll.u32 %v4025, 16
      %v4126 = vrot.slane %v4124, 5
      %v4127 = vsel %vm306, %v4122, %v4126
      %v4128 = vshrl.u32 %v4025, 16
      %v4130 = vrot.slane %v4128, 4
      %v4131 = vor.u32 %v4130, %v4126
      %v4132 = vrot.slane %v4131, 4
      %v4134 = vshll.u32 %v4026, 16
      %v4136 = vrot.slane %v4134, 5
      %v4137 = vsel %vm306, %v4132, %v4136
      %v4139 = vshrl.u32 %v4027, 16
      %v4141 = vrot.slane %v4139, 4
      %v4142 = vshll.u32 %v4027, 16
      %v4144 = vrot.slane %v4142, 5
      %v4145 = vor.u32 %v4141, %v4144
      %v4146 = vrot.slane %v4145, 4
      %v4148 = vshll.u32 %v4028, 16
      %v4150 = vrot.slane %v4148, 5
      %v4151 = vsel %vm306, %v4146, %v4150
      %v4152 = vshrl.u32 %v4028, 16
      %v4154 = vrot.slane %v4152, 4
      %v4155 = vor.u32 %v4154, %v4150
      %v4156 = vrot.slane %v4155, 4
      %v4158 = vshll.u32 %v4029, 16
      %v4160 = vrot.slane %v4158, 5
      %v4161 = vsel %vm306, %v4156, %v4160
      %v4163 = vshrl.u32 %v4030, 16
      %v4165 = vrot.slane %v4163, 4
      %v4166 = vshll.u32 %v4030, 16
      %v4168 = vrot.slane %v4166, 5
      %v4169 = vor.u32 %v4165, %v4168
      %v4170 = vrot.slane %v4169, 4
      %v4172 = vshll.u32 %v4031, 16
      %v4174 = vrot.slane %v4172, 5
      %v4175 = vsel %vm306, %v4170, %v4174
      %v4176 = vshrl.u32 %v4031, 16
      %v4178 = vrot.slane %v4176, 4
      %v4179 = vor.u32 %v4178, %v4174
      %v4180 = vrot.slane %v4179, 4
      %v4182 = vshll.u32 %v4032, 16
      %v4184 = vrot.slane %v4182, 5
      %v4185 = vsel %vm306, %v4180, %v4184
      %v4187 = vshrl.u32 %v4033, 16
      %v4189 = vrot.slane %v4187, 4
      %v4190 = vshll.u32 %v4033, 16
      %v4192 = vrot.slane %v4190, 5
      %v4193 = vor.u32 %v4189, %v4192
      %v4194 = vrot.slane %v4193, 4
      %v4196 = vshll.u32 %v4034, 16
      %v4198 = vrot.slane %v4196, 5
      %v4199 = vsel %vm306, %v4194, %v4198
      %v4200 = vshrl.u32 %v4034, 16
      %v4202 = vrot.slane %v4200, 4
      %v4203 = vor.u32 %v4202, %v4198
      %v4204 = vrot.slane %v4203, 4
      %v4206 = vshll.u32 %v4035, 16
      %v4208 = vrot.slane %v4206, 5
      %v4209 = vsel %vm306, %v4204, %v4208
      %v4211 = vshrl.u32 %v4036, 16
      %v4213 = vrot.slane %v4211, 4
      %v4214 = vshll.u32 %v4036, 16
      %v4216 = vrot.slane %v4214, 5
      %v4217 = vor.u32 %v4213, %v4216
      %v4218 = vrot.slane %v4217, 4
      %v4220 = vshll.u32 %v4037, 16
      %v4222 = vrot.slane %v4220, 5
      %v4223 = vsel %vm306, %v4218, %v4222
      %v4224 = vshrl.u32 %v4037, 16
      %v4226 = vrot.slane %v4224, 4
      %v4227 = vor.u32 %v4226, %v4222
      %v4228 = vrot.slane %v4227, 4
      %v4230 = vshll.u32 %v4038, 16
      %v4232 = vrot.slane %v4230, 5
      %v4233 = vsel %vm306, %v4228, %v4232
      %v4235 = vshrl.u32 %v4039, 16
      %v4237 = vrot.slane %v4235, 4
      %v4238 = vshll.u32 %v4039, 16
      %v4240 = vrot.slane %v4238, 5
      %v4241 = vor.u32 %v4237, %v4240
      %v4242 = vrot.slane %v4241, 4
      %v4244 = vshll.u32 %v4040, 16
      %v4246 = vrot.slane %v4244, 5
      %v4247 = vsel %vm306, %v4242, %v4246
      %v4248 = vshrl.u32 %v4040, 16
      %v4250 = vrot.slane %v4248, 4
      %v4251 = vor.u32 %v4250, %v4246
      %v4252 = vrot.slane %v4251, 4
      %v4254 = vshll.u32 %v4041, 16
      %v4256 = vrot.slane %v4254, 5
      %v4257 = vsel %vm306, %v4252, %v4256
      %v4259 = vshrl.u32 %v4042, 16
      %v4261 = vrot.slane %v4259, 4
      %v4262 = vshll.u32 %v4042, 16
      %v4264 = vrot.slane %v4262, 5
      %v4265 = vor.u32 %v4261, %v4264
      %v4266 = vrot.slane %v4265, 4
      %v4268 = vshll.u32 %v4043, 16
      %v4270 = vrot.slane %v4268, 5
      %v4271 = vsel %vm306, %v4266, %v4270
      %v4272 = vshrl.u32 %v4043, 16
      %v4274 = vrot.slane %v4272, 4
      %v4275 = vor.u32 %v4274, %v4270
      %v4276 = vrot.slane %v4275, 4
      %v4278 = vshll.u32 %v4044, 16
      %v4280 = vrot.slane %v4278, 5
      %v4281 = vsel %vm306, %v4276, %v4280
      %v4283 = vshrl.u32 %v4045, 16
      %v4285 = vrot.slane %v4283, 4
      %v4286 = vshll.u32 %v4045, 16
      %v4288 = vrot.slane %v4286, 5
      %v4289 = vor.u32 %v4285, %v4288
      %v4290 = vrot.slane %v4289, 4
      %v4292 = vshll.u32 %v4046, 16
      %v4294 = vrot.slane %v4292, 5
      %v4295 = vsel %vm306, %v4290, %v4294
      %v4296 = vshrl.u32 %v4046, 16
      %v4298 = vrot.slane %v4296, 4
      %v4299 = vor.u32 %v4298, %v4294
      %v4300 = vrot.slane %v4299, 4
      %v4302 = vshll.u32 %v4047, 16
      %v4304 = vrot.slane %v4302, 5
      %v4305 = vsel %vm306, %v4300, %v4304
      %v4307 = vshrl.u32 %v4048, 16
      %v4309 = vrot.slane %v4307, 4
      %v4310 = vshll.u32 %v4048, 16
      %v4312 = vrot.slane %v4310, 5
      %v4313 = vor.u32 %v4309, %v4312
      %v4314 = vrot.slane %v4313, 4
      %v4316 = vshll.u32 %v4049, 16
      %v4318 = vrot.slane %v4316, 5
      %v4319 = vsel %vm306, %v4314, %v4318
      %v4320 = vshrl.u32 %v4049, 16
      %v4322 = vrot.slane %v4320, 4
      %v4323 = vor.u32 %v4322, %v4318
      %v4324 = vrot.slane %v4323, 4
      %v4326 = vshll.u32 %v4050, 16
      %v4328 = vrot.slane %v4326, 5
      %v4329 = vsel %vm306, %v4324, %v4328
      %v4331 = vshrl.u32 %v4051, 16
      %v4333 = vrot.slane %v4331, 4
      %v4334 = vshll.u32 %v4051, 16
      %v4336 = vrot.slane %v4334, 5
      %v4337 = vor.u32 %v4333, %v4336
      %v4338 = vrot.slane %v4337, 4
      %v4340 = vshll.u32 %v4052, 16
      %v4342 = vrot.slane %v4340, 5
      %v4343 = vsel %vm306, %v4338, %v4342
      %v4344 = vshrl.u32 %v4052, 16
      %v4346 = vrot.slane %v4344, 4
      %v4347 = vor.u32 %v4346, %v4342
      %v4348 = vrot.slane %v4347, 4
      %v4350 = vshll.u32 %v4053, 16
      %v4352 = vrot.slane %v4350, 5
      %v4353 = vsel %vm306, %v4348, %v4352
      %v4355 = vshrl.u32 %v4054, 16
      %v4357 = vrot.slane %v4355, 4
      %v4358 = vshll.u32 %v4054, 16
      %v4360 = vrot.slane %v4358, 5
      %v4361 = vor.u32 %v4357, %v4360
      %v4362 = vrot.slane %v4361, 4
      %v4364 = vshll.u32 %v4055, 16
      %v4366 = vrot.slane %v4364, 5
      %v4367 = vsel %vm306, %v4362, %v4366
      %v4368 = vshrl.u32 %v4055, 16
      %v4370 = vrot.slane %v4368, 4
      %v4371 = vor.u32 %v4370, %v4366
      %v4372 = vrot.slane %v4371, 4
      %v4374 = vshll.u32 %v4056, 16
      %v4376 = vrot.slane %v4374, 5
      %v4377 = vsel %vm306, %v4372, %v4376
      %v4379 = vshrl.u32 %v4057, 16
      %v4381 = vrot.slane %v4379, 4
      %v4382 = vshll.u32 %v4057, 16
      %v4384 = vrot.slane %v4382, 5
      %v4385 = vor.u32 %v4381, %v4384
      %v4386 = vrot.slane %v4385, 4
      %v4388 = vshll.u32 %v4058, 16
      %v4390 = vrot.slane %v4388, 5
      %v4391 = vsel %vm306, %v4386, %v4390
      %v4392 = vshrl.u32 %v4058, 16
      %v4394 = vrot.slane %v4392, 4
      %v4395 = vor.u32 %v4394, %v4390
      %v4396 = vrot.slane %v4395, 4
      %v4398 = vshll.u32 %v4059, 16
      %v4400 = vrot.slane %v4398, 5
      %v4401 = vsel %vm306, %v4396, %v4400
      %v4403 = vshrl.u32 %v4060, 16
      %v4405 = vrot.slane %v4403, 4
      %v4406 = vshll.u32 %v4060, 16
      %v4408 = vrot.slane %v4406, 5
      %v4409 = vor.u32 %v4405, %v4408
      %v4410 = vrot.slane %v4409, 4
      %v4412 = vshll.u32 %v4061, 16
      %v4414 = vrot.slane %v4412, 5
      %v4415 = vsel %vm306, %v4410, %v4414
      %v4416 = vshrl.u32 %v4061, 16
      %v4418 = vrot.slane %v4416, 4
      %v4419 = vor.u32 %v4418, %v4414
      %v4420 = vrot.slane %v4419, 4
      %v4422 = vshll.u32 %v4062, 16
      %v4424 = vrot.slane %v4422, 5
      %v4425 = vsel %vm306, %v4420, %v4424
      %v4427 = vshrl.u32 %v4063, 16
      %v4429 = vrot.slane %v4427, 4
      %v4430 = vshll.u32 %v4063, 16
      %v4432 = vrot.slane %v4430, 5
      %v4433 = vor.u32 %v4429, %v4432
      %v4434 = vrot.slane %v4433, 4
      %v4436 = vshll.u32 %v4064, 16
      %v4438 = vrot.slane %v4436, 5
      %v4439 = vsel %vm306, %v4434, %v4438
      %v4440 = vshrl.u32 %v4064, 16
      %v4442 = vrot.slane %v4440, 4
      %v4443 = vor.u32 %v4442, %v4438
      %v4444 = vrot.slane %v4443, 4
      %v4446 = vshll.u32 %v4065, 16
      %v4448 = vrot.slane %v4446, 5
      %v4449 = vsel %vm306, %v4444, %v4448
      %s4450 = scalar_lea.vmem %s1, 28
      %v4451 = vld [vmem:[%s4450] sm:$0xf]
      %v4452 = vunpack.c.l.b16 %v4079
      %v4453 = vunpack.c.l.b16 %v4089
      %v4454 = vunpack.c.l.b16 %v4103
      %v4455 = vunpack.c.l.b16 %v4113
      %v4456 = vunpack.c.l.b16 %v4127
      %v4457 = vunpack.c.l.b16 %v4137
      %v4458 = vunpack.c.l.b16 %v4151
      %v4459 = vunpack.c.l.b16 %v4161
      %v4460 = vunpack.c.l.b16 %v4175
      %v4461 = vunpack.c.l.b16 %v4185
      %v4462 = vunpack.c.l.b16 %v4199
      %v4463 = vunpack.c.l.b16 %v4209
      %v4464 = vunpack.c.l.b16 %v4223
      %v4465 = vunpack.c.l.b16 %v4233
      %v4466 = vunpack.c.l.b16 %v4247
      %v4467 = vunpack.c.l.b16 %v4257
      %v4468 = vunpack.c.l.b16 %v4271
      %v4469 = vunpack.c.l.b16 %v4281
      %v4470 = vunpack.c.l.b16 %v4295
      %v4471 = vunpack.c.l.b16 %v4305
      %v4472 = vunpack.c.l.b16 %v4319
      %v4473 = vunpack.c.l.b16 %v4329
      %v4474 = vunpack.c.l.b16 %v4343
      %v4475 = vunpack.c.l.b16 %v4353
      %v4476 = vunpack.c.l.b16 %v4367
      %v4477 = vunpack.c.l.b16 %v4377
      %v4478 = vunpack.c.l.b16 %v4391
      %v4479 = vunpack.c.l.b16 %v4401
      %v4480 = vunpack.c.l.b16 %v4415
      %v4481 = vunpack.c.l.b16 %v4425
      %v4482 = vunpack.c.l.b16 %v4439
      %v4483 = vunpack.c.l.b16 %v4449
      %v4484 = vpack.c.b16 %v4453, %v4452
      %v4485 = vpack.c.b16 %v4455, %v4454
      %v4486 = vpack.c.b16 %v4457, %v4456
      %v4487 = vpack.c.b16 %v4459, %v4458
      %v4488 = vpack.c.b16 %v4461, %v4460
      %v4489 = vpack.c.b16 %v4463, %v4462
      %v4490 = vpack.c.b16 %v4465, %v4464
      %v4491 = vpack.c.b16 %v4467, %v4466
      %v4492 = vpack.c.b16 %v4469, %v4468
      %v4493 = vpack.c.b16 %v4471, %v4470
      %v4494 = vpack.c.b16 %v4473, %v4472
      %v4495 = vpack.c.b16 %v4475, %v4474
      %v4496 = vpack.c.b16 %v4477, %v4476
      %v4497 = vpack.c.b16 %v4479, %v4478
      %v4498 = vpack.c.b16 %v4481, %v4480
      %v4499 = vpack.c.b16 %v4483, %v4482
      %4501 = vst [vmem:[#allocation1] ss:$4 sm:$0xff] %v4451
      %v4502 = vld.sshfl [vmem:[#allocation1] sm:$0xff pattern:$0x73625140]
      %v4503 = vld.sshfl [vmem:[#allocation1 + $0x8] sm:$0xff pattern:$0x73625140]
      %v4505 = vsel %vm745, %v4484, 0
      %v4508 = vsel %vm745, %v4485, 0
      %v4511 = vsel %vm745, %v4486, 0
      %v4514 = vsel %vm745, %v4487, 0
      %v4517 = vsel %vm745, %v4488, 0
      %v4520 = vsel %vm745, %v4489, 0
      %v4523 = vsel %vm745, %v4490, 0
      %v4526 = vsel %vm745, %v4491, 0
      %v4529 = vsel %vm745, %v4492, 0
      %v4532 = vsel %vm745, %v4493, 0
      %v4535 = vsel %vm745, %v4494, 0
      %v4538 = vsel %vm745, %v4495, 0
      %v4541 = vsel %vm745, %v4496, 0
      %v4544 = vsel %vm745, %v4497, 0
      %v4547 = vsel %vm745, %v4498, 0
      %v4550 = vsel %vm745, %v4499, 0
      %v4552 = vsel %vm794, %v4502, 0
      %v4554 = vsel %vm794, %v4503, 0
      %4556 = vmatpush.bf16.msra.mxu0 0
      %4557 = vmatpush.bf16.msra.mxu0 0
      %4558 = vmatpush.bf16.msra.mxu0 0
      %4559 = vmatpush.bf16.msra.mxu0 0
      %4560 = vmatpush.bf16.msra.mxu0 0
      %4561 = vmatpush.bf16.msra.mxu0 0
      %4562 = vmatpush.bf16.msra.mxu0 0
      %4563 = vmatpush.bf16.msra.mxu0 %v4552
      %4564 = vmatmul.bf16.gmra.mxu0 %v4505
      %v4565 = vpop.f32.mrf.mxu0
      %v4566 = vadd.f32 0.0, %v4565
      %v4567 = vpop.f32.mrf.mxu0
      %v4568 = vadd.f32 0.0, %v4567
      %4569 = vmatmul.bf16.gmra.mxu0 %v4508
      %v4570 = vpop.f32.mrf.mxu0
      %v4571 = vadd.f32 0.0, %v4570
      %v4572 = vpop.f32.mrf.mxu0
      %v4573 = vadd.f32 0.0, %v4572
      %4574 = vmatmul.bf16.gmra.mxu0 %v4511
      %v4575 = vpop.f32.mrf.mxu0
      %v4576 = vadd.f32 0.0, %v4575
      %v4577 = vpop.f32.mrf.mxu0
      %v4578 = vadd.f32 0.0, %v4577
      %4579 = vmatmul.bf16.gmra.mxu0 %v4514
      %v4580 = vpop.f32.mrf.mxu0
      %v4581 = vadd.f32 0.0, %v4580
      %v4582 = vpop.f32.mrf.mxu0
      %v4583 = vadd.f32 0.0, %v4582
      %4584 = vmatmul.bf16.gmra.mxu0 %v4517
      %v4585 = vpop.f32.mrf.mxu0
      %v4586 = vadd.f32 0.0, %v4585
      %v4587 = vpop.f32.mrf.mxu0
      %v4588 = vadd.f32 0.0, %v4587
      %4589 = vmatmul.bf16.gmra.mxu0 %v4520
      %v4590 = vpop.f32.mrf.mxu0
      %v4591 = vadd.f32 0.0, %v4590
      %v4592 = vpop.f32.mrf.mxu0
      %v4593 = vadd.f32 0.0, %v4592
      %4594 = vmatmul.bf16.gmra.mxu0 %v4523
      %v4595 = vpop.f32.mrf.mxu0
      %v4596 = vadd.f32 0.0, %v4595
      %v4597 = vpop.f32.mrf.mxu0
      %v4598 = vadd.f32 0.0, %v4597
      %4599 = vmatmul.bf16.gmra.mxu0 %v4526
      %v4600 = vpop.f32.mrf.mxu0
      %v4601 = vadd.f32 0.0, %v4600
      %v4602 = vpop.f32.mrf.mxu0
      %v4603 = vadd.f32 0.0, %v4602
      %4604 = vmatmul.bf16.gmra.mxu0 %v4529
      %v4605 = vpop.f32.mrf.mxu0
      %v4606 = vadd.f32 0.0, %v4605
      %v4607 = vpop.f32.mrf.mxu0
      %v4608 = vadd.f32 0.0, %v4607
      %4609 = vmatmul.bf16.gmra.mxu0 %v4532
      %v4610 = vpop.f32.mrf.mxu0
      %v4611 = vadd.f32 0.0, %v4610
      %v4612 = vpop.f32.mrf.mxu0
      %v4613 = vadd.f32 0.0, %v4612
      %4614 = vmatmul.bf16.gmra.mxu0 %v4535
      %v4615 = vpop.f32.mrf.mxu0
      %v4616 = vadd.f32 0.0, %v4615
      %v4617 = vpop.f32.mrf.mxu0
      %v4618 = vadd.f32 0.0, %v4617
      %4619 = vmatmul.bf16.gmra.mxu0 %v4538
      %v4620 = vpop.f32.mrf.mxu0
      %v4621 = vadd.f32 0.0, %v4620
      %v4622 = vpop.f32.mrf.mxu0
      %v4623 = vadd.f32 0.0, %v4622
      %4624 = vmatmul.bf16.gmra.mxu0 %v4541
      %v4625 = vpop.f32.mrf.mxu0
      %v4626 = vadd.f32 0.0, %v4625
      %v4627 = vpop.f32.mrf.mxu0
      %v4628 = vadd.f32 0.0, %v4627
      %4629 = vmatmul.bf16.gmra.mxu0 %v4544
      %v4630 = vpop.f32.mrf.mxu0
      %v4631 = vadd.f32 0.0, %v4630
      %v4632 = vpop.f32.mrf.mxu0
      %v4633 = vadd.f32 0.0, %v4632
      %4634 = vmatmul.bf16.gmra.mxu0 %v4547
      %v4635 = vpop.f32.mrf.mxu0
      %v4636 = vadd.f32 0.0, %v4635
      %v4637 = vpop.f32.mrf.mxu0
      %v4638 = vadd.f32 0.0, %v4637
      %4639 = vmatmul.bf16.gmra.mxu0 %v4550
      %v4640 = vpop.f32.mrf.mxu0
      %v4641 = vadd.f32 0.0, %v4640
      %v4642 = vpop.f32.mrf.mxu0
      %v4643 = vadd.f32 0.0, %v4642
      %4644 = vdwg.mxu0
      %4645 = vmatpush.bf16.msra.mxu0 0
      %4646 = vmatpush.bf16.msra.mxu0 0
      %4647 = vmatpush.bf16.msra.mxu0 0
      %4648 = vmatpush.bf16.msra.mxu0 0
      %4649 = vmatpush.bf16.msra.mxu0 0
      %4650 = vmatpush.bf16.msra.mxu0 0
      %4651 = vmatpush.bf16.msra.mxu0 0
      %4652 = vmatpush.bf16.msra.mxu0 %v4554
      %4653 = vmatmul.bf16.gmra.mxu0 %v4505
      %v4654 = vpop.f32.mrf.mxu0
      %v4655 = vadd.f32 0.0, %v4654
      %v4656 = vpop.f32.mrf.mxu0
      %v4657 = vadd.f32 0.0, %v4656
      %4658 = vmatmul.bf16.gmra.mxu0 %v4508
      %v4659 = vpop.f32.mrf.mxu0
      %v4660 = vadd.f32 0.0, %v4659
      %v4661 = vpop.f32.mrf.mxu0
      %v4662 = vadd.f32 0.0, %v4661
      %4663 = vmatmul.bf16.gmra.mxu0 %v4511
      %v4664 = vpop.f32.mrf.mxu0
      %v4665 = vadd.f32 0.0, %v4664
      %v4666 = vpop.f32.mrf.mxu0
      %v4667 = vadd.f32 0.0, %v4666
      %4668 = vmatmul.bf16.gmra.mxu0 %v4514
      %v4669 = vpop.f32.mrf.mxu0
      %v4670 = vadd.f32 0.0, %v4669
      %v4671 = vpop.f32.mrf.mxu0
      %v4672 = vadd.f32 0.0, %v4671
      %4673 = vmatmul.bf16.gmra.mxu0 %v4517
      %v4674 = vpop.f32.mrf.mxu0
      %v4675 = vadd.f32 0.0, %v4674
      %v4676 = vpop.f32.mrf.mxu0
      %v4677 = vadd.f32 0.0, %v4676
      %4678 = vmatmul.bf16.gmra.mxu0 %v4520
      %v4679 = vpop.f32.mrf.mxu0
      %v4680 = vadd.f32 0.0, %v4679
      %v4681 = vpop.f32.mrf.mxu0
      %v4682 = vadd.f32 0.0, %v4681
      %4683 = vmatmul.bf16.gmra.mxu0 %v4523
      %v4684 = vpop.f32.mrf.mxu0
      %v4685 = vadd.f32 0.0, %v4684
      %v4686 = vpop.f32.mrf.mxu0
      %v4687 = vadd.f32 0.0, %v4686
      %4688 = vmatmul.bf16.gmra.mxu0 %v4526
      %v4689 = vpop.f32.mrf.mxu0
      %v4690 = vadd.f32 0.0, %v4689
      %v4691 = vpop.f32.mrf.mxu0
      %v4692 = vadd.f32 0.0, %v4691
      %4693 = vmatmul.bf16.gmra.mxu0 %v4529
      %v4694 = vpop.f32.mrf.mxu0
      %v4695 = vadd.f32 0.0, %v4694
      %v4696 = vpop.f32.mrf.mxu0
      %v4697 = vadd.f32 0.0, %v4696
      %4698 = vmatmul.bf16.gmra.mxu0 %v4532
      %v4699 = vpop.f32.mrf.mxu0
      %v4700 = vadd.f32 0.0, %v4699
      %v4701 = vpop.f32.mrf.mxu0
      %v4702 = vadd.f32 0.0, %v4701
      %4703 = vmatmul.bf16.gmra.mxu0 %v4535
      %v4704 = vpop.f32.mrf.mxu0
      %v4705 = vadd.f32 0.0, %v4704
      %v4706 = vpop.f32.mrf.mxu0
      %v4707 = vadd.f32 0.0, %v4706
      %4708 = vmatmul.bf16.gmra.mxu0 %v4538
      %v4709 = vpop.f32.mrf.mxu0
      %v4710 = vadd.f32 0.0, %v4709
      %v4711 = vpop.f32.mrf.mxu0
      %v4712 = vadd.f32 0.0, %v4711
      %4713 = vmatmul.bf16.gmra.mxu0 %v4541
      %v4714 = vpop.f32.mrf.mxu0
      %v4715 = vadd.f32 0.0, %v4714
      %v4716 = vpop.f32.mrf.mxu0
      %v4717 = vadd.f32 0.0, %v4716
      %4718 = vmatmul.bf16.gmra.mxu0 %v4544
      %v4719 = vpop.f32.mrf.mxu0
      %v4720 = vadd.f32 0.0, %v4719
      %v4721 = vpop.f32.mrf.mxu0
      %v4722 = vadd.f32 0.0, %v4721
      %4723 = vmatmul.bf16.gmra.mxu0 %v4547
      %v4724 = vpop.f32.mrf.mxu0
      %v4725 = vadd.f32 0.0, %v4724
      %v4726 = vpop.f32.mrf.mxu0
      %v4727 = vadd.f32 0.0, %v4726
      %4728 = vmatmul.bf16.gmra.mxu0 %v4550
      %v4729 = vpop.f32.mrf.mxu0
      %v4730 = vadd.f32 0.0, %v4729
      %v4731 = vpop.f32.mrf.mxu0
      %v4732 = vadd.f32 0.0, %v4731
      %4733 = vdwg.mxu0
      %v4734 = vadd.f32 %v3954, %v4566
      %v4735 = vadd.f32 %v3955, %v4655
      %v4736 = vadd.f32 %v3956, %v4568
      %v4737 = vadd.f32 %v3957, %v4657
      %v4738 = vadd.f32 %v3958, %v4571
      %v4739 = vadd.f32 %v3959, %v4660
      %v4740 = vadd.f32 %v3960, %v4573
      %v4741 = vadd.f32 %v3961, %v4662
      %v4742 = vadd.f32 %v3962, %v4576
      %v4743 = vadd.f32 %v3963, %v4665
      %v4744 = vadd.f32 %v3964, %v4578
      %v4745 = vadd.f32 %v3965, %v4667
      %v4746 = vadd.f32 %v3966, %v4581
      %v4747 = vadd.f32 %v3967, %v4670
      %v4748 = vadd.f32 %v3968, %v4583
      %v4749 = vadd.f32 %v3969, %v4672
      %v4750 = vadd.f32 %v3970, %v4586
      %v4751 = vadd.f32 %v3971, %v4675
      %v4752 = vadd.f32 %v3972, %v4588
      %v4753 = vadd.f32 %v3973, %v4677
      %v4754 = vadd.f32 %v3974, %v4591
      %v4755 = vadd.f32 %v3975, %v4680
      %v4756 = vadd.f32 %v3976, %v4593
      %v4757 = vadd.f32 %v3977, %v4682
      %v4758 = vadd.f32 %v3978, %v4596
      %v4759 = vadd.f32 %v3979, %v4685
      %v4760 = vadd.f32 %v3980, %v4598
      %v4761 = vadd.f32 %v3981, %v4687
      %v4762 = vadd.f32 %v3982, %v4601
      %v4763 = vadd.f32 %v3983, %v4690
      %v4764 = vadd.f32 %v3984, %v4603
      %v4765 = vadd.f32 %v3985, %v4692
      %v4766 = vadd.f32 %v3986, %v4606
      %v4767 = vadd.f32 %v3987, %v4695
      %v4768 = vadd.f32 %v3988, %v4608
      %v4769 = vadd.f32 %v3989, %v4697
      %v4770 = vadd.f32 %v3990, %v4611
      %v4771 = vadd.f32 %v3991, %v4700
      %v4772 = vadd.f32 %v3992, %v4613
      %v4773 = vadd.f32 %v3993, %v4702
      %v4774 = vadd.f32 %v3994, %v4616
      %v4775 = vadd.f32 %v3995, %v4705
      %v4776 = vadd.f32 %v3996, %v4618
      %v4777 = vadd.f32 %v3997, %v4707
      %v4778 = vadd.f32 %v3998, %v4621
      %v4779 = vadd.f32 %v3999, %v4710
      %v4780 = vadd.f32 %v4000, %v4623
      %v4781 = vadd.f32 %v4001, %v4712
      %v4782 = vadd.f32 %v4002, %v4626
      %v4783 = vadd.f32 %v4003, %v4715
      %v4784 = vadd.f32 %v4004, %v4628
      %v4785 = vadd.f32 %v4005, %v4717
      %v4786 = vadd.f32 %v4006, %v4631
      %v4787 = vadd.f32 %v4007, %v4720
      %v4788 = vadd.f32 %v4008, %v4633
      %v4789 = vadd.f32 %v4009, %v4722
      %v4790 = vadd.f32 %v4010, %v4636
      %v4791 = vadd.f32 %v4011, %v4725
      %v4792 = vadd.f32 %v4012, %v4638
      %v4793 = vadd.f32 %v4013, %v4727
      %v4794 = vadd.f32 %v4014, %v4641
      %v4795 = vadd.f32 %v4015, %v4730
      %v4796 = vadd.f32 %v4016, %v4643
      %v4797 = vadd.f32 %v4017, %v4732
      %v4798 = vld [vmem:[%s3605] sm:$0xe]
      %v4799 = vld [vmem:[%s3605 + $0x4] sm:$0xf]
      %v4800 = vld [vmem:[%s3605 + $0x8] sm:$0x1]
      %v4801 = vld [vmem:[%s3605 + $0xc] sm:$0xe]
      %v4802 = vld [vmem:[%s3605 + $0x10] sm:$0xf]
      %v4803 = vld [vmem:[%s3605 + $0x14] sm:$0x1]
      %v4804 = vld [vmem:[%s3605 + $0x18] sm:$0xe]
      %v4805 = vld [vmem:[%s3605 + $0x1c] sm:$0xf]
      %v4806 = vld [vmem:[%s3605 + $0x20] sm:$0x1]
      %v4807 = vld [vmem:[%s3605 + $0x24] sm:$0xe]
      %v4808 = vld [vmem:[%s3605 + $0x28] sm:$0xf]
      %v4809 = vld [vmem:[%s3605 + $0x2c] sm:$0x1]
      %v4810 = vld [vmem:[%s3605 + $0x30] sm:$0xe]
      %v4811 = vld [vmem:[%s3605 + $0x34] sm:$0xf]
      %v4812 = vld [vmem:[%s3605 + $0x38] sm:$0x1]
      %v4813 = vld [vmem:[%s3605 + $0x3c] sm:$0xe]
      %v4814 = vld [vmem:[%s3605 + $0x40] sm:$0xf]
      %v4815 = vld [vmem:[%s3605 + $0x44] sm:$0x1]
      %v4816 = vld [vmem:[%s3605 + $0x48] sm:$0xe]
      %v4817 = vld [vmem:[%s3605 + $0x4c] sm:$0xf]
      %v4818 = vld [vmem:[%s3605 + $0x50] sm:$0x1]
      %v4819 = vld [vmem:[%s3605 + $0x54] sm:$0xe]
      %v4820 = vld [vmem:[%s3605 + $0x58] sm:$0xf]
      %v4821 = vld [vmem:[%s3605 + $0x5c] sm:$0x1]
      %v4822 = vld [vmem:[%s3605 + $0x60] sm:$0xe]
      %v4823 = vld [vmem:[%s3605 + $0x64] sm:$0xf]
      %v4824 = vld [vmem:[%s3605 + $0x68] sm:$0x1]
      %v4825 = vld [vmem:[%s3605 + $0x6c] sm:$0xe]
      %v4826 = vld [vmem:[%s3605 + $0x70] sm:$0xf]
      %v4827 = vld [vmem:[%s3605 + $0x74] sm:$0x1]
      %v4828 = vld [vmem:[%s3605 + $0x78] sm:$0xe]
      %v4829 = vld [vmem:[%s3605 + $0x7c] sm:$0xf]
      %v4830 = vld [vmem:[%s3605 + $0x80] sm:$0x1]
      %v4831 = vld [vmem:[%s3605 + $0x84] sm:$0xe]
      %v4832 = vld [vmem:[%s3605 + $0x88] sm:$0xf]
      %v4833 = vld [vmem:[%s3605 + $0x8c] sm:$0x1]
      %v4834 = vld [vmem:[%s3605 + $0x90] sm:$0xe]
      %v4835 = vld [vmem:[%s3605 + $0x94] sm:$0xf]
      %v4836 = vld [vmem:[%s3605 + $0x98] sm:$0x1]
      %v4837 = vld [vmem:[%s3605 + $0x9c] sm:$0xe]
      %v4838 = vld [vmem:[%s3605 + $0xa0] sm:$0xf]
      %v4839 = vld [vmem:[%s3605 + $0xa4] sm:$0x1]
      %v4840 = vld [vmem:[%s3605 + $0xa8] sm:$0xe]
      %v4841 = vld [vmem:[%s3605 + $0xac] sm:$0xf]
      %v4842 = vld [vmem:[%s3605 + $0xb0] sm:$0x1]
      %v4843 = vld [vmem:[%s3605 + $0xb4] sm:$0xe]
      %v4844 = vld [vmem:[%s3605 + $0xb8] sm:$0xf]
      %v4845 = vld [vmem:[%s3605 + $0xbc] sm:$0x1]
      %v4894 = vrot.slane %v4798, 5
      %v4895 = vrot.slane %v4894, 4
      %v4896 = vrot.slane %v4799, 5
      %v4897 = vsel %vm1389, %v4895, %v4896
      %v4898 = vrot.slane %v4896, 4
      %v4899 = vrot.slane %v4800, 5
      %v4900 = vsel %vm1389, %v4898, %v4899
      %v4901 = vrot.slane %v4801, 5
      %v4902 = vrot.slane %v4901, 4
      %v4903 = vrot.slane %v4802, 5
      %v4904 = vsel %vm1389, %v4902, %v4903
      %v4905 = vrot.slane %v4903, 4
      %v4906 = vrot.slane %v4803, 5
      %v4907 = vsel %vm1389, %v4905, %v4906
      %v4908 = vrot.slane %v4804, 5
      %v4909 = vrot.slane %v4908, 4
      %v4910 = vrot.slane %v4805, 5
      %v4911 = vsel %vm1389, %v4909, %v4910
      %v4912 = vrot.slane %v4910, 4
      %v4913 = vrot.slane %v4806, 5
      %v4914 = vsel %vm1389, %v4912, %v4913
      %v4915 = vrot.slane %v4807, 5
      %v4916 = vrot.slane %v4915, 4
      %v4917 = vrot.slane %v4808, 5
      %v4918 = vsel %vm1389, %v4916, %v4917
      %v4919 = vrot.slane %v4917, 4
      %v4920 = vrot.slane %v4809, 5
      %v4921 = vsel %vm1389, %v4919, %v4920
      %v4922 = vrot.slane %v4810, 5
      %v4923 = vrot.slane %v4922, 4
      %v4924 = vrot.slane %v4811, 5
      %v4925 = vsel %vm1389, %v4923, %v4924
      %v4926 = vrot.slane %v4924, 4
      %v4927 = vrot.slane %v4812, 5
      %v4928 = vsel %vm1389, %v4926, %v4927
      %v4929 = vrot.slane %v4813, 5
      %v4930 = vrot.slane %v4929, 4
      %v4931 = vrot.slane %v4814, 5
      %v4932 = vsel %vm1389, %v4930, %v4931
      %v4933 = vrot.slane %v4931, 4
      %v4934 = vrot.slane %v4815, 5
      %v4935 = vsel %vm1389, %v4933, %v4934
      %v4936 = vrot.slane %v4816, 5
      %v4937 = vrot.slane %v4936, 4
      %v4938 = vrot.slane %v4817, 5
      %v4939 = vsel %vm1389, %v4937, %v4938
      %v4940 = vrot.slane %v4938, 4
      %v4941 = vrot.slane %v4818, 5
      %v4942 = vsel %vm1389, %v4940, %v4941
      %v4943 = vrot.slane %v4819, 5
      %v4944 = vrot.slane %v4943, 4
      %v4945 = vrot.slane %v4820, 5
      %v4946 = vsel %vm1389, %v4944, %v4945
      %v4947 = vrot.slane %v4945, 4
      %v4948 = vrot.slane %v4821, 5
      %v4949 = vsel %vm1389, %v4947, %v4948
      %v4950 = vrot.slane %v4822, 5
      %v4951 = vrot.slane %v4950, 4
      %v4952 = vrot.slane %v4823, 5
      %v4953 = vsel %vm1389, %v4951, %v4952
      %v4954 = vrot.slane %v4952, 4
      %v4955 = vrot.slane %v4824, 5
      %v4956 = vsel %vm1389, %v4954, %v4955
      %v4957 = vrot.slane %v4825, 5
      %v4958 = vrot.slane %v4957, 4
      %v4959 = vrot.slane %v4826, 5
      %v4960 = vsel %vm1389, %v4958, %v4959
      %v4961 = vrot.slane %v4959, 4
      %v4962 = vrot.slane %v4827, 5
      %v4963 = vsel %vm1389, %v4961, %v4962
      %v4964 = vrot.slane %v4828, 5
      %v4965 = vrot.slane %v4964, 4
      %v4966 = vrot.slane %v4829, 5
      %v4967 = vsel %vm1389, %v4965, %v4966
      %v4968 = vrot.slane %v4966, 4
      %v4969 = vrot.slane %v4830, 5
      %v4970 = vsel %vm1389, %v4968, %v4969
      %v4971 = vrot.slane %v4831, 5
      %v4972 = vrot.slane %v4971, 4
      %v4973 = vrot.slane %v4832, 5
      %v4974 = vsel %vm1389, %v4972, %v4973
      %v4975 = vrot.slane %v4973, 4
      %v4976 = vrot.slane %v4833, 5
      %v4977 = vsel %vm1389, %v4975, %v4976
      %v4978 = vrot.slane %v4834, 5
      %v4979 = vrot.slane %v4978, 4
      %v4980 = vrot.slane %v4835, 5
      %v4981 = vsel %vm1389, %v4979, %v4980
      %v4982 = vrot.slane %v4980, 4
      %v4983 = vrot.slane %v4836, 5
      %v4984 = vsel %vm1389, %v4982, %v4983
      %v4985 = vrot.slane %v4837, 5
      %v4986 = vrot.slane %v4985, 4
      %v4987 = vrot.slane %v4838, 5
      %v4988 = vsel %vm1389, %v4986, %v4987
      %v4989 = vrot.slane %v4987, 4
      %v4990 = vrot.slane %v4839, 5
      %v4991 = vsel %vm1389, %v4989, %v4990
      %v4992 = vrot.slane %v4840, 5
      %v4993 = vrot.slane %v4992, 4
      %v4994 = vrot.slane %v4841, 5
      %v4995 = vsel %vm1389, %v4993, %v4994
      %v4996 = vrot.slane %v4994, 4
      %v4997 = vrot.slane %v4842, 5
      %v4998 = vsel %vm1389, %v4996, %v4997
      %v4999 = vrot.slane %v4843, 5
      %v5000 = vrot.slane %v4999, 4
      %v5001 = vrot.slane %v4844, 5
      %v5002 = vsel %vm1389, %v5000, %v5001
      %v5003 = vrot.slane %v5001, 4
      %v5004 = vrot.slane %v4845, 5
      %v5005 = vsel %vm1389, %v5003, %v5004
      %s5006 = scalar_lea.vmem %s1, 32
      %v5007 = vld [vmem:[%s5006] sm:$0xf]
      %v5008 = vunpack.c.l.b16 %v4897
      %v5009 = vunpack.c.l.b16 %v4900
      %v5010 = vunpack.c.l.b16 %v4904
      %v5011 = vunpack.c.l.b16 %v4907
      %v5012 = vunpack.c.l.b16 %v4911
      %v5013 = vunpack.c.l.b16 %v4914
      %v5014 = vunpack.c.l.b16 %v4918
      %v5015 = vunpack.c.l.b16 %v4921
      %v5016 = vunpack.c.l.b16 %v4925
      %v5017 = vunpack.c.l.b16 %v4928
      %v5018 = vunpack.c.l.b16 %v4932
      %v5019 = vunpack.c.l.b16 %v4935
      %v5020 = vunpack.c.l.b16 %v4939
      %v5021 = vunpack.c.l.b16 %v4942
      %v5022 = vunpack.c.l.b16 %v4946
      %v5023 = vunpack.c.l.b16 %v4949
      %v5024 = vunpack.c.l.b16 %v4953
      %v5025 = vunpack.c.l.b16 %v4956
      %v5026 = vunpack.c.l.b16 %v4960
      %v5027 = vunpack.c.l.b16 %v4963
      %v5028 = vunpack.c.l.b16 %v4967
      %v5029 = vunpack.c.l.b16 %v4970
      %v5030 = vunpack.c.l.b16 %v4974
      %v5031 = vunpack.c.l.b16 %v4977
      %v5032 = vunpack.c.l.b16 %v4981
      %v5033 = vunpack.c.l.b16 %v4984
      %v5034 = vunpack.c.l.b16 %v4988
      %v5035 = vunpack.c.l.b16 %v4991
      %v5036 = vunpack.c.l.b16 %v4995
      %v5037 = vunpack.c.l.b16 %v4998
      %v5038 = vunpack.c.l.b16 %v5002
      %v5039 = vunpack.c.l.b16 %v5005
      %v5040 = vpack.c.b16 %v5009, %v5008
      %v5041 = vpack.c.b16 %v5011, %v5010
      %v5042 = vpack.c.b16 %v5013, %v5012
      %v5043 = vpack.c.b16 %v5015, %v5014
      %v5044 = vpack.c.b16 %v5017, %v5016
      %v5045 = vpack.c.b16 %v5019, %v5018
      %v5046 = vpack.c.b16 %v5021, %v5020
      %v5047 = vpack.c.b16 %v5023, %v5022
      %v5048 = vpack.c.b16 %v5025, %v5024
      %v5049 = vpack.c.b16 %v5027, %v5026
      %v5050 = vpack.c.b16 %v5029, %v5028
      %v5051 = vpack.c.b16 %v5031, %v5030
      %v5052 = vpack.c.b16 %v5033, %v5032
      %v5053 = vpack.c.b16 %v5035, %v5034
      %v5054 = vpack.c.b16 %v5037, %v5036
      %v5055 = vpack.c.b16 %v5039, %v5038
      %5057 = vst [vmem:[#allocation1] ss:$4 sm:$0xff] %v5007
      %v5058 = vld.sshfl [vmem:[#allocation1] sm:$0xff pattern:$0x73625140]
      %v5059 = vld.sshfl [vmem:[#allocation1 + $0x8] sm:$0xff pattern:$0x73625140]
      %v5061 = vsel %vm745, %v5040, 0
      %v5064 = vsel %vm745, %v5041, 0
      %v5067 = vsel %vm745, %v5042, 0
      %v5070 = vsel %vm745, %v5043, 0
      %v5073 = vsel %vm745, %v5044, 0
      %v5076 = vsel %vm745, %v5045, 0
      %v5079 = vsel %vm745, %v5046, 0
      %v5082 = vsel %vm745, %v5047, 0
      %v5085 = vsel %vm745, %v5048, 0
      %v5088 = vsel %vm745, %v5049, 0
      %v5091 = vsel %vm745, %v5050, 0
      %v5094 = vsel %vm745, %v5051, 0
      %v5097 = vsel %vm745, %v5052, 0
      %v5100 = vsel %vm745, %v5053, 0
      %v5103 = vsel %vm745, %v5054, 0
      %v5106 = vsel %vm745, %v5055, 0
      %v5108 = vsel %vm794, %v5058, 0
      %v5110 = vsel %vm794, %v5059, 0
      %5112 = vmatpush.bf16.msra.mxu0 0
      %5113 = vmatpush.bf16.msra.mxu0 0
      %5114 = vmatpush.bf16.msra.mxu0 0
      %5115 = vmatpush.bf16.msra.mxu0 0
      %5116 = vmatpush.bf16.msra.mxu0 0
      %5117 = vmatpush.bf16.msra.mxu0 0
      %5118 = vmatpush.bf16.msra.mxu0 0
      %5119 = vmatpush.bf16.msra.mxu0 %v5108
      %5120 = vmatmul.bf16.gmra.mxu0 %v5061
      %v5121 = vpop.f32.mrf.mxu0
      %v5122 = vadd.f32 0.0, %v5121
      %v5123 = vpop.f32.mrf.mxu0
      %v5124 = vadd.f32 0.0, %v5123
      %5125 = vmatmul.bf16.gmra.mxu0 %v5064
      %v5126 = vpop.f32.mrf.mxu0
      %v5127 = vadd.f32 0.0, %v5126
      %v5128 = vpop.f32.mrf.mxu0
      %v5129 = vadd.f32 0.0, %v5128
      %5130 = vmatmul.bf16.gmra.mxu0 %v5067
      %v5131 = vpop.f32.mrf.mxu0
      %v5132 = vadd.f32 0.0, %v5131
      %v5133 = vpop.f32.mrf.mxu0
      %v5134 = vadd.f32 0.0, %v5133
      %5135 = vmatmul.bf16.gmra.mxu0 %v5070
      %v5136 = vpop.f32.mrf.mxu0
      %v5137 = vadd.f32 0.0, %v5136
      %v5138 = vpop.f32.mrf.mxu0
      %v5139 = vadd.f32 0.0, %v5138
      %5140 = vmatmul.bf16.gmra.mxu0 %v5073
      %v5141 = vpop.f32.mrf.mxu0
      %v5142 = vadd.f32 0.0, %v5141
      %v5143 = vpop.f32.mrf.mxu0
      %v5144 = vadd.f32 0.0, %v5143
      %5145 = vmatmul.bf16.gmra.mxu0 %v5076
      %v5146 = vpop.f32.mrf.mxu0
      %v5147 = vadd.f32 0.0, %v5146
      %v5148 = vpop.f32.mrf.mxu0
      %v5149 = vadd.f32 0.0, %v5148
      %5150 = vmatmul.bf16.gmra.mxu0 %v5079
      %v5151 = vpop.f32.mrf.mxu0
      %v5152 = vadd.f32 0.0, %v5151
      %v5153 = vpop.f32.mrf.mxu0
      %v5154 = vadd.f32 0.0, %v5153
      %5155 = vmatmul.bf16.gmra.mxu0 %v5082
      %v5156 = vpop.f32.mrf.mxu0
      %v5157 = vadd.f32 0.0, %v5156
      %v5158 = vpop.f32.mrf.mxu0
      %v5159 = vadd.f32 0.0, %v5158
      %5160 = vmatmul.bf16.gmra.mxu0 %v5085
      %v5161 = vpop.f32.mrf.mxu0
      %v5162 = vadd.f32 0.0, %v5161
      %v5163 = vpop.f32.mrf.mxu0
      %v5164 = vadd.f32 0.0, %v5163
      %5165 = vmatmul.bf16.gmra.mxu0 %v5088
      %v5166 = vpop.f32.mrf.mxu0
      %v5167 = vadd.f32 0.0, %v5166
      %v5168 = vpop.f32.mrf.mxu0
      %v5169 = vadd.f32 0.0, %v5168
      %5170 = vmatmul.bf16.gmra.mxu0 %v5091
      %v5171 = vpop.f32.mrf.mxu0
      %v5172 = vadd.f32 0.0, %v5171
      %v5173 = vpop.f32.mrf.mxu0
      %v5174 = vadd.f32 0.0, %v5173
      %5175 = vmatmul.bf16.gmra.mxu0 %v5094
      %v5176 = vpop.f32.mrf.mxu0
      %v5177 = vadd.f32 0.0, %v5176
      %v5178 = vpop.f32.mrf.mxu0
      %v5179 = vadd.f32 0.0, %v5178
      %5180 = vmatmul.bf16.gmra.mxu0 %v5097
      %v5181 = vpop.f32.mrf.mxu0
      %v5182 = vadd.f32 0.0, %v5181
      %v5183 = vpop.f32.mrf.mxu0
      %v5184 = vadd.f32 0.0, %v5183
      %5185 = vmatmul.bf16.gmra.mxu0 %v5100
      %v5186 = vpop.f32.mrf.mxu0
      %v5187 = vadd.f32 0.0, %v5186
      %v5188 = vpop.f32.mrf.mxu0
      %v5189 = vadd.f32 0.0, %v5188
      %5190 = vmatmul.bf16.gmra.mxu0 %v5103
      %v5191 = vpop.f32.mrf.mxu0
      %v5192 = vadd.f32 0.0, %v5191
      %v5193 = vpop.f32.mrf.mxu0
      %v5194 = vadd.f32 0.0, %v5193
      %5195 = vmatmul.bf16.gmra.mxu0 %v5106
      %v5196 = vpop.f32.mrf.mxu0
      %v5197 = vadd.f32 0.0, %v5196
      %v5198 = vpop.f32.mrf.mxu0
      %v5199 = vadd.f32 0.0, %v5198
      %5200 = vdwg.mxu0
      %5201 = vmatpush.bf16.msra.mxu0 0
      %5202 = vmatpush.bf16.msra.mxu0 0
      %5203 = vmatpush.bf16.msra.mxu0 0
      %5204 = vmatpush.bf16.msra.mxu0 0
      %5205 = vmatpush.bf16.msra.mxu0 0
      %5206 = vmatpush.bf16.msra.mxu0 0
      %5207 = vmatpush.bf16.msra.mxu0 0
      %5208 = vmatpush.bf16.msra.mxu0 %v5110
      %5209 = vmatmul.bf16.gmra.mxu0 %v5061
      %v5210 = vpop.f32.mrf.mxu0
      %v5211 = vadd.f32 0.0, %v5210
      %v5212 = vpop.f32.mrf.mxu0
      %v5213 = vadd.f32 0.0, %v5212
      %5214 = vmatmul.bf16.gmra.mxu0 %v5064
      %v5215 = vpop.f32.mrf.mxu0
      %v5216 = vadd.f32 0.0, %v5215
      %v5217 = vpop.f32.mrf.mxu0
      %v5218 = vadd.f32 0.0, %v5217
      %5219 = vmatmul.bf16.gmra.mxu0 %v5067
      %v5220 = vpop.f32.mrf.mxu0
      %v5221 = vadd.f32 0.0, %v5220
      %v5222 = vpop.f32.mrf.mxu0
      %v5223 = vadd.f32 0.0, %v5222
      %5224 = vmatmul.bf16.gmra.mxu0 %v5070
      %v5225 = vpop.f32.mrf.mxu0
      %v5226 = vadd.f32 0.0, %v5225
      %v5227 = vpop.f32.mrf.mxu0
      %v5228 = vadd.f32 0.0, %v5227
      %5229 = vmatmul.bf16.gmra.mxu0 %v5073
      %v5230 = vpop.f32.mrf.mxu0
      %v5231 = vadd.f32 0.0, %v5230
      %v5232 = vpop.f32.mrf.mxu0
      %v5233 = vadd.f32 0.0, %v5232
      %5234 = vmatmul.bf16.gmra.mxu0 %v5076
      %v5235 = vpop.f32.mrf.mxu0
      %v5236 = vadd.f32 0.0, %v5235
      %v5237 = vpop.f32.mrf.mxu0
      %v5238 = vadd.f32 0.0, %v5237
      %5239 = vmatmul.bf16.gmra.mxu0 %v5079
      %v5240 = vpop.f32.mrf.mxu0
      %v5241 = vadd.f32 0.0, %v5240
      %v5242 = vpop.f32.mrf.mxu0
      %v5243 = vadd.f32 0.0, %v5242
      %5244 = vmatmul.bf16.gmra.mxu0 %v5082
      %v5245 = vpop.f32.mrf.mxu0
      %v5246 = vadd.f32 0.0, %v5245
      %v5247 = vpop.f32.mrf.mxu0
      %v5248 = vadd.f32 0.0, %v5247
      %5249 = vmatmul.bf16.gmra.mxu0 %v5085
      %v5250 = vpop.f32.mrf.mxu0
      %v5251 = vadd.f32 0.0, %v5250
      %v5252 = vpop.f32.mrf.mxu0
      %v5253 = vadd.f32 0.0, %v5252
      %5254 = vmatmul.bf16.gmra.mxu0 %v5088
      %v5255 = vpop.f32.mrf.mxu0
      %v5256 = vadd.f32 0.0, %v5255
      %v5257 = vpop.f32.mrf.mxu0
      %v5258 = vadd.f32 0.0, %v5257
      %5259 = vmatmul.bf16.gmra.mxu0 %v5091
      %v5260 = vpop.f32.mrf.mxu0
      %v5261 = vadd.f32 0.0, %v5260
      %v5262 = vpop.f32.mrf.mxu0
      %v5263 = vadd.f32 0.0, %v5262
      %5264 = vmatmul.bf16.gmra.mxu0 %v5094
      %v5265 = vpop.f32.mrf.mxu0
      %v5266 = vadd.f32 0.0, %v5265
      %v5267 = vpop.f32.mrf.mxu0
      %v5268 = vadd.f32 0.0, %v5267
      %5269 = vmatmul.bf16.gmra.mxu0 %v5097
      %v5270 = vpop.f32.mrf.mxu0
      %v5271 = vadd.f32 0.0, %v5270
      %v5272 = vpop.f32.mrf.mxu0
      %v5273 = vadd.f32 0.0, %v5272
      %5274 = vmatmul.bf16.gmra.mxu0 %v5100
      %v5275 = vpop.f32.mrf.mxu0
      %v5276 = vadd.f32 0.0, %v5275
      %v5277 = vpop.f32.mrf.mxu0
      %v5278 = vadd.f32 0.0, %v5277
      %5279 = vmatmul.bf16.gmra.mxu0 %v5103
      %v5280 = vpop.f32.mrf.mxu0
      %v5281 = vadd.f32 0.0, %v5280
      %v5282 = vpop.f32.mrf.mxu0
      %v5283 = vadd.f32 0.0, %v5282
      %5284 = vmatmul.bf16.gmra.mxu0 %v5106
      %v5285 = vpop.f32.mrf.mxu0
      %v5286 = vadd.f32 0.0, %v5285
      %v5287 = vpop.f32.mrf.mxu0
      %v5288 = vadd.f32 0.0, %v5287
      %5289 = vdwg.mxu0
      %v5290 = vadd.f32 %v4734, %v5122
      %v5291 = vadd.f32 %v4735, %v5211
      %v5292 = vadd.f32 %v4736, %v5124
      %v5293 = vadd.f32 %v4737, %v5213
      %v5294 = vadd.f32 %v4738, %v5127
      %v5295 = vadd.f32 %v4739, %v5216
      %v5296 = vadd.f32 %v4740, %v5129
      %v5297 = vadd.f32 %v4741, %v5218
      %v5298 = vadd.f32 %v4742, %v5132
      %v5299 = vadd.f32 %v4743, %v5221
      %v5300 = vadd.f32 %v4744, %v5134
      %v5301 = vadd.f32 %v4745, %v5223
      %v5302 = vadd.f32 %v4746, %v5137
      %v5303 = vadd.f32 %v4747, %v5226
      %v5304 = vadd.f32 %v4748, %v5139
      %v5305 = vadd.f32 %v4749, %v5228
      %v5306 = vadd.f32 %v4750, %v5142
      %v5307 = vadd.f32 %v4751, %v5231
      %v5308 = vadd.f32 %v4752, %v5144
      %v5309 = vadd.f32 %v4753, %v5233
      %v5310 = vadd.f32 %v4754, %v5147
      %v5311 = vadd.f32 %v4755, %v5236
      %v5312 = vadd.f32 %v4756, %v5149
      %v5313 = vadd.f32 %v4757, %v5238
      %v5314 = vadd.f32 %v4758, %v5152
      %v5315 = vadd.f32 %v4759, %v5241
      %v5316 = vadd.f32 %v4760, %v5154
      %v5317 = vadd.f32 %v4761, %v5243
      %v5318 = vadd.f32 %v4762, %v5157
      %v5319 = vadd.f32 %v4763, %v5246
      %v5320 = vadd.f32 %v4764, %v5159
      %v5321 = vadd.f32 %v4765, %v5248
      %v5322 = vadd.f32 %v4766, %v5162
      %v5323 = vadd.f32 %v4767, %v5251
      %v5324 = vadd.f32 %v4768, %v5164
      %v5325 = vadd.f32 %v4769, %v5253
      %v5326 = vadd.f32 %v4770, %v5167
      %v5327 = vadd.f32 %v4771, %v5256
      %v5328 = vadd.f32 %v4772, %v5169
      %v5329 = vadd.f32 %v4773, %v5258
      %v5330 = vadd.f32 %v4774, %v5172
      %v5331 = vadd.f32 %v4775, %v5261
      %v5332 = vadd.f32 %v4776, %v5174
      %v5333 = vadd.f32 %v4777, %v5263
      %v5334 = vadd.f32 %v4778, %v5177
      %v5335 = vadd.f32 %v4779, %v5266
      %v5336 = vadd.f32 %v4780, %v5179
      %v5337 = vadd.f32 %v4781, %v5268
      %v5338 = vadd.f32 %v4782, %v5182
      %v5339 = vadd.f32 %v4783, %v5271
      %v5340 = vadd.f32 %v4784, %v5184
      %v5341 = vadd.f32 %v4785, %v5273
      %v5342 = vadd.f32 %v4786, %v5187
      %v5343 = vadd.f32 %v4787, %v5276
      %v5344 = vadd.f32 %v4788, %v5189
      %v5345 = vadd.f32 %v4789, %v5278
      %v5346 = vadd.f32 %v4790, %v5192
      %v5347 = vadd.f32 %v4791, %v5281
      %v5348 = vadd.f32 %v4792, %v5194
      %v5349 = vadd.f32 %v4793, %v5283
      %v5350 = vadd.f32 %v4794, %v5197
      %v5351 = vadd.f32 %v4795, %v5286
      %v5352 = vadd.f32 %v4796, %v5199
      %v5353 = vadd.f32 %v4797, %v5288
      %v5354 = vld [vmem:[%s4] sm:$0x3]
      %v5356 = vperm.slane %v5354, 0
      %v5357 = vperm.slane %v5354, 1
      %v5360 = vadd.f32 %v5290, %v5356
      %v5361 = vadd.f32 %v5291, %v5357
      %v5362 = vadd.f32 %v5292, %v5356
      %v5363 = vadd.f32 %v5293, %v5357
      %v5364 = vadd.f32 %v5294, %v5356
      %v5365 = vadd.f32 %v5295, %v5357
      %v5366 = vadd.f32 %v5296, %v5356
      %v5367 = vadd.f32 %v5297, %v5357
      %v5368 = vadd.f32 %v5298, %v5356
      %v5369 = vadd.f32 %v5299, %v5357
      %v5370 = vadd.f32 %v5300, %v5356
      %v5371 = vadd.f32 %v5301, %v5357
      %v5372 = vadd.f32 %v5302, %v5356
      %v5373 = vadd.f32 %v5303, %v5357
      %v5374 = vadd.f32 %v5304, %v5356
      %v5375 = vadd.f32 %v5305, %v5357
      %v5376 = vadd.f32 %v5306, %v5356
      %v5377 = vadd.f32 %v5307, %v5357
      %v5378 = vadd.f32 %v5308, %v5356
      %v5379 = vadd.f32 %v5309, %v5357
      %v5380 = vadd.f32 %v5310, %v5356
      %v5381 = vadd.f32 %v5311, %v5357
      %v5382 = vadd.f32 %v5312, %v5356
      %v5383 = vadd.f32 %v5313, %v5357
      %v5384 = vadd.f32 %v5314, %v5356
      %v5385 = vadd.f32 %v5315, %v5357
      %v5386 = vadd.f32 %v5316, %v5356
      %v5387 = vadd.f32 %v5317, %v5357
      %v5388 = vadd.f32 %v5318, %v5356
      %v5389 = vadd.f32 %v5319, %v5357
      %v5390 = vadd.f32 %v5320, %v5356
      %v5391 = vadd.f32 %v5321, %v5357
      %v5392 = vadd.f32 %v5322, %v5356
      %v5393 = vadd.f32 %v5323, %v5357
      %v5394 = vadd.f32 %v5324, %v5356
      %v5395 = vadd.f32 %v5325, %v5357
      %v5396 = vadd.f32 %v5326, %v5356
      %v5397 = vadd.f32 %v5327, %v5357
      %v5398 = vadd.f32 %v5328, %v5356
      %v5399 = vadd.f32 %v5329, %v5357
      %v5400 = vadd.f32 %v5330, %v5356
      %v5401 = vadd.f32 %v5331, %v5357
      %v5402 = vadd.f32 %v5332, %v5356
      %v5403 = vadd.f32 %v5333, %v5357
      %v5404 = vadd.f32 %v5334, %v5356
      %v5405 = vadd.f32 %v5335, %v5357
      %v5406 = vadd.f32 %v5336, %v5356
      %v5407 = vadd.f32 %v5337, %v5357
      %v5408 = vadd.f32 %v5338, %v5356
      %v5409 = vadd.f32 %v5339, %v5357
      %v5410 = vadd.f32 %v5340, %v5356
      %v5411 = vadd.f32 %v5341, %v5357
      %v5412 = vadd.f32 %v5342, %v5356
      %v5413 = vadd.f32 %v5343, %v5357
      %v5414 = vadd.f32 %v5344, %v5356
      %v5415 = vadd.f32 %v5345, %v5357
      %v5416 = vadd.f32 %v5346, %v5356
      %v5417 = vadd.f32 %v5347, %v5357
      %v5418 = vadd.f32 %v5348, %v5356
      %v5419 = vadd.f32 %v5349, %v5357
      %v5420 = vadd.f32 %v5350, %v5356
      %v5421 = vadd.f32 %v5351, %v5357
      %v5422 = vadd.f32 %v5352, %v5356
      %v5423 = vadd.f32 %v5353, %v5357
      %v5424 = vmax.f32 %v5360, 0.0
      %v5425 = vmax.f32 %v5361, 0.0
      %v5426 = vmax.f32 %v5362, 0.0
      %v5427 = vmax.f32 %v5363, 0.0
      %v5428 = vmax.f32 %v5364, 0.0
      %v5429 = vmax.f32 %v5365, 0.0
      %v5430 = vmax.f32 %v5366, 0.0
      %v5431 = vmax.f32 %v5367, 0.0
      %v5432 = vmax.f32 %v5368, 0.0
      %v5433 = vmax.f32 %v5369, 0.0
      %v5434 = vmax.f32 %v5370, 0.0
      %v5435 = vmax.f32 %v5371, 0.0
      %v5436 = vmax.f32 %v5372, 0.0
      %v5437 = vmax.f32 %v5373, 0.0
      %v5438 = vmax.f32 %v5374, 0.0
      %v5439 = vmax.f32 %v5375, 0.0
      %v5440 = vmax.f32 %v5376, 0.0
      %v5441 = vmax.f32 %v5377, 0.0
      %v5442 = vmax.f32 %v5378, 0.0
      %v5443 = vmax.f32 %v5379, 0.0
      %v5444 = vmax.f32 %v5380, 0.0
      %v5445 = vmax.f32 %v5381, 0.0
      %v5446 = vmax.f32 %v5382, 0.0
      %v5447 = vmax.f32 %v5383, 0.0
      %v5448 = vmax.f32 %v5384, 0.0
      %v5449 = vmax.f32 %v5385, 0.0
      %v5450 = vmax.f32 %v5386, 0.0
      %v5451 = vmax.f32 %v5387, 0.0
      %v5452 = vmax.f32 %v5388, 0.0
      %v5453 = vmax.f32 %v5389, 0.0
      %v5454 = vmax.f32 %v5390, 0.0
      %v5455 = vmax.f32 %v5391, 0.0
      %v5456 = vmax.f32 %v5392, 0.0
      %v5457 = vmax.f32 %v5393, 0.0
      %v5458 = vmax.f32 %v5394, 0.0
      %v5459 = vmax.f32 %v5395, 0.0
      %v5460 = vmax.f32 %v5396, 0.0
      %v5461 = vmax.f32 %v5397, 0.0
      %v5462 = vmax.f32 %v5398, 0.0
      %v5463 = vmax.f32 %v5399, 0.0
      %v5464 = vmax.f32 %v5400, 0.0
      %v5465 = vmax.f32 %v5401, 0.0
      %v5466 = vmax.f32 %v5402, 0.0
      %v5467 = vmax.f32 %v5403, 0.0
      %v5468 = vmax.f32 %v5404, 0.0
      %v5469 = vmax.f32 %v5405, 0.0
      %v5470 = vmax.f32 %v5406, 0.0
      %v5471 = vmax.f32 %v5407, 0.0
      %v5472 = vmax.f32 %v5408, 0.0
      %v5473 = vmax.f32 %v5409, 0.0
      %v5474 = vmax.f32 %v5410, 0.0
      %v5475 = vmax.f32 %v5411, 0.0
      %v5476 = vmax.f32 %v5412, 0.0
      %v5477 = vmax.f32 %v5413, 0.0
      %v5478 = vmax.f32 %v5414, 0.0
      %v5479 = vmax.f32 %v5415, 0.0
      %v5480 = vmax.f32 %v5416, 0.0
      %v5481 = vmax.f32 %v5417, 0.0
      %v5482 = vmax.f32 %v5418, 0.0
      %v5483 = vmax.f32 %v5419, 0.0
      %v5484 = vmax.f32 %v5420, 0.0
      %v5485 = vmax.f32 %v5421, 0.0
      %v5486 = vmax.f32 %v5422, 0.0
      %v5487 = vmax.f32 %v5423, 0.0
      %v5488 = vpack.c.bf16 %v5426, %v5424
      %v5489 = vpack.c.bf16 %v5427, %v5425
      %v5490 = vpack.c.bf16 %v5430, %v5428
      %v5491 = vpack.c.bf16 %v5431, %v5429
      %v5492 = vpack.c.bf16 %v5434, %v5432
      %v5493 = vpack.c.bf16 %v5435, %v5433
      %v5494 = vpack.c.bf16 %v5438, %v5436
      %v5495 = vpack.c.bf16 %v5439, %v5437
      %v5496 = vpack.c.bf16 %v5442, %v5440
      %v5497 = vpack.c.bf16 %v5443, %v5441
      %v5498 = vpack.c.bf16 %v5446, %v5444
      %v5499 = vpack.c.bf16 %v5447, %v5445
      %v5500 = vpack.c.bf16 %v5450, %v5448
      %v5501 = vpack.c.bf16 %v5451, %v5449
      %v5502 = vpack.c.bf16 %v5454, %v5452
      %v5503 = vpack.c.bf16 %v5455, %v5453
      %v5504 = vpack.c.bf16 %v5458, %v5456
      %v5505 = vpack.c.bf16 %v5459, %v5457
      %v5506 = vpack.c.bf16 %v5462, %v5460
      %v5507 = vpack.c.bf16 %v5463, %v5461
      %v5508 = vpack.c.bf16 %v5466, %v5464
      %v5509 = vpack.c.bf16 %v5467, %v5465
      %v5510 = vpack.c.bf16 %v5470, %v5468
      %v5511 = vpack.c.bf16 %v5471, %v5469
      %v5512 = vpack.c.bf16 %v5474, %v5472
      %v5513 = vpack.c.bf16 %v5475, %v5473
      %v5514 = vpack.c.bf16 %v5478, %v5476
      %v5515 = vpack.c.bf16 %v5479, %v5477
      %v5516 = vpack.c.bf16 %v5482, %v5480
      %v5517 = vpack.c.bf16 %v5483, %v5481
      %v5518 = vpack.c.bf16 %v5486, %v5484
      %v5519 = vpack.c.bf16 %v5487, %v5485
      %v5520 = vld [vmem:[%s2] sm:$0xf]
      %v5521 = vld [vmem:[%s2 + $0x4] sm:$0xf]
      %v5522 = vld [vmem:[%s2 + $0x8] sm:$0xf]
      %v5523 = vld [vmem:[%s2 + $0xc] sm:$0xf]
      %v5524 = vld [vmem:[%s2 + $0x10] sm:$0xf]
      %v5525 = vld [vmem:[%s2 + $0x14] sm:$0xf]
      %v5526 = vld [vmem:[%s2 + $0x18] sm:$0xf]
      %v5527 = vld [vmem:[%s2 + $0x1c] sm:$0xf]
      %v5528 = vld [vmem:[%s2 + $0x20] sm:$0xf]
      %v5529 = vld [vmem:[%s2 + $0x24] sm:$0xf]
      %v5530 = vld [vmem:[%s2 + $0x28] sm:$0xf]
      %v5531 = vld [vmem:[%s2 + $0x2c] sm:$0xf]
      %v5532 = vld [vmem:[%s2 + $0x30] sm:$0xf]
      %v5533 = vld [vmem:[%s2 + $0x34] sm:$0xf]
      %v5534 = vld [vmem:[%s2 + $0x38] sm:$0xf]
      %v5535 = vld [vmem:[%s2 + $0x3c] sm:$0xf]
      %v5536 = vld [vmem:[%s2 + $0x40] sm:$0xf]
      %v5537 = vld [vmem:[%s2 + $0x44] sm:$0xf]
      %v5538 = vld [vmem:[%s2 + $0x48] sm:$0xf]
      %v5539 = vld [vmem:[%s2 + $0x4c] sm:$0xf]
      %v5540 = vld [vmem:[%s2 + $0x50] sm:$0xf]
      %v5541 = vld [vmem:[%s2 + $0x54] sm:$0xf]
      %v5542 = vld [vmem:[%s2 + $0x58] sm:$0xf]
      %v5543 = vld [vmem:[%s2 + $0x5c] sm:$0xf]
      %v5544 = vld [vmem:[%s2 + $0x60] sm:$0xf]
      %v5545 = vld [vmem:[%s2 + $0x64] sm:$0xf]
      %v5546 = vld [vmem:[%s2 + $0x68] sm:$0xf]
      %v5547 = vld [vmem:[%s2 + $0x6c] sm:$0xf]
      %v5548 = vld [vmem:[%s2 + $0x70] sm:$0xf]
      %v5549 = vld [vmem:[%s2 + $0x74] sm:$0xf]
      %v5550 = vld [vmem:[%s2 + $0x78] sm:$0xf]
      %v5551 = vld [vmem:[%s2 + $0x7c] sm:$0xf]
      %v5552 = vld [vmem:[%s3] sm:$0x1]
      %v5554 = vperm.slane %v5552, 0
      %v5588 = vunpack.c.l.b16 %v5520
      %v5589 = vunpack.c.l.b16 %v5521
      %v5590 = vunpack.c.l.b16 %v5522
      %v5591 = vunpack.c.l.b16 %v5523
      %v5592 = vunpack.c.l.b16 %v5524
      %v5593 = vunpack.c.l.b16 %v5525
      %v5594 = vunpack.c.l.b16 %v5526
      %v5595 = vunpack.c.l.b16 %v5527
      %v5596 = vunpack.c.l.b16 %v5528
      %v5597 = vunpack.c.l.b16 %v5529
      %v5598 = vunpack.c.l.b16 %v5530
      %v5599 = vunpack.c.l.b16 %v5531
      %v5600 = vunpack.c.l.b16 %v5532
      %v5601 = vunpack.c.l.b16 %v5533
      %v5602 = vunpack.c.l.b16 %v5534
      %v5603 = vunpack.c.l.b16 %v5535
      %v5604 = vunpack.c.l.b16 %v5536
      %v5605 = vunpack.c.l.b16 %v5537
      %v5606 = vunpack.c.l.b16 %v5538
      %v5607 = vunpack.c.l.b16 %v5539
      %v5608 = vunpack.c.l.b16 %v5540
      %v5609 = vunpack.c.l.b16 %v5541
      %v5610 = vunpack.c.l.b16 %v5542
      %v5611 = vunpack.c.l.b16 %v5543
      %v5612 = vunpack.c.l.b16 %v5544
      %v5613 = vunpack.c.l.b16 %v5545
      %v5614 = vunpack.c.l.b16 %v5546
      %v5615 = vunpack.c.l.b16 %v5547
      %v5616 = vunpack.c.l.b16 %v5548
      %v5617 = vunpack.c.l.b16 %v5549
      %v5618 = vunpack.c.l.b16 %v5550
      %v5619 = vunpack.c.l.b16 %v5551
      %v5620 = vpack.c.b16 %v5589, %v5588
      %v5621 = vpack.c.b16 %v5591, %v5590
      %v5622 = vpack.c.b16 %v5593, %v5592
      %v5623 = vpack.c.b16 %v5595, %v5594
      %v5624 = vpack.c.b16 %v5597, %v5596
      %v5625 = vpack.c.b16 %v5599, %v5598
      %v5626 = vpack.c.b16 %v5601, %v5600
      %v5627 = vpack.c.b16 %v5603, %v5602
      %v5628 = vpack.c.b16 %v5605, %v5604
      %v5629 = vpack.c.b16 %v5607, %v5606
      %v5630 = vpack.c.b16 %v5609, %v5608
      %v5631 = vpack.c.b16 %v5611, %v5610
      %v5632 = vpack.c.b16 %v5613, %v5612
      %v5633 = vpack.c.b16 %v5615, %v5614
      %v5634 = vpack.c.b16 %v5617, %v5616
      %v5635 = vpack.c.b16 %v5619, %v5618
      %5652 = vmatpush.bf16.msra.mxu0 %v5627
      %5653 = vmatpush.bf16.msra.mxu0 %v5626
      %5654 = vmatpush.bf16.msra.mxu0 %v5625
      %5655 = vmatpush.bf16.msra.mxu0 %v5624
      %5656 = vmatpush.bf16.msra.mxu0 %v5623
      %5657 = vmatpush.bf16.msra.mxu0 %v5622
      %5658 = vmatpush.bf16.msra.mxu0 %v5621
      %5659 = vmatpush.bf16.msra.mxu0 %v5620
      %5660 = vmatmul.bf16.gmra.mxu0 %v5488
      %v5661 = vpop.f32.mrf.mxu0
      %v5662 = vadd.f32 %v5554, %v5661
      %v5663 = vpop.f32.mrf.mxu0
      %v5664 = vadd.f32 %v5554, %v5663
      %5665 = vmatmul.bf16.gmra.mxu0 %v5490
      %v5666 = vpop.f32.mrf.mxu0
      %v5667 = vadd.f32 %v5554, %v5666
      %v5668 = vpop.f32.mrf.mxu0
      %v5669 = vadd.f32 %v5554, %v5668
      %5670 = vmatmul.bf16.gmra.mxu0 %v5492
      %v5671 = vpop.f32.mrf.mxu0
      %v5672 = vadd.f32 %v5554, %v5671
      %v5673 = vpop.f32.mrf.mxu0
      %v5674 = vadd.f32 %v5554, %v5673
      %5675 = vmatmul.bf16.gmra.mxu0 %v5494
      %v5676 = vpop.f32.mrf.mxu0
      %v5677 = vadd.f32 %v5554, %v5676
      %v5678 = vpop.f32.mrf.mxu0
      %v5679 = vadd.f32 %v5554, %v5678
      %5680 = vmatmul.bf16.gmra.mxu0 %v5496
      %v5681 = vpop.f32.mrf.mxu0
      %v5682 = vadd.f32 %v5554, %v5681
      %v5683 = vpop.f32.mrf.mxu0
      %v5684 = vadd.f32 %v5554, %v5683
      %5685 = vmatmul.bf16.gmra.mxu0 %v5498
      %v5686 = vpop.f32.mrf.mxu0
      %v5687 = vadd.f32 %v5554, %v5686
      %v5688 = vpop.f32.mrf.mxu0
      %v5689 = vadd.f32 %v5554, %v5688
      %5690 = vmatmul.bf16.gmra.mxu0 %v5500
      %v5691 = vpop.f32.mrf.mxu0
      %v5692 = vadd.f32 %v5554, %v5691
      %v5693 = vpop.f32.mrf.mxu0
      %v5694 = vadd.f32 %v5554, %v5693
      %5695 = vmatmul.bf16.gmra.mxu0 %v5502
      %v5696 = vpop.f32.mrf.mxu0
      %v5697 = vadd.f32 %v5554, %v5696
      %v5698 = vpop.f32.mrf.mxu0
      %v5699 = vadd.f32 %v5554, %v5698
      %5700 = vmatmul.bf16.gmra.mxu0 %v5504
      %v5701 = vpop.f32.mrf.mxu0
      %v5702 = vadd.f32 %v5554, %v5701
      %v5703 = vpop.f32.mrf.mxu0
      %v5704 = vadd.f32 %v5554, %v5703
      %5705 = vmatmul.bf16.gmra.mxu0 %v5506
      %v5706 = vpop.f32.mrf.mxu0
      %v5707 = vadd.f32 %v5554, %v5706
      %v5708 = vpop.f32.mrf.mxu0
      %v5709 = vadd.f32 %v5554, %v5708
      %5710 = vmatmul.bf16.gmra.mxu0 %v5508
      %v5711 = vpop.f32.mrf.mxu0
      %v5712 = vadd.f32 %v5554, %v5711
      %v5713 = vpop.f32.mrf.mxu0
      %v5714 = vadd.f32 %v5554, %v5713
      %5715 = vmatmul.bf16.gmra.mxu0 %v5510
      %v5716 = vpop.f32.mrf.mxu0
      %v5717 = vadd.f32 %v5554, %v5716
      %v5718 = vpop.f32.mrf.mxu0
      %v5719 = vadd.f32 %v5554, %v5718
      %5720 = vmatmul.bf16.gmra.mxu0 %v5512
      %v5721 = vpop.f32.mrf.mxu0
      %v5722 = vadd.f32 %v5554, %v5721
      %v5723 = vpop.f32.mrf.mxu0
      %v5724 = vadd.f32 %v5554, %v5723
      %5725 = vmatmul.bf16.gmra.mxu0 %v5514
      %v5726 = vpop.f32.mrf.mxu0
      %v5727 = vadd.f32 %v5554, %v5726
      %v5728 = vpop.f32.mrf.mxu0
      %v5729 = vadd.f32 %v5554, %v5728
      %5730 = vmatmul.bf16.gmra.mxu0 %v5516
      %v5731 = vpop.f32.mrf.mxu0
      %v5732 = vadd.f32 %v5554, %v5731
      %v5733 = vpop.f32.mrf.mxu0
      %v5734 = vadd.f32 %v5554, %v5733
      %5735 = vmatmul.bf16.gmra.mxu0 %v5518
      %v5736 = vpop.f32.mrf.mxu0
      %v5737 = vadd.f32 %v5554, %v5736
      %v5738 = vpop.f32.mrf.mxu0
      %v5739 = vadd.f32 %v5554, %v5738
      %5740 = vdwg.mxu0
      %5741 = vmatpush.bf16.msra.mxu0 %v5635
      %5742 = vmatpush.bf16.msra.mxu0 %v5634
      %5743 = vmatpush.bf16.msra.mxu0 %v5633
      %5744 = vmatpush.bf16.msra.mxu0 %v5632
      %5745 = vmatpush.bf16.msra.mxu0 %v5631
      %5746 = vmatpush.bf16.msra.mxu0 %v5630
      %5747 = vmatpush.bf16.msra.mxu0 %v5629
      %5748 = vmatpush.bf16.msra.mxu0 %v5628
      %5749 = vmatmul.bf16.gmra.mxu0 %v5489
      %v5750 = vpop.f32.mrf.mxu0
      %v5751 = vadd.f32 %v5662, %v5750
      %v5752 = vpop.f32.mrf.mxu0
      %v5753 = vadd.f32 %v5664, %v5752
      %5754 = vmatmul.bf16.gmra.mxu0 %v5491
      %v5755 = vpop.f32.mrf.mxu0
      %v5756 = vadd.f32 %v5667, %v5755
      %v5757 = vpop.f32.mrf.mxu0
      %v5758 = vadd.f32 %v5669, %v5757
      %5759 = vmatmul.bf16.gmra.mxu0 %v5493
      %v5760 = vpop.f32.mrf.mxu0
      %v5761 = vadd.f32 %v5672, %v5760
      %v5762 = vpop.f32.mrf.mxu0
      %v5763 = vadd.f32 %v5674, %v5762
      %5764 = vmatmul.bf16.gmra.mxu0 %v5495
      %v5765 = vpop.f32.mrf.mxu0
      %v5766 = vadd.f32 %v5677, %v5765
      %v5767 = vpop.f32.mrf.mxu0
      %v5768 = vadd.f32 %v5679, %v5767
      %5769 = vmatmul.bf16.gmra.mxu0 %v5497
      %v5770 = vpop.f32.mrf.mxu0
      %v5771 = vadd.f32 %v5682, %v5770
      %v5772 = vpop.f32.mrf.mxu0
      %v5773 = vadd.f32 %v5684, %v5772
      %5774 = vmatmul.bf16.gmra.mxu0 %v5499
      %v5775 = vpop.f32.mrf.mxu0
      %v5776 = vadd.f32 %v5687, %v5775
      %v5777 = vpop.f32.mrf.mxu0
      %v5778 = vadd.f32 %v5689, %v5777
      %5779 = vmatmul.bf16.gmra.mxu0 %v5501
      %v5780 = vpop.f32.mrf.mxu0
      %v5781 = vadd.f32 %v5692, %v5780
      %v5782 = vpop.f32.mrf.mxu0
      %v5783 = vadd.f32 %v5694, %v5782
      %5784 = vmatmul.bf16.gmra.mxu0 %v5503
      %v5785 = vpop.f32.mrf.mxu0
      %v5786 = vadd.f32 %v5697, %v5785
      %v5787 = vpop.f32.mrf.mxu0
      %v5788 = vadd.f32 %v5699, %v5787
      %5789 = vmatmul.bf16.gmra.mxu0 %v5505
      %v5790 = vpop.f32.mrf.mxu0
      %v5791 = vadd.f32 %v5702, %v5790
      %v5792 = vpop.f32.mrf.mxu0
      %v5793 = vadd.f32 %v5704, %v5792
      %5794 = vmatmul.bf16.gmra.mxu0 %v5507
      %v5795 = vpop.f32.mrf.mxu0
      %v5796 = vadd.f32 %v5707, %v5795
      %v5797 = vpop.f32.mrf.mxu0
      %v5798 = vadd.f32 %v5709, %v5797
      %5799 = vmatmul.bf16.gmra.mxu0 %v5509
      %v5800 = vpop.f32.mrf.mxu0
      %v5801 = vadd.f32 %v5712, %v5800
      %v5802 = vpop.f32.mrf.mxu0
      %v5803 = vadd.f32 %v5714, %v5802
      %5804 = vmatmul.bf16.gmra.mxu0 %v5511
      %v5805 = vpop.f32.mrf.mxu0
      %v5806 = vadd.f32 %v5717, %v5805
      %v5807 = vpop.f32.mrf.mxu0
      %v5808 = vadd.f32 %v5719, %v5807
      %5809 = vmatmul.bf16.gmra.mxu0 %v5513
      %v5810 = vpop.f32.mrf.mxu0
      %v5811 = vadd.f32 %v5722, %v5810
      %v5812 = vpop.f32.mrf.mxu0
      %v5813 = vadd.f32 %v5724, %v5812
      %5814 = vmatmul.bf16.gmra.mxu0 %v5515
      %v5815 = vpop.f32.mrf.mxu0
      %v5816 = vadd.f32 %v5727, %v5815
      %v5817 = vpop.f32.mrf.mxu0
      %v5818 = vadd.f32 %v5729, %v5817
      %5819 = vmatmul.bf16.gmra.mxu0 %v5517
      %v5820 = vpop.f32.mrf.mxu0
      %v5821 = vadd.f32 %v5732, %v5820
      %v5822 = vpop.f32.mrf.mxu0
      %v5823 = vadd.f32 %v5734, %v5822
      %5824 = vmatmul.bf16.gmra.mxu0 %v5519
      %v5825 = vpop.f32.mrf.mxu0
      %v5826 = vadd.f32 %v5737, %v5825
      %v5827 = vpop.f32.mrf.mxu0
      %v5828 = vadd.f32 %v5739, %v5827
      %5829 = vdwg.mxu0
      %v5830 = vpack.c.bf16 %v5751, %v5751
      %v5831 = vpack.c.bf16 %v5753, %v5753
      %v5832 = vpack.c.bf16 %v5756, %v5756
      %v5833 = vpack.c.bf16 %v5758, %v5758
      %v5834 = vpack.c.bf16 %v5761, %v5761
      %v5835 = vpack.c.bf16 %v5763, %v5763
      %v5836 = vpack.c.bf16 %v5766, %v5766
      %v5837 = vpack.c.bf16 %v5768, %v5768
      %v5838 = vpack.c.bf16 %v5771, %v5771
      %v5839 = vpack.c.bf16 %v5773, %v5773
      %v5840 = vpack.c.bf16 %v5776, %v5776
      %v5841 = vpack.c.bf16 %v5778, %v5778
      %v5842 = vpack.c.bf16 %v5781, %v5781
      %v5843 = vpack.c.bf16 %v5783, %v5783
      %v5844 = vpack.c.bf16 %v5786, %v5786
      %v5845 = vpack.c.bf16 %v5788, %v5788
      %v5846 = vpack.c.bf16 %v5791, %v5791
      %v5847 = vpack.c.bf16 %v5793, %v5793
      %v5848 = vpack.c.bf16 %v5796, %v5796
      %v5849 = vpack.c.bf16 %v5798, %v5798
      %v5850 = vpack.c.bf16 %v5801, %v5801
      %v5851 = vpack.c.bf16 %v5803, %v5803
      %v5852 = vpack.c.bf16 %v5806, %v5806
      %v5853 = vpack.c.bf16 %v5808, %v5808
      %v5854 = vpack.c.bf16 %v5811, %v5811
      %v5855 = vpack.c.bf16 %v5813, %v5813
      %v5856 = vpack.c.bf16 %v5816, %v5816
      %v5857 = vpack.c.bf16 %v5818, %v5818
      %v5858 = vpack.c.bf16 %v5821, %v5821
      %v5859 = vpack.c.bf16 %v5823, %v5823
      %v5860 = vpack.c.bf16 %v5826, %v5826
      %v5861 = vpack.c.bf16 %v5828, %v5828
      %5862 = vst [vmem:[%s248] sm:$0xf] %v5830
      %5863 = vst [vmem:[%s248 + $0x4] sm:$0xf] %v5831
      %5864 = vst [vmem:[%s248 + $0x8] sm:$0xf] %v5832
      %5865 = vst [vmem:[%s248 + $0xc] sm:$0xf] %v5833
      %5866 = vst [vmem:[%s248 + $0x10] sm:$0xf] %v5834
      %5867 = vst [vmem:[%s248 + $0x14] sm:$0xf] %v5835
      %5868 = vst [vmem:[%s248 + $0x18] sm:$0xf] %v5836
      %5869 = vst [vmem:[%s248 + $0x1c] sm:$0xf] %v5837
      %5870 = vst [vmem:[%s248 + $0x20] sm:$0xf] %v5838
      %5871 = vst [vmem:[%s248 + $0x24] sm:$0xf] %v5839
      %5872 = vst [vmem:[%s248 + $0x28] sm:$0xf] %v5840
      %5873 = vst [vmem:[%s248 + $0x2c] sm:$0xf] %v5841
      %5874 = vst [vmem:[%s248 + $0x30] sm:$0xf] %v5842
      %5875 = vst [vmem:[%s248 + $0x34] sm:$0xf] %v5843
      %5876 = vst [vmem:[%s248 + $0x38] sm:$0xf] %v5844
      %5877 = vst [vmem:[%s248 + $0x3c] sm:$0xf] %v5845
      %5878 = vst [vmem:[%s248 + $0x40] sm:$0xf] %v5846
      %5879 = vst [vmem:[%s248 + $0x44] sm:$0xf] %v5847
      %5880 = vst [vmem:[%s248 + $0x48] sm:$0xf] %v5848
      %5881 = vst [vmem:[%s248 + $0x4c] sm:$0xf] %v5849
      %5882 = vst [vmem:[%s248 + $0x50] sm:$0xf] %v5850
      %5883 = vst [vmem:[%s248 + $0x54] sm:$0xf] %v5851
      %5884 = vst [vmem:[%s248 + $0x58] sm:$0xf] %v5852
      %5885 = vst [vmem:[%s248 + $0x5c] sm:$0xf] %v5853
      %5886 = vst [vmem:[%s248 + $0x60] sm:$0xf] %v5854
      %5887 = vst [vmem:[%s248 + $0x64] sm:$0xf] %v5855
      %5888 = vst [vmem:[%s248 + $0x68] sm:$0xf] %v5856
      %5889 = vst [vmem:[%s248 + $0x6c] sm:$0xf] %v5857
      %5890 = vst [vmem:[%s248 + $0x70] sm:$0xf] %v5858
      %5891 = vst [vmem:[%s248 + $0x74] sm:$0xf] %v5859
      %5892 = vst [vmem:[%s248 + $0x78] sm:$0xf] %v5860
      %5893 = vst [vmem:[%s248 + $0x7c] sm:$0xf] %v5861
      %s5894 = smul.u32 16, %s21
      %p5895 = scmp.lt.s32.totalorder %s20, 1
      %s5896 = scalar_select %p5895, %s20, 1
      %p5897 = scmp.lt.s32.totalorder %s5894, 15
      %s5898 = scalar_select %p5897, %s5894, 15
      %s5899 = smul.addr %s5898, 2
      %s5900 = smul.addr %s5896, 32
      %s5901 = sadd.s32 %s5899, %s5900
      %s5902 = smul.addr %s5901, 4
      %s5903 = scalar_lea.vmem %s5, %s5902
      // Predicated region
      $region41: #{auxiliary_psp_forward_nhwc.1} parent=39 // pred_check
        %p5904 = pneg %p158
      $region42: #{auxiliary_psp_forward_nhwc.1} parent=39 // pred_check_branch
        %5906 = sbr.rel (%p5904) target = $region44
      $region43: #{auxiliary_psp_forward_nhwc.1} parent=39 // pred_region
        %s5907 = smul.u32 16, %s21
      $region44: #{auxiliary_psp_forward_nhwc.1} parent=39 // pred_fallthru
        _
    $region40: #{auxiliary_psp_forward_nhwc.1} parent=5 // pred_fallthru
      _
    %p5908 = scmp.le.s32.totalorder 2, %s11
    // Predicated region
    $region45: #{auxiliary_psp_forward_nhwc.1} parent=5 // pred_check
      %p5909 = pneg %p5908
    $region46: #{auxiliary_psp_forward_nhwc.1} parent=5 // pred_check_branch
      %5911 = sbr.rel (%p5909) target = $region48
    $region47: #{auxiliary_psp_forward_nhwc.1} parent=5 // pred_region
      %s5912 = ssub.s32 %s11, 2
      // Predicated region
      $region49: #{auxiliary_psp_forward_nhwc.1} parent=47 // pred_check
        %p5913 = pneg %p164
      $region50: #{auxiliary_psp_forward_nhwc.1} parent=47 // pred_check_branch
        %5915 = sbr.rel (%p5913) target = $region52
      $region51: #{auxiliary_psp_forward_nhwc.1} parent=47 // pred_region
        %s5916 = smul.u32 16, %s23
        %p5917 = scmp.lt.s32.totalorder %s22, 1
        %s5918 = scalar_select %p5917, %s22, 1
        %p5919 = scmp.lt.s32.totalorder %s5916, 15
        %s5920 = scalar_select %p5919, %s5916, 15
        %s5921 = smul.addr %s5920, 2
        %s5922 = smul.addr %s5918, 32
        %s5923 = sadd.s32 %s5921, %s5922
        %s5924 = smul.addr %s5923, 4
        %s5925 = scalar_lea.vmem %s5, %s5924
      $region52: #{auxiliary_psp_forward_nhwc.1} parent=47 // pred_fallthru
        _
    $region48: #{auxiliary_psp_forward_nhwc.1} parent=5 // pred_fallthru
      _
  $region6: #{auxiliary_psp_forward_nhwc.1} parent=0 // loop_footer
    %s15 = sadd.s32 1, %s11
  $region7: #{auxiliary_psp_forward_nhwc.1} parent=0 // loop_footer_branch
    %10 = sbr.rel target = $region3
  $region8: #{auxiliary_psp_forward_nhwc.1} parent=0 // loop_exit
    _

</llo_original>
